<compile_context>
chip_gen: v6e
topology: v6e:2x2x1
jax: 0.10.0
libtpu: 0.0.40
codegen_flags: <defaults>
</compile_context>

<pallas_src>
import functools

import jax
import jax.numpy as jnp
from jax.experimental import pallas as pl
from jax.experimental.pallas import tpu as pltpu

_KPIX = 5                    # per-pixel dynamic conv size (5**2 = 25 channels)
_KK = _KPIX * _KPIX
_KFEAT = 3                   # feat_kernel conv size
_BN_EPS = 1e-5


def _fused_kernel(mask_ref, wf_ref, bf_ref, gamma_ref, beta_ref, x_ref, out_ref,
                  *, width):
    """One DnCNN-ablation block; the grid axis runs over the L layers.

    mask_ref  : (25, P)    validity mask of each 5x5 tap (zero padding), all layers
    wf_ref    : (25, 9*C)  feat conv weight for layer l, columns = (kh*3+kw)*C + c
    bf_ref    : (25, 1)    feat conv bias for layer l
    gamma_ref : (C, 1)     batch-norm weight for layer l
    beta_ref  : (C, 1)     batch-norm bias for layer l
    x_ref     : (C, P)     network input, P = N*H*W flattened on lanes
    out_ref   : (C, P)     activation state, VMEM-resident across the whole grid
    """
    layer = pl.program_id(0)

    # First layer: bring the network input into the VMEM-resident state.
    @pl.when(layer == 0)
    def _():
        out_ref[...] = x_ref[...]

    x = out_ref[...]                       # (C, P) float32
    mask = mask_ref[...]                   # (25, P)
    wf = wf_ref[...]                       # (25, 9*C)
    C, P = x.shape

    def tap(k):
        """x shifted by 5x5 offset k (zero padded outside the image), (C, P)."""
        dh, dw = k // _KPIX - 2, k % _KPIX - 2
        d = dh * width + dw
        if d == 0:
            return x                       # center tap: no shift, mask is all ones
        # roll brings element p+d to position p; pixels that fall outside the
        # image (row wrap / image wrap) are zeroed by the precomputed mask.
        return jnp.roll(x, -d, axis=1) * mask[k:k + 1, :]

    # ---- 1) feat_kernel: 3x3 conv (pad=1), C -> 25, on the MXU ---------------
    # 9 accumulating (25, C) @ (C, P) matmuls; bias added once at the end.
    kmap = None
    for kh in range(_KFEAT):
        for kw in range(_KFEAT):
            j = kh * _KFEAT + kw
            k = (kh + 1) * _KPIX + (kw + 1)        # center 3x3 of the 5x5 window
            contrib = jnp.dot(wf[:, j * C:(j + 1) * C], tap(k),
                              preferred_element_type=jnp.float32)
            kmap = contrib if kmap is None else kmap + contrib
    kmap = kmap + bf_ref[...]                      # (25, P) + (25, 1)

    # ---- 2) pixel_conv: per-pixel dynamic 5x5 depthwise filtering (VPU) ------
    # kmap is k-leading, so each tap uses a cheap sublane broadcast of one row.
    y = jnp.zeros((C, P), jnp.float32)
    for k in range(_KK):
        y = y + tap(k) * kmap[k:k + 1, :]

    # ---- 3) batch norm (training-mode statistics over N,H,W = lane axis) -----
    mean = jnp.mean(y, axis=1, keepdims=True)                       # (C, 1)
    var = jnp.mean(jnp.square(y - mean), axis=1, keepdims=True)     # biased var
    y = (y - mean) * jax.lax.rsqrt(var + _BN_EPS)
    y = y * gamma_ref[...] + beta_ref[...]

    # ---- 4) relu; write the state for the next layer --------------------------
    out_ref[...] = jnp.maximum(y, 0.0)


@functools.partial(jax.jit, static_argnames=("width",))
def _fused_forward(x_flat, mask, wf_all, bf_all, gamma_all, beta_all, *, width):
    C, P = x_flat.shape
    L = wf_all.shape[0]
    kernel = functools.partial(_fused_kernel, width=width)
    grid_spec = pltpu.PrefetchScalarGridSpec(
        num_scalar_prefetch=0,
        grid=(L,),
        in_specs=[
            pl.BlockSpec((_KK, P), lambda l: (0, 0)),                # mask (shared)
            pl.BlockSpec((None, _KK, 9 * C), lambda l: (l, 0, 0)),   # conv weight
            pl.BlockSpec((None, _KK, 1), lambda l: (l, 0, 0)),       # conv bias
            pl.BlockSpec((None, C, 1), lambda l: (l, 0, 0)),         # BN gamma
            pl.BlockSpec((None, C, 1), lambda l: (l, 0, 0)),         # BN beta
            pl.BlockSpec((C, P), lambda l: (0, 0)),                  # input x
        ],
        out_specs=pl.BlockSpec((C, P), lambda l: (0, 0)),            # resident state
    )
    return pl.pallas_call(
        kernel,
        out_shape=jax.ShapeDtypeStruct((C, P), jnp.float32),
        grid_spec=grid_spec,
        compiler_params=pltpu.CompilerParams(
            dimension_semantics=("arbitrary",)),   # layers are sequential
    )(mask, wf_all, bf_all, gamma_all, beta_all, x_flat)


def _make_tap_masks(N, H, W):
    """(25, N*H*W) float mask: 1 where the 5x5 tap lands inside the image."""
    hh = jnp.arange(H)
    ww = jnp.arange(W)
    masks = []
    for k in range(_KK):
        dh, dw = k // _KPIX - 2, k % _KPIX - 2
        mh = (hh + dh >= 0) & (hh + dh < H)
        mw = (ww + dw >= 0) & (ww + dw < W)
        m = (mh[:, None] & mw[None, :]).astype(jnp.float32).reshape(-1)  # (H*W,)
        masks.append(jnp.tile(m, (N,)))                                  # (N*H*W,)
    return jnp.stack(masks, axis=0)


def dncnn_ablation_full(x_nchw, packed_params):
    """Forward pass matching DnCNNablationFull.forward (input/output NCHW)."""
    N, C, H, W = x_nchw.shape
    x_flat = jnp.transpose(x_nchw, (1, 0, 2, 3)).reshape(C, N * H * W)
    x_flat = x_flat.astype(jnp.float32)
    mask = _make_tap_masks(N, H, W)
    wf, bf, gamma, beta = packed_params
    out_flat = _fused_forward(x_flat, mask, wf, bf, gamma, beta, width=W)
    return jnp.transpose(out_flat.reshape(C, N, H, W), (1, 0, 2, 3))


def init_params(key, channels, num_of_layers=14):
    """Deterministic synthetic parameters (shapes match the PyTorch module)."""
    raw = []
    fan_in = channels * _KFEAT * _KFEAT
    bound = 1.0 / (fan_in ** 0.5)
    for _ in range(num_of_layers):
        key, kw_, kb, kg, kbt = jax.random.split(key, 5)
        w = jax.random.uniform(kw_, (_KK, channels, _KFEAT, _KFEAT),
                               jnp.float32, -bound, bound)       # Conv2d weight
        b = jax.random.uniform(kb, (_KK,), jnp.float32, -bound, bound)
        gamma = 1.0 + 0.1 * jax.random.normal(kg, (channels,), jnp.float32)
        beta = 0.1 * jax.random.normal(kbt, (channels,), jnp.float32)
        raw.append({"w_conv": w, "b_conv": b, "gamma": gamma, "beta": beta})
    return raw


def pack_params(raw):
    """Stack per-layer params into the layouts the fused kernel consumes."""
    wf = jnp.stack([jnp.transpose(p["w_conv"], (0, 2, 3, 1)).reshape(_KK, -1)
                    for p in raw])                                 # (L, 25, 9*C)
    bf = jnp.stack([p["b_conv"].reshape(_KK, 1) for p in raw])     # (L, 25, 1)
    gamma = jnp.stack([p["gamma"].reshape(-1, 1) for p in raw])    # (L, C, 1)
    beta = jnp.stack([p["beta"].reshape(-1, 1) for p in raw])      # (L, C, 1)
    return wf, bf, gamma, beta


def _reference_forward(x_nchw, raw_params):
    """Pure-JAX/XLA reference of the PyTorch forward (for a numerical check)."""
    x = x_nchw.astype(jnp.float32)
    N, C, H, W = x.shape
    for p in raw_params:
        kmap = jax.lax.conv_general_dilated(
            x, p["w_conv"], window_strides=(1, 1), padding=((1, 1), (1, 1)),
            dimension_numbers=("NCHW", "OIHW", "NCHW"))
        kmap = kmap + p["b_conv"][None, :, None, None]             # (N, 25, H, W)
        xp = jnp.pad(x, ((0, 0), (0, 0), (2, 2), (2, 2)))
        y = jnp.zeros_like(x)
        for dh in range(_KPIX):
            for dw in range(_KPIX):
                k = dh * _KPIX + dw
                y = y + xp[:, :, dh:dh + H, dw:dw + W] * kmap[:, k:k + 1]
        mean = jnp.mean(y, axis=(0, 2, 3), keepdims=True)
        var = jnp.mean(jnp.square(y - mean), axis=(0, 2, 3), keepdims=True)
        y = (y - mean) * jax.lax.rsqrt(var + _BN_EPS)
        y = y * p["gamma"][None, :, None, None] + p["beta"][None, :, None, None]
        x = jnp.maximum(y, 0.0)
    return x


if __name__ == "__main__":
    key = jax.random.PRNGKey(0)
    key, kx = jax.random.split(key)

    N, C, H, W = 2, 4, 16, 16
    x = jax.random.normal(kx, (N, C, H, W), dtype=jnp.float32)
    raw_params = init_params(key, channels=C, num_of_layers=14)
    packed = pack_params(raw_params)

    out = dncnn_ablation_full(x, packed)
    out = jax.block_until_ready(out)

    assert out.shape == (N, C, H, W)
    assert bool(jnp.all(jnp.isfinite(out)))
    assert bool(jnp.all(out >= 0.0))            # the network ends in ReLU

    # Numerical parity with a pure-JAX reference (tolerance covers TPU matmul
    # precision differences accumulated over 14 layers).
    ref = jax.block_until_ready(_reference_forward(x, raw_params))
    assert bool(jnp.allclose(out, ref, atol=5e-2, rtol=5e-2)), float(
        jnp.max(jnp.abs(out - ref)))

    print("KERNEL_OK")
</pallas_src>

<mosaic_0001>
module attributes {stable_mosaic.version = 11 : i64} {
  func.func @_fused_kernel(%arg0: i32, %arg1: memref<25x512xf32, #tpu.memory_space<vmem>>, %arg2: memref<1x25x36xf32, #tpu.memory_space<vmem>>, %arg3: memref<1x25x1xf32, #tpu.memory_space<vmem>>, %arg4: memref<1x4x1xf32, #tpu.memory_space<vmem>>, %arg5: memref<1x4x1xf32, #tpu.memory_space<vmem>>, %arg6: memref<4x512xf32, #tpu.memory_space<vmem>>, %arg7: memref<4x512xf32, #tpu.memory_space<vmem>>) attributes {dimension_semantics = [#tpu.dimension_semantics<arbitrary>], iteration_bounds = array<i64: 14>, scalar_prefetch = 0 : i64, scratch_operands = 0 : i64, tpu.core_type = #tpu.core_type<tc>, window_params = [{pipeline_mode = #tpu.pipeline_mode<synchronous>, transform_indices = @transform_0, window_bounds = array<i64: 25, 512>}, {transform_indices = @transform_1, window_bounds = array<i64: 1, 25, 36>}, {transform_indices = @transform_2, window_bounds = array<i64: 1, 25, 1>}, {transform_indices = @transform_3, window_bounds = array<i64: 1, 4, 1>}, {transform_indices = @transform_4, window_bounds = array<i64: 1, 4, 1>}, {pipeline_mode = #tpu.pipeline_mode<synchronous>, transform_indices = @transform_5, window_bounds = array<i64: 4, 512>}, {pipeline_mode = #tpu.pipeline_mode<synchronous>, transform_indices = @transform_6, window_bounds = array<i64: 4, 512>}]} {
    %c0_i32 = arith.constant 0 : i32
    %0 = arith.cmpi eq, %arg0, %c0_i32 : i32
    %1 = arith.extui %0 : i1 to i32
    %c0_i32_0 = arith.constant 0 : i32
    %2 = arith.cmpi ne, %1, %c0_i32_0 : i32
    scf.if %2 {
      %c0_33 = arith.constant 0 : index
      %c0_34 = arith.constant 0 : index
      %359 = vector.load %arg6[%c0_33, %c0_34] : memref<4x512xf32, #tpu.memory_space<vmem>>, vector<4x512xf32>
      %c0_35 = arith.constant 0 : index
      %c0_36 = arith.constant 0 : index
      %360 = vector.load %arg7[%c0_35, %c0_36] : memref<4x512xf32, #tpu.memory_space<vmem>>, vector<4x512xf32>
      tpu.vector_store %arg7[%c0_35, %c0_36], %359 {strides = array<i32>} : memref<4x512xf32, #tpu.memory_space<vmem>>, vector<4x512xf32>,
    } else {
    }
    %c0 = arith.constant 0 : index
    %c0_1 = arith.constant 0 : index
    %3 = vector.load %arg7[%c0, %c0_1] : memref<4x512xf32, #tpu.memory_space<vmem>>, vector<4x512xf32>
    %c0_2 = arith.constant 0 : index
    %c0_3 = arith.constant 0 : index
    %4 = vector.load %arg1[%c0_2, %c0_3] : memref<25x512xf32, #tpu.memory_space<vmem>>, vector<25x512xf32>
    %c0_4 = arith.constant 0 : index
    %c0_5 = arith.constant 0 : index
    %c0_6 = arith.constant 0 : index
    %5 = vector.load %arg2[%c0_4, %c0_5, %c0_6] : memref<1x25x36xf32, #tpu.memory_space<vmem>>, vector<1x25x36xf32>
    %6 = vector.shape_cast %5 : vector<1x25x36xf32> to vector<25x36xf32>
    %7 = vector.extract_strided_slice %6 {offsets = [0, 0], sizes = [25, 4], strides = [1, 1]} : vector<25x36xf32> to vector<25x4xf32>
    %8 = vector.extract_strided_slice %3 {offsets = [0, 495], sizes = [4, 17], strides = [1, 1]} : vector<4x512xf32> to vector<4x17xf32>
    %9 = vector.extract_strided_slice %3 {offsets = [0, 0], sizes = [4, 495], strides = [1, 1]} : vector<4x512xf32> to vector<4x495xf32>
    %10 = tpu.concatenate %8, %9 in 1 : vector<4x17xf32>, vector<4x495xf32> -> vector<4x512xf32>
    %11 = vector.extract_strided_slice %4 {offsets = [6, 0], sizes = [1, 512], strides = [1, 1]} : vector<25x512xf32> to vector<1x512xf32>
    %12 = vector.broadcast %11 : vector<1x512xf32> to vector<4x512xf32>
    %13 = arith.mulf %10, %12 : vector<4x512xf32>
    %cst = arith.constant dense<0.000000e+00> : vector<25x512xf32>
    %14 = tpu.matmul %7, %13, %cst {dimension_numbers = #tpu.dot_dimension_numbers<[1], [0], [0], [1], [0, 0, 1, 1], [], []>} : vector<25x4xf32>, vector<4x512xf32>, vector<25x512xf32> -> vector<25x512xf32>
    %15 = vector.extract_strided_slice %6 {offsets = [0, 4], sizes = [25, 4], strides = [1, 1]} : vector<25x36xf32> to vector<25x4xf32>
    %16 = vector.extract_strided_slice %3 {offsets = [0, 496], sizes = [4, 16], strides = [1, 1]} : vector<4x512xf32> to vector<4x16xf32>
    %17 = vector.extract_strided_slice %3 {offsets = [0, 0], sizes = [4, 496], strides = [1, 1]} : vector<4x512xf32> to vector<4x496xf32>
    %18 = tpu.concatenate %16, %17 in 1 : vector<4x16xf32>, vector<4x496xf32> -> vector<4x512xf32>
    %19 = vector.extract_strided_slice %4 {offsets = [7, 0], sizes = [1, 512], strides = [1, 1]} : vector<25x512xf32> to vector<1x512xf32>
    %20 = vector.broadcast %19 : vector<1x512xf32> to vector<4x512xf32>
    %21 = arith.mulf %18, %20 : vector<4x512xf32>
    %cst_7 = arith.constant dense<0.000000e+00> : vector<25x512xf32>
    %22 = tpu.matmul %15, %21, %cst_7 {dimension_numbers = #tpu.dot_dimension_numbers<[1], [0], [0], [1], [0, 0, 1, 1], [], []>} : vector<25x4xf32>, vector<4x512xf32>, vector<25x512xf32> -> vector<25x512xf32>
    %23 = arith.addf %14, %22 : vector<25x512xf32>
    %24 = vector.extract_strided_slice %6 {offsets = [0, 8], sizes = [25, 4], strides = [1, 1]} : vector<25x36xf32> to vector<25x4xf32>
    %25 = vector.extract_strided_slice %3 {offsets = [0, 497], sizes = [4, 15], strides = [1, 1]} : vector<4x512xf32> to vector<4x15xf32>
    %26 = vector.extract_strided_slice %3 {offsets = [0, 0], sizes = [4, 497], strides = [1, 1]} : vector<4x512xf32> to vector<4x497xf32>
    %27 = tpu.concatenate %25, %26 in 1 : vector<4x15xf32>, vector<4x497xf32> -> vector<4x512xf32>
    %28 = vector.extract_strided_slice %4 {offsets = [8, 0], sizes = [1, 512], strides = [1, 1]} : vector<25x512xf32> to vector<1x512xf32>
    %29 = vector.broadcast %28 : vector<1x512xf32> to vector<4x512xf32>
    %30 = arith.mulf %27, %29 : vector<4x512xf32>
    %cst_8 = arith.constant dense<0.000000e+00> : vector<25x512xf32>
    %31 = tpu.matmul %24, %30, %cst_8 {dimension_numbers = #tpu.dot_dimension_numbers<[1], [0], [0], [1], [0, 0, 1, 1], [], []>} : vector<25x4xf32>, vector<4x512xf32>, vector<25x512xf32> -> vector<25x512xf32>
    %32 = arith.addf %23, %31 : vector<25x512xf32>
    %33 = vector.extract_strided_slice %6 {offsets = [0, 12], sizes = [25, 4], strides = [1, 1]} : vector<25x36xf32> to vector<25x4xf32>
    %34 = vector.extract_strided_slice %3 {offsets = [0, 511], sizes = [4, 1], strides = [1, 1]} : vector<4x512xf32> to vector<4x1xf32>
    %35 = vector.extract_strided_slice %3 {offsets = [0, 0], sizes = [4, 511], strides = [1, 1]} : vector<4x512xf32> to vector<4x511xf32>
    %36 = tpu.concatenate %34, %35 in 1 : vector<4x1xf32>, vector<4x511xf32> -> vector<4x512xf32>
    %37 = vector.extract_strided_slice %4 {offsets = [11, 0], sizes = [1, 512], strides = [1, 1]} : vector<25x512xf32> to vector<1x512xf32>
    %38 = vector.broadcast %37 : vector<1x512xf32> to vector<4x512xf32>
    %39 = arith.mulf %36, %38 : vector<4x512xf32>
    %cst_9 = arith.constant dense<0.000000e+00> : vector<25x512xf32>
    %40 = tpu.matmul %33, %39, %cst_9 {dimension_numbers = #tpu.dot_dimension_numbers<[1], [0], [0], [1], [0, 0, 1, 1], [], []>} : vector<25x4xf32>, vector<4x512xf32>, vector<25x512xf32> -> vector<25x512xf32>
    %41 = arith.addf %32, %40 : vector<25x512xf32>
    %42 = vector.extract_strided_slice %6 {offsets = [0, 16], sizes = [25, 4], strides = [1, 1]} : vector<25x36xf32> to vector<25x4xf32>
    %cst_10 = arith.constant dense<0.000000e+00> : vector<25x512xf32>
    %43 = tpu.matmul %42, %3, %cst_10 {dimension_numbers = #tpu.dot_dimension_numbers<[1], [0], [0], [1], [0, 0, 1, 1], [], []>} : vector<25x4xf32>, vector<4x512xf32>, vector<25x512xf32> -> vector<25x512xf32>
    %44 = arith.addf %41, %43 : vector<25x512xf32>
    %45 = vector.extract_strided_slice %6 {offsets = [0, 20], sizes = [25, 4], strides = [1, 1]} : vector<25x36xf32> to vector<25x4xf32>
    %46 = vector.extract_strided_slice %3 {offsets = [0, 1], sizes = [4, 511], strides = [1, 1]} : vector<4x512xf32> to vector<4x511xf32>
    %47 = vector.extract_strided_slice %3 {offsets = [0, 0], sizes = [4, 1], strides = [1, 1]} : vector<4x512xf32> to vector<4x1xf32>
    %48 = tpu.concatenate %46, %47 in 1 : vector<4x511xf32>, vector<4x1xf32> -> vector<4x512xf32>
    %49 = vector.extract_strided_slice %4 {offsets = [13, 0], sizes = [1, 512], strides = [1, 1]} : vector<25x512xf32> to vector<1x512xf32>
    %50 = vector.broadcast %49 : vector<1x512xf32> to vector<4x512xf32>
    %51 = arith.mulf %48, %50 : vector<4x512xf32>
    %cst_11 = arith.constant dense<0.000000e+00> : vector<25x512xf32>
    %52 = tpu.matmul %45, %51, %cst_11 {dimension_numbers = #tpu.dot_dimension_numbers<[1], [0], [0], [1], [0, 0, 1, 1], [], []>} : vector<25x4xf32>, vector<4x512xf32>, vector<25x512xf32> -> vector<25x512xf32>
    %53 = arith.addf %44, %52 : vector<25x512xf32>
    %54 = vector.extract_strided_slice %6 {offsets = [0, 24], sizes = [25, 4], strides = [1, 1]} : vector<25x36xf32> to vector<25x4xf32>
    %55 = vector.extract_strided_slice %3 {offsets = [0, 15], sizes = [4, 497], strides = [1, 1]} : vector<4x512xf32> to vector<4x497xf32>
    %56 = vector.extract_strided_slice %3 {offsets = [0, 0], sizes = [4, 15], strides = [1, 1]} : vector<4x512xf32> to vector<4x15xf32>
    %57 = tpu.concatenate %55, %56 in 1 : vector<4x497xf32>, vector<4x15xf32> -> vector<4x512xf32>
    %58 = vector.extract_strided_slice %4 {offsets = [16, 0], sizes = [1, 512], strides = [1, 1]} : vector<25x512xf32> to vector<1x512xf32>
    %59 = vector.broadcast %58 : vector<1x512xf32> to vector<4x512xf32>
    %60 = arith.mulf %57, %59 : vector<4x512xf32>
    %cst_12 = arith.constant dense<0.000000e+00> : vector<25x512xf32>
    %61 = tpu.matmul %54, %60, %cst_12 {dimension_numbers = #tpu.dot_dimension_numbers<[1], [0], [0], [1], [0, 0, 1, 1], [], []>} : vector<25x4xf32>, vector<4x512xf32>, vector<25x512xf32> -> vector<25x512xf32>
    %62 = arith.addf %53, %61 : vector<25x512xf32>
    %63 = vector.extract_strided_slice %6 {offsets = [0, 28], sizes = [25, 4], strides = [1, 1]} : vector<25x36xf32> to vector<25x4xf32>
    %64 = vector.extract_strided_slice %3 {offsets = [0, 16], sizes = [4, 496], strides = [1, 1]} : vector<4x512xf32> to vector<4x496xf32>
    %65 = vector.extract_strided_slice %3 {offsets = [0, 0], sizes = [4, 16], strides = [1, 1]} : vector<4x512xf32> to vector<4x16xf32>
    %66 = tpu.concatenate %64, %65 in 1 : vector<4x496xf32>, vector<4x16xf32> -> vector<4x512xf32>
    %67 = vector.extract_strided_slice %4 {offsets = [17, 0], sizes = [1, 512], strides = [1, 1]} : vector<25x512xf32> to vector<1x512xf32>
    %68 = vector.broadcast %67 : vector<1x512xf32> to vector<4x512xf32>
    %69 = arith.mulf %66, %68 : vector<4x512xf32>
    %cst_13 = arith.constant dense<0.000000e+00> : vector<25x512xf32>
    %70 = tpu.matmul %63, %69, %cst_13 {dimension_numbers = #tpu.dot_dimension_numbers<[1], [0], [0], [1], [0, 0, 1, 1], [], []>} : vector<25x4xf32>, vector<4x512xf32>, vector<25x512xf32> -> vector<25x512xf32>
    %71 = arith.addf %62, %70 : vector<25x512xf32>
    %72 = vector.extract_strided_slice %6 {offsets = [0, 32], sizes = [25, 4], strides = [1, 1]} : vector<25x36xf32> to vector<25x4xf32>
    %73 = vector.extract_strided_slice %3 {offsets = [0, 17], sizes = [4, 495], strides = [1, 1]} : vector<4x512xf32> to vector<4x495xf32>
    %74 = vector.extract_strided_slice %3 {offsets = [0, 0], sizes = [4, 17], strides = [1, 1]} : vector<4x512xf32> to vector<4x17xf32>
    %75 = tpu.concatenate %73, %74 in 1 : vector<4x495xf32>, vector<4x17xf32> -> vector<4x512xf32>
    %76 = vector.extract_strided_slice %4 {offsets = [18, 0], sizes = [1, 512], strides = [1, 1]} : vector<25x512xf32> to vector<1x512xf32>
    %77 = vector.broadcast %76 : vector<1x512xf32> to vector<4x512xf32>
    %78 = arith.mulf %75, %77 : vector<4x512xf32>
    %cst_14 = arith.constant dense<0.000000e+00> : vector<25x512xf32>
    %79 = tpu.matmul %72, %78, %cst_14 {dimension_numbers = #tpu.dot_dimension_numbers<[1], [0], [0], [1], [0, 0, 1, 1], [], []>} : vector<25x4xf32>, vector<4x512xf32>, vector<25x512xf32> -> vector<25x512xf32>
    %80 = arith.addf %71, %79 : vector<25x512xf32>
    %c0_15 = arith.constant 0 : index
    %c0_16 = arith.constant 0 : index
    %c0_17 = arith.constant 0 : index
    %81 = vector.load %arg3[%c0_15, %c0_16, %c0_17] : memref<1x25x1xf32, #tpu.memory_space<vmem>>, vector<1x25x1xf32>
    %82 = vector.shape_cast %81 : vector<1x25x1xf32> to vector<25x1xf32>
    %83 = vector.broadcast %82 : vector<25x1xf32> to vector<25x512xf32>
    %84 = arith.addf %80, %83 : vector<25x512xf32>
    %cst_18 = arith.constant 0.000000e+00 : f32
    %85 = vector.broadcast %cst_18 : f32 to vector<4x512xf32>
    %86 = vector.extract_strided_slice %3 {offsets = [0, 478], sizes = [4, 34], strides = [1, 1]} : vector<4x512xf32> to vector<4x34xf32>
    %87 = vector.extract_strided_slice %3 {offsets = [0, 0], sizes = [4, 478], strides = [1, 1]} : vector<4x512xf32> to vector<4x478xf32>
    %88 = tpu.concatenate %86, %87 in 1 : vector<4x34xf32>, vector<4x478xf32> -> vector<4x512xf32>
    %89 = vector.extract_strided_slice %4 {offsets = [0, 0], sizes = [1, 512], strides = [1, 1]} : vector<25x512xf32> to vector<1x512xf32>
    %90 = vector.broadcast %89 : vector<1x512xf32> to vector<4x512xf32>
    %91 = arith.mulf %88, %90 : vector<4x512xf32>
    %92 = vector.extract_strided_slice %84 {offsets = [0, 0], sizes = [1, 512], strides = [1, 1]} : vector<25x512xf32> to vector<1x512xf32>
    %93 = vector.broadcast %92 : vector<1x512xf32> to vector<4x512xf32>
    %94 = arith.mulf %91, %93 : vector<4x512xf32>
    %95 = arith.addf %85, %94 : vector<4x512xf32>
    %96 = vector.extract_strided_slice %3 {offsets = [0, 479], sizes = [4, 33], strides = [1, 1]} : vector<4x512xf32> to vector<4x33xf32>
    %97 = vector.extract_strided_slice %3 {offsets = [0, 0], sizes = [4, 479], strides = [1, 1]} : vector<4x512xf32> to vector<4x479xf32>
    %98 = tpu.concatenate %96, %97 in 1 : vector<4x33xf32>, vector<4x479xf32> -> vector<4x512xf32>
    %99 = vector.extract_strided_slice %4 {offsets = [1, 0], sizes = [1, 512], strides = [1, 1]} : vector<25x512xf32> to vector<1x512xf32>
    %100 = vector.broadcast %99 : vector<1x512xf32> to vector<4x512xf32>
    %101 = arith.mulf %98, %100 : vector<4x512xf32>
    %102 = vector.extract_strided_slice %84 {offsets = [1, 0], sizes = [1, 512], strides = [1, 1]} : vector<25x512xf32> to vector<1x512xf32>
    %103 = vector.broadcast %102 : vector<1x512xf32> to vector<4x512xf32>
    %104 = arith.mulf %101, %103 : vector<4x512xf32>
    %105 = arith.addf %95, %104 : vector<4x512xf32>
    %106 = vector.extract_strided_slice %3 {offsets = [0, 480], sizes = [4, 32], strides = [1, 1]} : vector<4x512xf32> to vector<4x32xf32>
    %107 = vector.extract_strided_slice %3 {offsets = [0, 0], sizes = [4, 480], strides = [1, 1]} : vector<4x512xf32> to vector<4x480xf32>
    %108 = tpu.concatenate %106, %107 in 1 : vector<4x32xf32>, vector<4x480xf32> -> vector<4x512xf32>
    %109 = vector.extract_strided_slice %4 {offsets = [2, 0], sizes = [1, 512], strides = [1, 1]} : vector<25x512xf32> to vector<1x512xf32>
    %110 = vector.broadcast %109 : vector<1x512xf32> to vector<4x512xf32>
    %111 = arith.mulf %108, %110 : vector<4x512xf32>
    %112 = vector.extract_strided_slice %84 {offsets = [2, 0], sizes = [1, 512], strides = [1, 1]} : vector<25x512xf32> to vector<1x512xf32>
    %113 = vector.broadcast %112 : vector<1x512xf32> to vector<4x512xf32>
    %114 = arith.mulf %111, %113 : vector<4x512xf32>
    %115 = arith.addf %105, %114 : vector<4x512xf32>
    %116 = vector.extract_strided_slice %3 {offsets = [0, 481], sizes = [4, 31], strides = [1, 1]} : vector<4x512xf32> to vector<4x31xf32>
    %117 = vector.extract_strided_slice %3 {offsets = [0, 0], sizes = [4, 481], strides = [1, 1]} : vector<4x512xf32> to vector<4x481xf32>
    %118 = tpu.concatenate %116, %117 in 1 : vector<4x31xf32>, vector<4x481xf32> -> vector<4x512xf32>
    %119 = vector.extract_strided_slice %4 {offsets = [3, 0], sizes = [1, 512], strides = [1, 1]} : vector<25x512xf32> to vector<1x512xf32>
    %120 = vector.broadcast %119 : vector<1x512xf32> to vector<4x512xf32>
    %121 = arith.mulf %118, %120 : vector<4x512xf32>
    %122 = vector.extract_strided_slice %84 {offsets = [3, 0], sizes = [1, 512], strides = [1, 1]} : vector<25x512xf32> to vector<1x512xf32>
    %123 = vector.broadcast %122 : vector<1x512xf32> to vector<4x512xf32>
    %124 = arith.mulf %121, %123 : vector<4x512xf32>
    %125 = arith.addf %115, %124 : vector<4x512xf32>
    %126 = vector.extract_strided_slice %3 {offsets = [0, 482], sizes = [4, 30], strides = [1, 1]} : vector<4x512xf32> to vector<4x30xf32>
    %127 = vector.extract_strided_slice %3 {offsets = [0, 0], sizes = [4, 482], strides = [1, 1]} : vector<4x512xf32> to vector<4x482xf32>
    %128 = tpu.concatenate %126, %127 in 1 : vector<4x30xf32>, vector<4x482xf32> -> vector<4x512xf32>
    %129 = vector.extract_strided_slice %4 {offsets = [4, 0], sizes = [1, 512], strides = [1, 1]} : vector<25x512xf32> to vector<1x512xf32>
    %130 = vector.broadcast %129 : vector<1x512xf32> to vector<4x512xf32>
    %131 = arith.mulf %128, %130 : vector<4x512xf32>
    %132 = vector.extract_strided_slice %84 {offsets = [4, 0], sizes = [1, 512], strides = [1, 1]} : vector<25x512xf32> to vector<1x512xf32>
    %133 = vector.broadcast %132 : vector<1x512xf32> to vector<4x512xf32>
    %134 = arith.mulf %131, %133 : vector<4x512xf32>
    %135 = arith.addf %125, %134 : vector<4x512xf32>
    %136 = vector.extract_strided_slice %3 {offsets = [0, 494], sizes = [4, 18], strides = [1, 1]} : vector<4x512xf32> to vector<4x18xf32>
    %137 = vector.extract_strided_slice %3 {offsets = [0, 0], sizes = [4, 494], strides = [1, 1]} : vector<4x512xf32> to vector<4x494xf32>
    %138 = tpu.concatenate %136, %137 in 1 : vector<4x18xf32>, vector<4x494xf32> -> vector<4x512xf32>
    %139 = vector.extract_strided_slice %4 {offsets = [5, 0], sizes = [1, 512], strides = [1, 1]} : vector<25x512xf32> to vector<1x512xf32>
    %140 = vector.broadcast %139 : vector<1x512xf32> to vector<4x512xf32>
    %141 = arith.mulf %138, %140 : vector<4x512xf32>
    %142 = vector.extract_strided_slice %84 {offsets = [5, 0], sizes = [1, 512], strides = [1, 1]} : vector<25x512xf32> to vector<1x512xf32>
    %143 = vector.broadcast %142 : vector<1x512xf32> to vector<4x512xf32>
    %144 = arith.mulf %141, %143 : vector<4x512xf32>
    %145 = arith.addf %135, %144 : vector<4x512xf32>
    %146 = vector.extract_strided_slice %3 {offsets = [0, 495], sizes = [4, 17], strides = [1, 1]} : vector<4x512xf32> to vector<4x17xf32>
    %147 = vector.extract_strided_slice %3 {offsets = [0, 0], sizes = [4, 495], strides = [1, 1]} : vector<4x512xf32> to vector<4x495xf32>
    %148 = tpu.concatenate %146, %147 in 1 : vector<4x17xf32>, vector<4x495xf32> -> vector<4x512xf32>
    %149 = vector.extract_strided_slice %4 {offsets = [6, 0], sizes = [1, 512], strides = [1, 1]} : vector<25x512xf32> to vector<1x512xf32>
    %150 = vector.broadcast %149 : vector<1x512xf32> to vector<4x512xf32>
    %151 = arith.mulf %148, %150 : vector<4x512xf32>
    %152 = vector.extract_strided_slice %84 {offsets = [6, 0], sizes = [1, 512], strides = [1, 1]} : vector<25x512xf32> to vector<1x512xf32>
    %153 = vector.broadcast %152 : vector<1x512xf32> to vector<4x512xf32>
    %154 = arith.mulf %151, %153 : vector<4x512xf32>
    %155 = arith.addf %145, %154 : vector<4x512xf32>
    %156 = vector.extract_strided_slice %3 {offsets = [0, 496], sizes = [4, 16], strides = [1, 1]} : vector<4x512xf32> to vector<4x16xf32>
    %157 = vector.extract_strided_slice %3 {offsets = [0, 0], sizes = [4, 496], strides = [1, 1]} : vector<4x512xf32> to vector<4x496xf32>
    %158 = tpu.concatenate %156, %157 in 1 : vector<4x16xf32>, vector<4x496xf32> -> vector<4x512xf32>
    %159 = vector.extract_strided_slice %4 {offsets = [7, 0], sizes = [1, 512], strides = [1, 1]} : vector<25x512xf32> to vector<1x512xf32>
    %160 = vector.broadcast %159 : vector<1x512xf32> to vector<4x512xf32>
    %161 = arith.mulf %158, %160 : vector<4x512xf32>
    %162 = vector.extract_strided_slice %84 {offsets = [7, 0], sizes = [1, 512], strides = [1, 1]} : vector<25x512xf32> to vector<1x512xf32>
    %163 = vector.broadcast %162 : vector<1x512xf32> to vector<4x512xf32>
    %164 = arith.mulf %161, %163 : vector<4x512xf32>
    %165 = arith.addf %155, %164 : vector<4x512xf32>
    %166 = vector.extract_strided_slice %3 {offsets = [0, 497], sizes = [4, 15], strides = [1, 1]} : vector<4x512xf32> to vector<4x15xf32>
    %167 = vector.extract_strided_slice %3 {offsets = [0, 0], sizes = [4, 497], strides = [1, 1]} : vector<4x512xf32> to vector<4x497xf32>
    %168 = tpu.concatenate %166, %167 in 1 : vector<4x15xf32>, vector<4x497xf32> -> vector<4x512xf32>
    %169 = vector.extract_strided_slice %4 {offsets = [8, 0], sizes = [1, 512], strides = [1, 1]} : vector<25x512xf32> to vector<1x512xf32>
    %170 = vector.broadcast %169 : vector<1x512xf32> to vector<4x512xf32>
    %171 = arith.mulf %168, %170 : vector<4x512xf32>
    %172 = vector.extract_strided_slice %84 {offsets = [8, 0], sizes = [1, 512], strides = [1, 1]} : vector<25x512xf32> to vector<1x512xf32>
    %173 = vector.broadcast %172 : vector<1x512xf32> to vector<4x512xf32>
    %174 = arith.mulf %171, %173 : vector<4x512xf32>
    %175 = arith.addf %165, %174 : vector<4x512xf32>
    %176 = vector.extract_strided_slice %3 {offsets = [0, 498], sizes = [4, 14], strides = [1, 1]} : vector<4x512xf32> to vector<4x14xf32>
    %177 = vector.extract_strided_slice %3 {offsets = [0, 0], sizes = [4, 498], strides = [1, 1]} : vector<4x512xf32> to vector<4x498xf32>
    %178 = tpu.concatenate %176, %177 in 1 : vector<4x14xf32>, vector<4x498xf32> -> vector<4x512xf32>
    %179 = vector.extract_strided_slice %4 {offsets = [9, 0], sizes = [1, 512], strides = [1, 1]} : vector<25x512xf32> to vector<1x512xf32>
    %180 = vector.broadcast %179 : vector<1x512xf32> to vector<4x512xf32>
    %181 = arith.mulf %178, %180 : vector<4x512xf32>
    %182 = vector.extract_strided_slice %84 {offsets = [9, 0], sizes = [1, 512], strides = [1, 1]} : vector<25x512xf32> to vector<1x512xf32>
    %183 = vector.broadcast %182 : vector<1x512xf32> to vector<4x512xf32>
    %184 = arith.mulf %181, %183 : vector<4x512xf32>
    %185 = arith.addf %175, %184 : vector<4x512xf32>
    %186 = vector.extract_strided_slice %3 {offsets = [0, 510], sizes = [4, 2], strides = [1, 1]} : vector<4x512xf32> to vector<4x2xf32>
    %187 = vector.extract_strided_slice %3 {offsets = [0, 0], sizes = [4, 510], strides = [1, 1]} : vector<4x512xf32> to vector<4x510xf32>
    %188 = tpu.concatenate %186, %187 in 1 : vector<4x2xf32>, vector<4x510xf32> -> vector<4x512xf32>
    %189 = vector.extract_strided_slice %4 {offsets = [10, 0], sizes = [1, 512], strides = [1, 1]} : vector<25x512xf32> to vector<1x512xf32>
    %190 = vector.broadcast %189 : vector<1x512xf32> to vector<4x512xf32>
    %191 = arith.mulf %188, %190 : vector<4x512xf32>
    %192 = vector.extract_strided_slice %84 {offsets = [10, 0], sizes = [1, 512], strides = [1, 1]} : vector<25x512xf32> to vector<1x512xf32>
    %193 = vector.broadcast %192 : vector<1x512xf32> to vector<4x512xf32>
    %194 = arith.mulf %191, %193 : vector<4x512xf32>
    %195 = arith.addf %185, %194 : vector<4x512xf32>
    %196 = vector.extract_strided_slice %3 {offsets = [0, 511], sizes = [4, 1], strides = [1, 1]} : vector<4x512xf32> to vector<4x1xf32>
    %197 = vector.extract_strided_slice %3 {offsets = [0, 0], sizes = [4, 511], strides = [1, 1]} : vector<4x512xf32> to vector<4x511xf32>
    %198 = tpu.concatenate %196, %197 in 1 : vector<4x1xf32>, vector<4x511xf32> -> vector<4x512xf32>
    %199 = vector.extract_strided_slice %4 {offsets = [11, 0], sizes = [1, 512], strides = [1, 1]} : vector<25x512xf32> to vector<1x512xf32>
    %200 = vector.broadcast %199 : vector<1x512xf32> to vector<4x512xf32>
    %201 = arith.mulf %198, %200 : vector<4x512xf32>
    %202 = vector.extract_strided_slice %84 {offsets = [11, 0], sizes = [1, 512], strides = [1, 1]} : vector<25x512xf32> to vector<1x512xf32>
    %203 = vector.broadcast %202 : vector<1x512xf32> to vector<4x512xf32>
    %204 = arith.mulf %201, %203 : vector<4x512xf32>
    %205 = arith.addf %195, %204 : vector<4x512xf32>
    %206 = vector.extract_strided_slice %84 {offsets = [12, 0], sizes = [1, 512], strides = [1, 1]} : vector<25x512xf32> to vector<1x512xf32>
    %207 = vector.broadcast %206 : vector<1x512xf32> to vector<4x512xf32>
    %208 = arith.mulf %3, %207 : vector<4x512xf32>
    %209 = arith.addf %205, %208 : vector<4x512xf32>
    %210 = vector.extract_strided_slice %3 {offsets = [0, 1], sizes = [4, 511], strides = [1, 1]} : vector<4x512xf32> to vector<4x511xf32>
    %211 = vector.extract_strided_slice %3 {offsets = [0, 0], sizes = [4, 1], strides = [1, 1]} : vector<4x512xf32> to vector<4x1xf32>
    %212 = tpu.concatenate %210, %211 in 1 : vector<4x511xf32>, vector<4x1xf32> -> vector<4x512xf32>
    %213 = vector.extract_strided_slice %4 {offsets = [13, 0], sizes = [1, 512], strides = [1, 1]} : vector<25x512xf32> to vector<1x512xf32>
    %214 = vector.broadcast %213 : vector<1x512xf32> to vector<4x512xf32>
    %215 = arith.mulf %212, %214 : vector<4x512xf32>
    %216 = vector.extract_strided_slice %84 {offsets = [13, 0], sizes = [1, 512], strides = [1, 1]} : vector<25x512xf32> to vector<1x512xf32>
    %217 = vector.broadcast %216 : vector<1x512xf32> to vector<4x512xf32>
    %218 = arith.mulf %215, %217 : vector<4x512xf32>
    %219 = arith.addf %209, %218 : vector<4x512xf32>
    %220 = vector.extract_strided_slice %3 {offsets = [0, 2], sizes = [4, 510], strides = [1, 1]} : vector<4x512xf32> to vector<4x510xf32>
    %221 = vector.extract_strided_slice %3 {offsets = [0, 0], sizes = [4, 2], strides = [1, 1]} : vector<4x512xf32> to vector<4x2xf32>
    %222 = tpu.concatenate %220, %221 in 1 : vector<4x510xf32>, vector<4x2xf32> -> vector<4x512xf32>
    %223 = vector.extract_strided_slice %4 {offsets = [14, 0], sizes = [1, 512], strides = [1, 1]} : vector<25x512xf32> to vector<1x512xf32>
    %224 = vector.broadcast %223 : vector<1x512xf32> to vector<4x512xf32>
    %225 = arith.mulf %222, %224 : vector<4x512xf32>
    %226 = vector.extract_strided_slice %84 {offsets = [14, 0], sizes = [1, 512], strides = [1, 1]} : vector<25x512xf32> to vector<1x512xf32>
    %227 = vector.broadcast %226 : vector<1x512xf32> to vector<4x512xf32>
    %228 = arith.mulf %225, %227 : vector<4x512xf32>
    %229 = arith.addf %219, %228 : vector<4x512xf32>
    %230 = vector.extract_strided_slice %3 {offsets = [0, 14], sizes = [4, 498], strides = [1, 1]} : vector<4x512xf32> to vector<4x498xf32>
    %231 = vector.extract_strided_slice %3 {offsets = [0, 0], sizes = [4, 14], strides = [1, 1]} : vector<4x512xf32> to vector<4x14xf32>
    %232 = tpu.concatenate %230, %231 in 1 : vector<4x498xf32>, vector<4x14xf32> -> vector<4x512xf32>
    %233 = vector.extract_strided_slice %4 {offsets = [15, 0], sizes = [1, 512], strides = [1, 1]} : vector<25x512xf32> to vector<1x512xf32>
    %234 = vector.broadcast %233 : vector<1x512xf32> to vector<4x512xf32>
    %235 = arith.mulf %232, %234 : vector<4x512xf32>
    %236 = vector.extract_strided_slice %84 {offsets = [15, 0], sizes = [1, 512], strides = [1, 1]} : vector<25x512xf32> to vector<1x512xf32>
    %237 = vector.broadcast %236 : vector<1x512xf32> to vector<4x512xf32>
    %238 = arith.mulf %235, %237 : vector<4x512xf32>
    %239 = arith.addf %229, %238 : vector<4x512xf32>
    %240 = vector.extract_strided_slice %3 {offsets = [0, 15], sizes = [4, 497], strides = [1, 1]} : vector<4x512xf32> to vector<4x497xf32>
    %241 = vector.extract_strided_slice %3 {offsets = [0, 0], sizes = [4, 15], strides = [1, 1]} : vector<4x512xf32> to vector<4x15xf32>
    %242 = tpu.concatenate %240, %241 in 1 : vector<4x497xf32>, vector<4x15xf32> -> vector<4x512xf32>
    %243 = vector.extract_strided_slice %4 {offsets = [16, 0], sizes = [1, 512], strides = [1, 1]} : vector<25x512xf32> to vector<1x512xf32>
    %244 = vector.broadcast %243 : vector<1x512xf32> to vector<4x512xf32>
    %245 = arith.mulf %242, %244 : vector<4x512xf32>
    %246 = vector.extract_strided_slice %84 {offsets = [16, 0], sizes = [1, 512], strides = [1, 1]} : vector<25x512xf32> to vector<1x512xf32>
    %247 = vector.broadcast %246 : vector<1x512xf32> to vector<4x512xf32>
    %248 = arith.mulf %245, %247 : vector<4x512xf32>
    %249 = arith.addf %239, %248 : vector<4x512xf32>
    %250 = vector.extract_strided_slice %3 {offsets = [0, 16], sizes = [4, 496], strides = [1, 1]} : vector<4x512xf32> to vector<4x496xf32>
    %251 = vector.extract_strided_slice %3 {offsets = [0, 0], sizes = [4, 16], strides = [1, 1]} : vector<4x512xf32> to vector<4x16xf32>
    %252 = tpu.concatenate %250, %251 in 1 : vector<4x496xf32>, vector<4x16xf32> -> vector<4x512xf32>
    %253 = vector.extract_strided_slice %4 {offsets = [17, 0], sizes = [1, 512], strides = [1, 1]} : vector<25x512xf32> to vector<1x512xf32>
    %254 = vector.broadcast %253 : vector<1x512xf32> to vector<4x512xf32>
    %255 = arith.mulf %252, %254 : vector<4x512xf32>
    %256 = vector.extract_strided_slice %84 {offsets = [17, 0], sizes = [1, 512], strides = [1, 1]} : vector<25x512xf32> to vector<1x512xf32>
    %257 = vector.broadcast %256 : vector<1x512xf32> to vector<4x512xf32>
    %258 = arith.mulf %255, %257 : vector<4x512xf32>
    %259 = arith.addf %249, %258 : vector<4x512xf32>
    %260 = vector.extract_strided_slice %3 {offsets = [0, 17], sizes = [4, 495], strides = [1, 1]} : vector<4x512xf32> to vector<4x495xf32>
    %261 = vector.extract_strided_slice %3 {offsets = [0, 0], sizes = [4, 17], strides = [1, 1]} : vector<4x512xf32> to vector<4x17xf32>
    %262 = tpu.concatenate %260, %261 in 1 : vector<4x495xf32>, vector<4x17xf32> -> vector<4x512xf32>
    %263 = vector.extract_strided_slice %4 {offsets = [18, 0], sizes = [1, 512], strides = [1, 1]} : vector<25x512xf32> to vector<1x512xf32>
    %264 = vector.broadcast %263 : vector<1x512xf32> to vector<4x512xf32>
    %265 = arith.mulf %262, %264 : vector<4x512xf32>
    %266 = vector.extract_strided_slice %84 {offsets = [18, 0], sizes = [1, 512], strides = [1, 1]} : vector<25x512xf32> to vector<1x512xf32>
    %267 = vector.broadcast %266 : vector<1x512xf32> to vector<4x512xf32>
    %268 = arith.mulf %265, %267 : vector<4x512xf32>
    %269 = arith.addf %259, %268 : vector<4x512xf32>
    %270 = vector.extract_strided_slice %3 {offsets = [0, 18], sizes = [4, 494], strides = [1, 1]} : vector<4x512xf32> to vector<4x494xf32>
    %271 = vector.extract_strided_slice %3 {offsets = [0, 0], sizes = [4, 18], strides = [1, 1]} : vector<4x512xf32> to vector<4x18xf32>
    %272 = tpu.concatenate %270, %271 in 1 : vector<4x494xf32>, vector<4x18xf32> -> vector<4x512xf32>
    %273 = vector.extract_strided_slice %4 {offsets = [19, 0], sizes = [1, 512], strides = [1, 1]} : vector<25x512xf32> to vector<1x512xf32>
    %274 = vector.broadcast %273 : vector<1x512xf32> to vector<4x512xf32>
    %275 = arith.mulf %272, %274 : vector<4x512xf32>
    %276 = vector.extract_strided_slice %84 {offsets = [19, 0], sizes = [1, 512], strides = [1, 1]} : vector<25x512xf32> to vector<1x512xf32>
    %277 = vector.broadcast %276 : vector<1x512xf32> to vector<4x512xf32>
    %278 = arith.mulf %275, %277 : vector<4x512xf32>
    %279 = arith.addf %269, %278 : vector<4x512xf32>
    %280 = vector.extract_strided_slice %3 {offsets = [0, 30], sizes = [4, 482], strides = [1, 1]} : vector<4x512xf32> to vector<4x482xf32>
    %281 = vector.extract_strided_slice %3 {offsets = [0, 0], sizes = [4, 30], strides = [1, 1]} : vector<4x512xf32> to vector<4x30xf32>
    %282 = tpu.concatenate %280, %281 in 1 : vector<4x482xf32>, vector<4x30xf32> -> vector<4x512xf32>
    %283 = vector.extract_strided_slice %4 {offsets = [20, 0], sizes = [1, 512], strides = [1, 1]} : vector<25x512xf32> to vector<1x512xf32>
    %284 = vector.broadcast %283 : vector<1x512xf32> to vector<4x512xf32>
    %285 = arith.mulf %282, %284 : vector<4x512xf32>
    %286 = vector.extract_strided_slice %84 {offsets = [20, 0], sizes = [1, 512], strides = [1, 1]} : vector<25x512xf32> to vector<1x512xf32>
    %287 = vector.broadcast %286 : vector<1x512xf32> to vector<4x512xf32>
    %288 = arith.mulf %285, %287 : vector<4x512xf32>
    %289 = arith.addf %279, %288 : vector<4x512xf32>
    %290 = vector.extract_strided_slice %3 {offsets = [0, 31], sizes = [4, 481], strides = [1, 1]} : vector<4x512xf32> to vector<4x481xf32>
    %291 = vector.extract_strided_slice %3 {offsets = [0, 0], sizes = [4, 31], strides = [1, 1]} : vector<4x512xf32> to vector<4x31xf32>
    %292 = tpu.concatenate %290, %291 in 1 : vector<4x481xf32>, vector<4x31xf32> -> vector<4x512xf32>
    %293 = vector.extract_strided_slice %4 {offsets = [21, 0], sizes = [1, 512], strides = [1, 1]} : vector<25x512xf32> to vector<1x512xf32>
    %294 = vector.broadcast %293 : vector<1x512xf32> to vector<4x512xf32>
    %295 = arith.mulf %292, %294 : vector<4x512xf32>
    %296 = vector.extract_strided_slice %84 {offsets = [21, 0], sizes = [1, 512], strides = [1, 1]} : vector<25x512xf32> to vector<1x512xf32>
    %297 = vector.broadcast %296 : vector<1x512xf32> to vector<4x512xf32>
    %298 = arith.mulf %295, %297 : vector<4x512xf32>
    %299 = arith.addf %289, %298 : vector<4x512xf32>
    %300 = vector.extract_strided_slice %3 {offsets = [0, 32], sizes = [4, 480], strides = [1, 1]} : vector<4x512xf32> to vector<4x480xf32>
    %301 = vector.extract_strided_slice %3 {offsets = [0, 0], sizes = [4, 32], strides = [1, 1]} : vector<4x512xf32> to vector<4x32xf32>
    %302 = tpu.concatenate %300, %301 in 1 : vector<4x480xf32>, vector<4x32xf32> -> vector<4x512xf32>
    %303 = vector.extract_strided_slice %4 {offsets = [22, 0], sizes = [1, 512], strides = [1, 1]} : vector<25x512xf32> to vector<1x512xf32>
    %304 = vector.broadcast %303 : vector<1x512xf32> to vector<4x512xf32>
    %305 = arith.mulf %302, %304 : vector<4x512xf32>
    %306 = vector.extract_strided_slice %84 {offsets = [22, 0], sizes = [1, 512], strides = [1, 1]} : vector<25x512xf32> to vector<1x512xf32>
    %307 = vector.broadcast %306 : vector<1x512xf32> to vector<4x512xf32>
    %308 = arith.mulf %305, %307 : vector<4x512xf32>
    %309 = arith.addf %299, %308 : vector<4x512xf32>
    %310 = vector.extract_strided_slice %3 {offsets = [0, 33], sizes = [4, 479], strides = [1, 1]} : vector<4x512xf32> to vector<4x479xf32>
    %311 = vector.extract_strided_slice %3 {offsets = [0, 0], sizes = [4, 33], strides = [1, 1]} : vector<4x512xf32> to vector<4x33xf32>
    %312 = tpu.concatenate %310, %311 in 1 : vector<4x479xf32>, vector<4x33xf32> -> vector<4x512xf32>
    %313 = vector.extract_strided_slice %4 {offsets = [23, 0], sizes = [1, 512], strides = [1, 1]} : vector<25x512xf32> to vector<1x512xf32>
    %314 = vector.broadcast %313 : vector<1x512xf32> to vector<4x512xf32>
    %315 = arith.mulf %312, %314 : vector<4x512xf32>
    %316 = vector.extract_strided_slice %84 {offsets = [23, 0], sizes = [1, 512], strides = [1, 1]} : vector<25x512xf32> to vector<1x512xf32>
    %317 = vector.broadcast %316 : vector<1x512xf32> to vector<4x512xf32>
    %318 = arith.mulf %315, %317 : vector<4x512xf32>
    %319 = arith.addf %309, %318 : vector<4x512xf32>
    %320 = vector.extract_strided_slice %3 {offsets = [0, 34], sizes = [4, 478], strides = [1, 1]} : vector<4x512xf32> to vector<4x478xf32>
    %321 = vector.extract_strided_slice %3 {offsets = [0, 0], sizes = [4, 34], strides = [1, 1]} : vector<4x512xf32> to vector<4x34xf32>
    %322 = tpu.concatenate %320, %321 in 1 : vector<4x478xf32>, vector<4x34xf32> -> vector<4x512xf32>
    %323 = vector.extract_strided_slice %4 {offsets = [24, 0], sizes = [1, 512], strides = [1, 1]} : vector<25x512xf32> to vector<1x512xf32>
    %324 = vector.broadcast %323 : vector<1x512xf32> to vector<4x512xf32>
    %325 = arith.mulf %322, %324 : vector<4x512xf32>
    %326 = vector.extract_strided_slice %84 {offsets = [24, 0], sizes = [1, 512], strides = [1, 1]} : vector<25x512xf32> to vector<1x512xf32>
    %327 = vector.broadcast %326 : vector<1x512xf32> to vector<4x512xf32>
    %328 = arith.mulf %325, %327 : vector<4x512xf32>
    %329 = arith.addf %319, %328 : vector<4x512xf32>
    %cst_19 = arith.constant dense<0.000000e+00> : vector<4xf32>
    %330 = vector.multi_reduction <add>, %329, %cst_19 [1] : vector<4x512xf32> to vector<4xf32>
    %331 = vector.shape_cast %330 : vector<4xf32> to vector<4x1xf32>
    %cst_20 = arith.constant 5.120000e+02 : f32
    %332 = vector.broadcast %cst_20 : f32 to vector<4x1xf32>
    %333 = arith.divf %331, %332 : vector<4x1xf32>
    %334 = vector.broadcast %333 : vector<4x1xf32> to vector<4x512xf32>
    %335 = arith.subf %329, %334 : vector<4x512xf32>
    %336 = arith.mulf %335, %335 : vector<4x512xf32>
    %cst_21 = arith.constant dense<0.000000e+00> : vector<4xf32>
    %337 = vector.multi_reduction <add>, %336, %cst_21 [1] : vector<4x512xf32> to vector<4xf32>
    %338 = vector.shape_cast %337 : vector<4xf32> to vector<4x1xf32>
    %cst_22 = arith.constant 5.120000e+02 : f32
    %339 = vector.broadcast %cst_22 : f32 to vector<4x1xf32>
    %340 = arith.divf %338, %339 : vector<4x1xf32>
    %341 = vector.broadcast %333 : vector<4x1xf32> to vector<4x512xf32>
    %342 = arith.subf %329, %341 : vector<4x512xf32>
    %cst_23 = arith.constant 9.99999974E-6 : f32
    %343 = vector.broadcast %cst_23 : f32 to vector<4x1xf32>
    %344 = arith.addf %340, %343 : vector<4x1xf32>
    %345 = math.rsqrt %344 : vector<4x1xf32>
    %346 = vector.broadcast %345 : vector<4x1xf32> to vector<4x512xf32>
    %347 = arith.mulf %342, %346 : vector<4x512xf32>
    %c0_24 = arith.constant 0 : index
    %c0_25 = arith.constant 0 : index
    %c0_26 = arith.constant 0 : index
    %348 = vector.load %arg4[%c0_24, %c0_25, %c0_26] : memref<1x4x1xf32, #tpu.memory_space<vmem>>, vector<1x4x1xf32>
    %349 = vector.shape_cast %348 : vector<1x4x1xf32> to vector<4x1xf32>
    %350 = vector.broadcast %349 : vector<4x1xf32> to vector<4x512xf32>
    %351 = arith.mulf %347, %350 : vector<4x512xf32>
    %c0_27 = arith.constant 0 : index
    %c0_28 = arith.constant 0 : index
    %c0_29 = arith.constant 0 : index
    %352 = vector.load %arg5[%c0_27, %c0_28, %c0_29] : memref<1x4x1xf32, #tpu.memory_space<vmem>>, vector<1x4x1xf32>
    %353 = vector.shape_cast %352 : vector<1x4x1xf32> to vector<4x1xf32>
    %354 = vector.broadcast %353 : vector<4x1xf32> to vector<4x512xf32>
    %355 = arith.addf %351, %354 : vector<4x512xf32>
    %cst_30 = arith.constant 0.000000e+00 : f32
    %356 = vector.broadcast %cst_30 : f32 to vector<4x512xf32>
    %357 = arith.maximumf %355, %356 : vector<4x512xf32>
    %c0_31 = arith.constant 0 : index
    %c0_32 = arith.constant 0 : index
    %358 = vector.load %arg7[%c0_31, %c0_32] : memref<4x512xf32, #tpu.memory_space<vmem>>, vector<4x512xf32>
    tpu.vector_store %arg7[%c0_31, %c0_32], %357 {strides = array<i32>} : memref<4x512xf32, #tpu.memory_space<vmem>>, vector<4x512xf32>,
    return
  }
  func.func @transform_0(%arg0: i32) -> (i32, i32) {
    %c0_i32 = arith.constant 0 : i32
    %c0_i32_0 = arith.constant 0 : i32
    %c0_i32_1 = arith.constant 0 : i32
    return %c0_i32, %c0_i32_0 : i32, i32
  }
  func.func @transform_1(%arg0: i32) -> (i32, i32, i32) {
    %c0_i32 = arith.constant 0 : i32
    %c0_i32_0 = arith.constant 0 : i32
    %c0_i32_1 = arith.constant 0 : i32
    return %arg0, %c0_i32, %c0_i32_0 : i32, i32, i32
  }
  func.func @transform_2(%arg0: i32) -> (i32, i32, i32) {
    %c0_i32 = arith.constant 0 : i32
    %c0_i32_0 = arith.constant 0 : i32
    %c0_i32_1 = arith.constant 0 : i32
    return %arg0, %c0_i32, %c0_i32_0 : i32, i32, i32
  }
  func.func @transform_3(%arg0: i32) -> (i32, i32, i32) {
    %c0_i32 = arith.constant 0 : i32
    %c0_i32_0 = arith.constant 0 : i32
    %c0_i32_1 = arith.constant 0 : i32
    return %arg0, %c0_i32, %c0_i32_0 : i32, i32, i32
  }
  func.func @transform_4(%arg0: i32) -> (i32, i32, i32) {
    %c0_i32 = arith.constant 0 : i32
    %c0_i32_0 = arith.constant 0 : i32
    %c0_i32_1 = arith.constant 0 : i32
    return %arg0, %c0_i32, %c0_i32_0 : i32, i32, i32
  }
  func.func @transform_5(%arg0: i32) -> (i32, i32) {
    %c0_i32 = arith.constant 0 : i32
    %c0_i32_0 = arith.constant 0 : i32
    %c0_i32_1 = arith.constant 0 : i32
    return %c0_i32, %c0_i32_0 : i32, i32
  }
  func.func @transform_6(%arg0: i32) -> (i32, i32) {
    %c0_i32 = arith.constant 0 : i32
    %c0_i32_0 = arith.constant 0 : i32
    %c0_i32_1 = arith.constant 0 : i32
    return %c0_i32, %c0_i32_0 : i32, i32
  }
}

</mosaic_0001>

<llo_original>
// kernel: _fused_forward.1
$region0: #{_fused_forward.1}
  #allocation0 [shape = 'u32[]', space=smem, size = 0x4, offset = 0x4, fixed_abs, tag = 'smem constant byte address 0x4 - core index']
  #allocation1 [shape = 'u32[144,128]{1,0:T(1,128)}', space=vmem, size = 0x12000, scoped, tag = 'internal scratch']
  %s0 = inlined_call_operand.vmem [shape: f32[25,512], index: 0, kind: input, shape index: {}]
  %s1 = inlined_call_operand.vmem [shape: f32[14,25,36], index: 1, kind: input, shape index: {}]
  %s2 = inlined_call_operand.vmem [shape: f32[14,25,1], index: 2, kind: input, shape index: {}]
  %s3 = inlined_call_operand.vmem [shape: f32[14,4,1], index: 3, kind: input, shape index: {}]
  %s4 = inlined_call_operand.vmem [shape: f32[14,4,1], index: 4, kind: input, shape index: {}]
  %s5 = inlined_call_operand.vmem [shape: f32[4,512], index: 5, kind: input, shape index: {}]
  %s6 = inlined_call_operand.hbm [shape: f32[4,512], index: 6, kind: output, shape index: {}]
  %s7 = sld [smem:[#allocation0]]
  $region61: #{_fused_forward.1} parent=0
    _
  %s9 = ssub.s32 1, %s7
  %s10 = scalar_select 0, %s9, %s7
  $region1: #{_fused_forward.1} parent=0
    #allocation2 [shape = 'u8[8192]{0}', space=vmem, size = 0x2000, scoped, tag = 'output window, operand 0, single buffered']
    #allocation3 [shape = 's32[2]{0}', space=sflag, size = 0x8, scoped, tag = 'scoped memory for _fused_forward.1']
    %11 = vsyncpa [#allocation3], 0
    loop: start=0, step=1, limit=16
    $region2: #{_fused_forward.1} parent=1 // loop_pre_header
      _
    $region3: #{_fused_forward.1} parent=1 // loop_header
      %s13 = sphi 0, %s17
      %p14 = scmp.ge.s32.totalorder %s13, 16
      %s21 = sphi 0, %s21
      %s23 = sphi 0, %s21
      %s24 = sphi 0, %s23
      %s38 = sphi 0, %s24
      %s44 = sphi 0, %s46
      %s47 = sphi 0, %s44
      %s48 = sphi 0, %s47
      %s64 = sphi 0, %s48
      %s70 = sphi 0, %s72
      %s73 = sphi 0, %s70
      %s74 = sphi 0, %s73
      %s90 = sphi 0, %s74
      %s96 = sphi 0, %s98
      %s99 = sphi 0, %s96
      %s100 = sphi 0, %s99
      %s116 = sphi 0, %s100
      %s122 = sphi 0, %s124
      %s125 = sphi 0, %s122
      %s126 = sphi 0, %s125
      %s142 = sphi 0, %s126
      %s146 = sphi 0, %s146
      %s148 = sphi 0, %s146
      %s149 = sphi 0, %s148
      %s163 = sphi 0, %s149
      %s167 = sphi 0, %s167
      %s169 = sphi 0, %s167
      %s170 = sphi 0, %s169
      %s184 = sphi 0, %s170
    $region4: #{_fused_forward.1} parent=1 // loop_header_branch
      %16 = sbr.rel (%p14) target = $region8
    $region5: #{_fused_forward.1} parent=1 // loop_body
      %s18 = ssub.s32 %s13, 1
      %s19 = ssub.s32 %s13, 2
      %s20 = sadd.s32 %s13, 1
      %s22 = sadd.s32 %s21, 1
      %p25 = scmp.eq.s32.totalorder %s13, 13
      %p26 = scmp.ne.s32.totalorder %s21, %s23
      %p27 = scmp.eq.s32.totalorder %s13, 0
      %p28 = por %p26, %p27
      %p29 = scmp.ne.s32.totalorder %s21, %s23
      %p30 = scmp.eq.s32.totalorder %s18, 13
      %p31 = por %p29, %p30
      %p32 = scmp.ne.s32.totalorder %s23, %s24
      %p33 = scmp.eq.s32.totalorder %s18, 0
      %p34 = por %p32, %p33
      %p35 = scmp.ne.s32.totalorder %s23, %s24
      %p36 = scmp.eq.s32.totalorder %s19, 13
      %p37 = por %p35, %p36
      %p39 = scmp.ne.s32.totalorder %s24, %s38
      %p40 = scmp.eq.s32.totalorder %s19, 0
      %p41 = por %p39, %p40
      %s42 = ssub.s32 %s13, %s20
      %p43 = scmp.eq.s32.totalorder %s42, 0
      %s45 = sadd.s32 %s44, 1
      %s46 = scalar_select %p43, %s44, %s45
      %p49 = pneg %p43
      %p50 = scmp.eq.s32.totalorder %s13, 13
      %p51 = por %p49, %p50
      %p52 = scmp.ne.s32.totalorder %s44, %s47
      %p53 = scmp.eq.s32.totalorder %s13, 0
      %p54 = por %p52, %p53
      %p55 = scmp.ne.s32.totalorder %s44, %s47
      %p56 = scmp.eq.s32.totalorder %s18, 13
      %p57 = por %p55, %p56
      %p58 = scmp.ne.s32.totalorder %s47, %s48
      %p59 = scmp.eq.s32.totalorder %s18, 0
      %p60 = por %p58, %p59
      %p61 = scmp.ne.s32.totalorder %s47, %s48
      %p62 = scmp.eq.s32.totalorder %s19, 13
      %p63 = por %p61, %p62
      %p65 = scmp.ne.s32.totalorder %s48, %s64
      %p66 = scmp.eq.s32.totalorder %s19, 0
      %p67 = por %p65, %p66
      %s68 = ssub.s32 %s13, %s20
      %p69 = scmp.eq.s32.totalorder %s68, 0
      %s71 = sadd.s32 %s70, 1
      %s72 = scalar_select %p69, %s70, %s71
      %p75 = pneg %p69
      %p76 = scmp.eq.s32.totalorder %s13, 13
      %p77 = por %p75, %p76
      %p78 = scmp.ne.s32.totalorder %s70, %s73
      %p79 = scmp.eq.s32.totalorder %s13, 0
      %p80 = por %p78, %p79
      %p81 = scmp.ne.s32.totalorder %s70, %s73
      %p82 = scmp.eq.s32.totalorder %s18, 13
      %p83 = por %p81, %p82
      %p84 = scmp.ne.s32.totalorder %s73, %s74
      %p85 = scmp.eq.s32.totalorder %s18, 0
      %p86 = por %p84, %p85
      %p87 = scmp.ne.s32.totalorder %s73, %s74
      %p88 = scmp.eq.s32.totalorder %s19, 13
      %p89 = por %p87, %p88
      %p91 = scmp.ne.s32.totalorder %s74, %s90
      %p92 = scmp.eq.s32.totalorder %s19, 0
      %p93 = por %p91, %p92
      %s94 = ssub.s32 %s13, %s20
      %p95 = scmp.eq.s32.totalorder %s94, 0
      %s97 = sadd.s32 %s96, 1
      %s98 = scalar_select %p95, %s96, %s97
      %p101 = pneg %p95
      %p102 = scmp.eq.s32.totalorder %s13, 13
      %p103 = por %p101, %p102
      %p104 = scmp.ne.s32.totalorder %s96, %s99
      %p105 = scmp.eq.s32.totalorder %s13, 0
      %p106 = por %p104, %p105
      %p107 = scmp.ne.s32.totalorder %s96, %s99
      %p108 = scmp.eq.s32.totalorder %s18, 13
      %p109 = por %p107, %p108
      %p110 = scmp.ne.s32.totalorder %s99, %s100
      %p111 = scmp.eq.s32.totalorder %s18, 0
      %p112 = por %p110, %p111
      %p113 = scmp.ne.s32.totalorder %s99, %s100
      %p114 = scmp.eq.s32.totalorder %s19, 13
      %p115 = por %p113, %p114
      %p117 = scmp.ne.s32.totalorder %s100, %s116
      %p118 = scmp.eq.s32.totalorder %s19, 0
      %p119 = por %p117, %p118
      %s120 = ssub.s32 %s13, %s20
      %p121 = scmp.eq.s32.totalorder %s120, 0
      %s123 = sadd.s32 %s122, 1
      %s124 = scalar_select %p121, %s122, %s123
      %p127 = pneg %p121
      %p128 = scmp.eq.s32.totalorder %s13, 13
      %p129 = por %p127, %p128
      %p130 = scmp.ne.s32.totalorder %s122, %s125
      %p131 = scmp.eq.s32.totalorder %s13, 0
      %p132 = por %p130, %p131
      %p133 = scmp.ne.s32.totalorder %s122, %s125
      %p134 = scmp.eq.s32.totalorder %s18, 13
      %p135 = por %p133, %p134
      %p136 = scmp.ne.s32.totalorder %s125, %s126
      %p137 = scmp.eq.s32.totalorder %s18, 0
      %p138 = por %p136, %p137
      %p139 = scmp.ne.s32.totalorder %s125, %s126
      %p140 = scmp.eq.s32.totalorder %s19, 13
      %p141 = por %p139, %p140
      %p143 = scmp.ne.s32.totalorder %s126, %s142
      %p144 = scmp.eq.s32.totalorder %s19, 0
      %p145 = por %p143, %p144
      %s147 = sadd.s32 %s146, 1
      %p150 = scmp.eq.s32.totalorder %s13, 13
      %p151 = scmp.ne.s32.totalorder %s146, %s148
      %p152 = scmp.eq.s32.totalorder %s13, 0
      %p153 = por %p151, %p152
      %p154 = scmp.ne.s32.totalorder %s146, %s148
      %p155 = scmp.eq.s32.totalorder %s18, 13
      %p156 = por %p154, %p155
      %p157 = scmp.ne.s32.totalorder %s148, %s149
      %p158 = scmp.eq.s32.totalorder %s18, 0
      %p159 = por %p157, %p158
      %p160 = scmp.ne.s32.totalorder %s148, %s149
      %p161 = scmp.eq.s32.totalorder %s19, 13
      %p162 = por %p160, %p161
      %p164 = scmp.ne.s32.totalorder %s149, %s163
      %p165 = scmp.eq.s32.totalorder %s19, 0
      %p166 = por %p164, %p165
      %s168 = sadd.s32 %s167, 1
      %p171 = scmp.eq.s32.totalorder %s13, 13
      %p172 = scmp.ne.s32.totalorder %s167, %s169
      %p173 = scmp.eq.s32.totalorder %s13, 0
      %p174 = por %p172, %p173
      %p175 = scmp.ne.s32.totalorder %s167, %s169
      %p176 = scmp.eq.s32.totalorder %s18, 13
      %p177 = por %p175, %p176
      %p178 = scmp.ne.s32.totalorder %s169, %s170
      %p179 = scmp.eq.s32.totalorder %s18, 0
      %p180 = por %p178, %p179
      %p181 = scmp.ne.s32.totalorder %s169, %s170
      %p182 = scmp.eq.s32.totalorder %s19, 13
      %p183 = por %p181, %p182
      %p185 = scmp.ne.s32.totalorder %s170, %s184
      %p186 = scmp.eq.s32.totalorder %s19, 0
      %p187 = por %p185, %p186
      %p188 = scmp.le.s32.totalorder 1, %s13
      %p189 = scmp.lt.s32.totalorder %s13, 15
      %p190 = pnand %p188, %p189
      %p191 = pneg %p190
      // Predicated region
      $region9: #{_fused_forward.1} parent=5 // pred_check
        _
      $region10: #{_fused_forward.1} parent=5 // pred_check_branch
        %193 = sbr.rel (%p190) target = $region12
      $region11: #{_fused_forward.1} parent=5 // pred_region
        %s194 = ssub.s32 %s13, 1
        // Predicated region
        $region13: #{_fused_forward.1} parent=11 // pred_check
          %p195 = pneg %p34
        $region14: #{_fused_forward.1} parent=11 // pred_check_branch
          %197 = sbr.rel (%p195) target = $region16
        $region15: #{_fused_forward.1} parent=11 // pred_region
          _
        $region16: #{_fused_forward.1} parent=11 // pred_fallthru
          _
        // Predicated region
        $region17: #{_fused_forward.1} parent=11 // pred_check
          %p198 = pneg %p159
        $region18: #{_fused_forward.1} parent=11 // pred_check_branch
          %200 = sbr.rel (%p198) target = $region20
        $region19: #{_fused_forward.1} parent=11 // pred_region
          _
        $region20: #{_fused_forward.1} parent=11 // pred_fallthru
          _
      $region12: #{_fused_forward.1} parent=5 // pred_fallthru
        _
      %p201 = scmp.lt.s32.totalorder %s13, 14
      // Predicated region
      $region21: #{_fused_forward.1} parent=5 // pred_check
        %p202 = pneg %p201
      $region22: #{_fused_forward.1} parent=5 // pred_check_branch
        %204 = sbr.rel (%p202) target = $region24
      $region23: #{_fused_forward.1} parent=5 // pred_region
        // Predicated region
        $region25: #{_fused_forward.1} parent=23 // pred_check
          %p205 = pneg %p54
        $region26: #{_fused_forward.1} parent=23 // pred_check_branch
          %207 = sbr.rel (%p205) target = $region28
        $region27: #{_fused_forward.1} parent=23 // pred_region
          %p208 = scmp.lt.s32.totalorder %s13, 13
          %s209 = scalar_select %p208, %s13, 13
          %s210 = smul.addr %s209, 4
          %s211 = smul.addr %s210, 8
          %s212 = scalar_lea.vmem %s1, %s211
        $region28: #{_fused_forward.1} parent=23 // pred_fallthru
          _
        // Predicated region
        $region29: #{_fused_forward.1} parent=23 // pred_check
          %p213 = pneg %p80
        $region30: #{_fused_forward.1} parent=23 // pred_check_branch
          %215 = sbr.rel (%p213) target = $region32
        $region31: #{_fused_forward.1} parent=23 // pred_region
          %p216 = scmp.lt.s32.totalorder %s13, 13
          %s217 = scalar_select %p216, %s13, 13
          %s218 = smul.addr %s217, 4
          %s219 = smul.addr %s218, 8
          %s220 = scalar_lea.vmem %s2, %s219
        $region32: #{_fused_forward.1} parent=23 // pred_fallthru
          _
        // Predicated region
        $region33: #{_fused_forward.1} parent=23 // pred_check
          %p221 = pneg %p106
        $region34: #{_fused_forward.1} parent=23 // pred_check_branch
          %223 = sbr.rel (%p221) target = $region36
        $region35: #{_fused_forward.1} parent=23 // pred_region
          %p224 = scmp.lt.s32.totalorder %s13, 13
          %s225 = scalar_select %p224, %s13, 13
          %s226 = smul.addr %s225, 4
          %s227 = scalar_lea.vmem %s3, %s226
        $region36: #{_fused_forward.1} parent=23 // pred_fallthru
          _
        // Predicated region
        $region37: #{_fused_forward.1} parent=23 // pred_check
          %p228 = pneg %p132
        $region38: #{_fused_forward.1} parent=23 // pred_check_branch
          %230 = sbr.rel (%p228) target = $region40
        $region39: #{_fused_forward.1} parent=23 // pred_region
          %p231 = scmp.lt.s32.totalorder %s13, 13
          %s232 = scalar_select %p231, %s13, 13
          %s233 = smul.addr %s232, 4
          %s234 = scalar_lea.vmem %s4, %s233
        $region40: #{_fused_forward.1} parent=23 // pred_fallthru
          _
      $region24: #{_fused_forward.1} parent=5 // pred_fallthru
        _
      %p235 = scmp.le.s32.totalorder 1, %s13
      %p236 = scmp.lt.s32.totalorder %s13, 15
      %p237 = pnand %p235, %p236
      %p238 = pneg %p237
      // Predicated region
      $region41: #{_fused_forward.1} parent=5 // pred_check
        _
      $region42: #{_fused_forward.1} parent=5 // pred_check_branch
        %240 = sbr.rel (%p237) target = $region44
      $region43: #{_fused_forward.1} parent=5 // pred_region
        %s241 = ssub.s32 %s13, 1
        %p242 = pneg %p34
        %p243 = pneg %p31
        %p244 = scmp.lt.s32.totalorder %s18, 13
        %s245 = scalar_select %p244, %s18, 13
        %s246 = smul.addr %s245, 4
        %s247 = smul.addr %s246, 8
        %s248 = scalar_lea.vmem %s1, %s247
        %p249 = pneg %p60
        %p250 = pneg %p57
        %p251 = scmp.lt.s32.totalorder %s18, 13
        %s252 = scalar_select %p251, %s18, 13
        %s253 = smul.addr %s252, 4
        %s254 = smul.addr %s253, 8
        %s255 = scalar_lea.vmem %s2, %s254
        %p256 = pneg %p86
        %p257 = pneg %p83
        %p258 = scmp.lt.s32.totalorder %s18, 13
        %s259 = scalar_select %p258, %s18, 13
        %s260 = smul.addr %s259, 4
        %s261 = scalar_lea.vmem %s3, %s260
        %p262 = pneg %p112
        %p263 = pneg %p109
        %p264 = scmp.lt.s32.totalorder %s18, 13
        %s265 = scalar_select %p264, %s18, 13
        %s266 = smul.addr %s265, 4
        %s267 = scalar_lea.vmem %s4, %s266
        %p268 = pneg %p138
        %p269 = pneg %p135
        %p270 = pneg %p159
        %p271 = pneg %p156
        %p272 = pneg %p180
        %p273 = pneg %p177
        %p274 = scmp.lt.s32.totalorder %s18, 13
        %s275 = scalar_select %p274, %s18, 13
        %s276 = smul.addr %s275, 4
        %s277 = smul.addr %s276, 8
        %s278 = scalar_lea.vmem %s1, %s277
        %p279 = scmp.lt.s32.totalorder %s18, 13
        %s280 = scalar_select %p279, %s18, 13
        %s281 = smul.addr %s280, 4
        %s282 = smul.addr %s281, 8
        %s283 = scalar_lea.vmem %s2, %s282
        %p284 = scmp.lt.s32.totalorder %s18, 13
        %s285 = scalar_select %p284, %s18, 13
        %s286 = smul.addr %s285, 4
        %s287 = scalar_lea.vmem %s3, %s286
        %p288 = scmp.lt.s32.totalorder %s18, 13
        %s289 = scalar_select %p288, %s18, 13
        %s290 = smul.addr %s289, 4
        %s291 = scalar_lea.vmem %s4, %s290
        %p292 = scmp.eq.s32.totalorder %s18, 0
        // Predicated region
        $region45: #{_fused_forward.1} parent=43 // pred_check
          %p293 = pneg %p292
        $region46: #{_fused_forward.1} parent=43 // pred_check_branch
          %295 = sbr.rel (%p293) target = $region48
        $region47: #{_fused_forward.1} parent=43 // pred_region
          %v296 = vld [vmem:[%s5] sm:$0xff]
          %v297 = vld [vmem:[%s5 + $0x8] sm:$0xff]
          %298 = vst [vmem:[#allocation2] sm:$0xff] %v296
          %299 = vst [vmem:[#allocation2 + $0x8] sm:$0xff] %v297
        $region48: #{_fused_forward.1} parent=43 // pred_fallthru
          _
        %v300 = vld [vmem:[#allocation2] sm:$0xff]
        %v301 = vld [vmem:[#allocation2 + $0x8] sm:$0xff]
        %v302 = vld [vmem:[%s0] sm:$0xff]
        %v303 = vld [vmem:[%s0 + $0x8] sm:$0xff]
        %v304 = vld [vmem:[%s0 + $0x10] sm:$0xff]
        %v305 = vld [vmem:[%s0 + $0x18] sm:$0xff]
        %v306 = vld [vmem:[%s0 + $0x20] sm:$0xff]
        %v307 = vld [vmem:[%s0 + $0x28] sm:$0xff]
        %v308 = vld [vmem:[%s0 + $0x30] sm:$0xff]
        %v309 = vld [vmem:[%s0 + $0x38] sm:$0xff]
        %v310 = vld [vmem:[%s0 + $0x40] sm:$0xff]
        %v311 = vld [vmem:[%s0 + $0x48] sm:$0xff]
        %v312 = vld [vmem:[%s0 + $0x50] sm:$0xff]
        %v313 = vld [vmem:[%s0 + $0x58] sm:$0xff]
        %v314 = vld [vmem:[%s0 + $0x60] sm:$0x1]
        %v315 = vld [vmem:[%s0 + $0x68] sm:$0x1]
        %v316 = vld [vmem:[%s0 + $0x70] sm:$0x1]
        %v317 = vld [vmem:[%s0 + $0x78] sm:$0x1]
        %v318 = vld [vmem:[%s278] sm:$0xff]
        %v319 = vld [vmem:[%s278 + $0x8] sm:$0xff]
        %v320 = vld [vmem:[%s278 + $0x10] sm:$0xff]
        %v321 = vld [vmem:[%s278 + $0x18] sm:$0x1]
        %v323 = vcombine.high %v301, %v301
        %324 = vrot.lane.b32.xlu0 %v323, 17
        %v325 = vpop.permute.xlu0 %324
        %v328 = vcombine.high %v300, %v300
        %329 = vrot.lane.b32.xlu0 %v300, 17
        %v330 = vpop.permute.xlu0 %329
        %331 = vrot.lane.b32.xlu0 %v328, 17
        %v332 = vpop.permute.xlu0 %331
        %333 = vrot.lane.b32.xlu0 %v301, 17
        %v334 = vpop.permute.xlu0 %333
        %vm335 = vcmask 138240
        %v336 = vsel %vm335, %v330, %v332
        %v337 = vsel %vm335, %v332, %v334
        %v338 = vsel %vm335, %v334, %v325
        %v343 = vsel %vm335, %v325, %v330
        %v344 = vlaneseq
        %v345 = vshrl.u32 %v344, 7
        %v346 = vsub.s32 6, %v345
        %v347 = vrot.slane %v302, %v346
        %v348 = vlaneseq
        %v349 = vshrl.u32 %v348, 7
        %v350 = vsub.s32 6, %v349
        %v351 = vrot.slane %v303, %v350
        %v352 = vlaneseq
        %v353 = vshrl.u32 %v352, 7
        %v354 = vsub.s32 6, %v353
        %v355 = vrot.slane %v304, %v354
        %v356 = vlaneseq
        %v357 = vshrl.u32 %v356, 7
        %v358 = vsub.s32 6, %v357
        %v359 = vrot.slane %v305, %v358
        %v360 = vmul.f32 %v343, %v347
        %v361 = vmul.f32 %v336, %v351
        %v362 = vmul.f32 %v337, %v355
        %v363 = vmul.f32 %v338, %v359
        %364 = vrot.lane.b32.xlu0 %v323, 16
        %v365 = vpop.permute.xlu0 %364
        %367 = vrot.lane.b32.xlu0 %v300, 16
        %v368 = vpop.permute.xlu0 %367
        %369 = vrot.lane.b32.xlu0 %v328, 16
        %v370 = vpop.permute.xlu0 %369
        %371 = vrot.lane.b32.xlu0 %v301, 16
        %v372 = vpop.permute.xlu0 %371
        %vm373 = vcmask 130048
        %v374 = vsel %vm373, %v368, %v370
        %v375 = vsel %vm373, %v370, %v372
        %v376 = vsel %vm373, %v372, %v365
        %v381 = vsel %vm373, %v365, %v368
        %v382 = vlaneseq
        %v383 = vshrl.u32 %v382, 7
        %v384 = vsub.s32 7, %v383
        %v385 = vrot.slane %v302, %v384
        %v386 = vlaneseq
        %v387 = vshrl.u32 %v386, 7
        %v388 = vsub.s32 7, %v387
        %v389 = vrot.slane %v303, %v388
        %v390 = vlaneseq
        %v391 = vshrl.u32 %v390, 7
        %v392 = vsub.s32 7, %v391
        %v393 = vrot.slane %v304, %v392
        %v394 = vlaneseq
        %v395 = vshrl.u32 %v394, 7
        %v396 = vsub.s32 7, %v395
        %v397 = vrot.slane %v305, %v396
        %v398 = vmul.f32 %v381, %v385
        %v399 = vmul.f32 %v374, %v389
        %v400 = vmul.f32 %v375, %v393
        %v401 = vmul.f32 %v376, %v397
        %406 = vrot.lane.b32.xlu0 %v318, 124
        %v407 = vpop.permute.xlu0 %406
        %408 = vrot.lane.b32.xlu0 %v319, 124
        %v409 = vpop.permute.xlu0 %408
        %410 = vrot.lane.b32.xlu0 %v320, 124
        %v411 = vpop.permute.xlu0 %410
        %412 = vrot.lane.b32.xlu0 %v321, 124
        %v413 = vpop.permute.xlu0 %412
        %vm414 = vcmask 31744
        %v415 = vsel %vm414, %v407, 0
        %v417 = vsel %vm414, %v409, 0
        %v419 = vsel %vm414, %v411, 0
        %v421 = vsel %vm414, %v413, 0
        %vm423 = vcmask 1043456
        %v425 = vsel %vm423, %v398, 0
        %v428 = vsel %vm423, %v399, 0
        %v431 = vsel %vm423, %v400, 0
        %v434 = vsel %vm423, %v401, 0
        %436 = vmatprep.subr.mxu0 0.0
        %437 = vmatpush1.msra.mxu0 0.0
        %438 = vmatprep.subr.mxu0 0.0
        %439 = vmatpush1.msra.mxu0 0.0
        %440 = vmatprep.subr.mxu0 0.0
        %441 = vmatpush1.msra.mxu0 0.0
        %442 = vmatprep.subr.mxu0 0.0
        %443 = vmatpush1.msra.mxu0 0.0
        %444 = vmatprep.subr.mxu0 0.0
        %445 = vmatpush1.msra.mxu0 0.0
        %446 = vmatprep.subr.mxu0 0.0
        %447 = vmatpush1.msra.mxu0 0.0
        %448 = vmatprep.subr.mxu0 0.0
        %449 = vmatpush1.msra.mxu0 0.0
        %450 = vmatprep.subr.mxu0 0.0
        %451 = vmatpush1.msra.mxu0 0.0
        %452 = vmatprep.subr.mxu0 0.0
        %453 = vmatpush1.msra.mxu0 0.0
        %454 = vmatprep.subr.mxu0 0.0
        %455 = vmatpush1.msra.mxu0 0.0
        %456 = vmatprep.subr.mxu0 0.0
        %457 = vmatpush1.msra.mxu0 0.0
        %458 = vmatprep.subr.mxu0 0.0
        %459 = vmatpush1.msra.mxu0 0.0
        %460 = vmatprep.subr.mxu0 0.0
        %461 = vmatpush1.msra.mxu0 0.0
        %462 = vmatprep.subr.mxu0 0.0
        %463 = vmatpush1.msra.mxu0 0.0
        %464 = vmatprep.subr.mxu0 0.0
        %465 = vmatpush1.msra.mxu0 0.0
        %466 = vmatprep.subr.mxu0 %v428
        %467 = vmatpush1.msra.mxu0 %v425
        %468 = vmatprep.subr.mxu0 0.0
        %469 = vmatpush2.msra.mxu0 0.0
        %470 = vmatprep.subr.mxu0 0.0
        %471 = vmatpush2.msra.mxu0 0.0
        %472 = vmatprep.subr.mxu0 0.0
        %473 = vmatpush2.msra.mxu0 0.0
        %474 = vmatprep.subr.mxu0 0.0
        %475 = vmatpush2.msra.mxu0 0.0
        %476 = vmatprep.subr.mxu0 0.0
        %477 = vmatpush2.msra.mxu0 0.0
        %478 = vmatprep.subr.mxu0 0.0
        %479 = vmatpush2.msra.mxu0 0.0
        %480 = vmatprep.subr.mxu0 0.0
        %481 = vmatpush2.msra.mxu0 0.0
        %482 = vmatprep.subr.mxu0 0.0
        %483 = vmatpush2.msra.mxu0 0.0
        %484 = vmatprep.subr.mxu0 0.0
        %485 = vmatpush2.msra.mxu0 0.0
        %486 = vmatprep.subr.mxu0 0.0
        %487 = vmatpush2.msra.mxu0 0.0
        %488 = vmatprep.subr.mxu0 0.0
        %489 = vmatpush2.msra.mxu0 0.0
        %490 = vmatprep.subr.mxu0 0.0
        %491 = vmatpush2.msra.mxu0 0.0
        %492 = vmatprep.subr.mxu0 0.0
        %493 = vmatpush2.msra.mxu0 0.0
        %494 = vmatprep.subr.mxu0 0.0
        %495 = vmatpush2.msra.mxu0 0.0
        %496 = vmatprep.subr.mxu0 0.0
        %497 = vmatpush2.msra.mxu0 0.0
        %498 = vmatprep.subr.mxu0 0.0
        %499 = vmatpush2.msra.mxu0 0.0
        %500 = vmatprep.mubr.f32.mxu0 0.0
        %501 = vmatmul.mubr.f32.gmra.mxu0 %v415
        %v502 = vpop.f32.mrf.mxu0
        %v503 = vadd.f32 0.0, %v502
        %v504 = vpop.f32.mrf.mxu0
        %v505 = vadd.f32 0.0, %v504
        %506 = vmatprep.mubr.f32.mxu0 0.0
        %507 = vmatmul.mubr.f32.gmra.mxu0 %v417
        %v508 = vpop.f32.mrf.mxu0
        %v509 = vadd.f32 0.0, %v508
        %v510 = vpop.f32.mrf.mxu0
        %v511 = vadd.f32 0.0, %v510
        %512 = vmatprep.mubr.f32.mxu0 0.0
        %513 = vmatmul.mubr.f32.gmra.mxu0 %v419
        %v514 = vpop.f32.mrf.mxu0
        %v515 = vadd.f32 0.0, %v514
        %v516 = vpop.f32.mrf.mxu0
        %v517 = vadd.f32 0.0, %v516
        %518 = vmatprep.mubr.f32.mxu0 0.0
        %519 = vmatmul.mubr.f32.gmra.mxu0 %v421
        %v520 = vpop.f32.mrf.mxu0
        %v521 = vadd.f32 0.0, %v520
        %v522 = vpop.f32.mrf.mxu0
        %v523 = vadd.f32 0.0, %v522
        %524 = vdwg.mxu0
        %525 = vmatprep.subr.mxu0 0.0
        %526 = vmatpush1.msra.mxu0 0.0
        %527 = vmatprep.subr.mxu0 0.0
        %528 = vmatpush1.msra.mxu0 0.0
        %529 = vmatprep.subr.mxu0 0.0
        %530 = vmatpush1.msra.mxu0 0.0
        %531 = vmatprep.subr.mxu0 0.0
        %532 = vmatpush1.msra.mxu0 0.0
        %533 = vmatprep.subr.mxu0 0.0
        %534 = vmatpush1.msra.mxu0 0.0
        %535 = vmatprep.subr.mxu0 0.0
        %536 = vmatpush1.msra.mxu0 0.0
        %537 = vmatprep.subr.mxu0 0.0
        %538 = vmatpush1.msra.mxu0 0.0
        %539 = vmatprep.subr.mxu0 0.0
        %540 = vmatpush1.msra.mxu0 0.0
        %541 = vmatprep.subr.mxu0 0.0
        %542 = vmatpush1.msra.mxu0 0.0
        %543 = vmatprep.subr.mxu0 0.0
        %544 = vmatpush1.msra.mxu0 0.0
        %545 = vmatprep.subr.mxu0 0.0
        %546 = vmatpush1.msra.mxu0 0.0
        %547 = vmatprep.subr.mxu0 0.0
        %548 = vmatpush1.msra.mxu0 0.0
        %549 = vmatprep.subr.mxu0 0.0
        %550 = vmatpush1.msra.mxu0 0.0
        %551 = vmatprep.subr.mxu0 0.0
        %552 = vmatpush1.msra.mxu0 0.0
        %553 = vmatprep.subr.mxu0 0.0
        %554 = vmatpush1.msra.mxu0 0.0
        %555 = vmatprep.subr.mxu0 %v434
        %556 = vmatpush1.msra.mxu0 %v431
        %557 = vmatprep.subr.mxu0 0.0
        %558 = vmatpush2.msra.mxu0 0.0
        %559 = vmatprep.subr.mxu0 0.0
        %560 = vmatpush2.msra.mxu0 0.0
        %561 = vmatprep.subr.mxu0 0.0
        %562 = vmatpush2.msra.mxu0 0.0
        %563 = vmatprep.subr.mxu0 0.0
        %564 = vmatpush2.msra.mxu0 0.0
        %565 = vmatprep.subr.mxu0 0.0
        %566 = vmatpush2.msra.mxu0 0.0
        %567 = vmatprep.subr.mxu0 0.0
        %568 = vmatpush2.msra.mxu0 0.0
        %569 = vmatprep.subr.mxu0 0.0
        %570 = vmatpush2.msra.mxu0 0.0
        %571 = vmatprep.subr.mxu0 0.0
        %572 = vmatpush2.msra.mxu0 0.0
        %573 = vmatprep.subr.mxu0 0.0
        %574 = vmatpush2.msra.mxu0 0.0
        %575 = vmatprep.subr.mxu0 0.0
        %576 = vmatpush2.msra.mxu0 0.0
        %577 = vmatprep.subr.mxu0 0.0
        %578 = vmatpush2.msra.mxu0 0.0
        %579 = vmatprep.subr.mxu0 0.0
        %580 = vmatpush2.msra.mxu0 0.0
        %581 = vmatprep.subr.mxu0 0.0
        %582 = vmatpush2.msra.mxu0 0.0
        %583 = vmatprep.subr.mxu0 0.0
        %584 = vmatpush2.msra.mxu0 0.0
        %585 = vmatprep.subr.mxu0 0.0
        %586 = vmatpush2.msra.mxu0 0.0
        %587 = vmatprep.subr.mxu0 0.0
        %588 = vmatpush2.msra.mxu0 0.0
        %589 = vmatprep.mubr.f32.mxu0 0.0
        %590 = vmatmul.mubr.f32.gmra.mxu0 %v415
        %v591 = vpop.f32.mrf.mxu0
        %v592 = vadd.f32 0.0, %v591
        %v593 = vpop.f32.mrf.mxu0
        %v594 = vadd.f32 0.0, %v593
        %595 = vmatprep.mubr.f32.mxu0 0.0
        %596 = vmatmul.mubr.f32.gmra.mxu0 %v417
        %v597 = vpop.f32.mrf.mxu0
        %v598 = vadd.f32 0.0, %v597
        %v599 = vpop.f32.mrf.mxu0
        %v600 = vadd.f32 0.0, %v599
        %601 = vmatprep.mubr.f32.mxu0 0.0
        %602 = vmatmul.mubr.f32.gmra.mxu0 %v419
        %v603 = vpop.f32.mrf.mxu0
        %v604 = vadd.f32 0.0, %v603
        %v605 = vpop.f32.mrf.mxu0
        %v606 = vadd.f32 0.0, %v605
        %607 = vmatprep.mubr.f32.mxu0 0.0
        %608 = vmatmul.mubr.f32.gmra.mxu0 %v421
        %v609 = vpop.f32.mrf.mxu0
        %v610 = vadd.f32 0.0, %v609
        %v611 = vpop.f32.mrf.mxu0
        %v612 = vadd.f32 0.0, %v611
        %613 = vdwg.mxu0
        %v614 = vsel %vm414, %v318, 0
        %v616 = vsel %vm414, %v319, 0
        %v618 = vsel %vm414, %v320, 0
        %v620 = vsel %vm414, %v321, 0
        %v623 = vsel %vm423, %v360, 0
        %v626 = vsel %vm423, %v361, 0
        %v629 = vsel %vm423, %v362, 0
        %v632 = vsel %vm423, %v363, 0
        %634 = vmatprep.subr.mxu0 0.0
        %635 = vmatpush1.msra.mxu0 0.0
        %636 = vmatprep.subr.mxu0 0.0
        %637 = vmatpush1.msra.mxu0 0.0
        %638 = vmatprep.subr.mxu0 0.0
        %639 = vmatpush1.msra.mxu0 0.0
        %640 = vmatprep.subr.mxu0 0.0
        %641 = vmatpush1.msra.mxu0 0.0
        %642 = vmatprep.subr.mxu0 0.0
        %643 = vmatpush1.msra.mxu0 0.0
        %644 = vmatprep.subr.mxu0 0.0
        %645 = vmatpush1.msra.mxu0 0.0
        %646 = vmatprep.subr.mxu0 0.0
        %647 = vmatpush1.msra.mxu0 0.0
        %648 = vmatprep.subr.mxu0 0.0
        %649 = vmatpush1.msra.mxu0 0.0
        %650 = vmatprep.subr.mxu0 0.0
        %651 = vmatpush1.msra.mxu0 0.0
        %652 = vmatprep.subr.mxu0 0.0
        %653 = vmatpush1.msra.mxu0 0.0
        %654 = vmatprep.subr.mxu0 0.0
        %655 = vmatpush1.msra.mxu0 0.0
        %656 = vmatprep.subr.mxu0 0.0
        %657 = vmatpush1.msra.mxu0 0.0
        %658 = vmatprep.subr.mxu0 0.0
        %659 = vmatpush1.msra.mxu0 0.0
        %660 = vmatprep.subr.mxu0 0.0
        %661 = vmatpush1.msra.mxu0 0.0
        %662 = vmatprep.subr.mxu0 0.0
        %663 = vmatpush1.msra.mxu0 0.0
        %664 = vmatprep.subr.mxu0 %v626
        %665 = vmatpush1.msra.mxu0 %v623
        %666 = vmatprep.subr.mxu0 0.0
        %667 = vmatpush2.msra.mxu0 0.0
        %668 = vmatprep.subr.mxu0 0.0
        %669 = vmatpush2.msra.mxu0 0.0
        %670 = vmatprep.subr.mxu0 0.0
        %671 = vmatpush2.msra.mxu0 0.0
        %672 = vmatprep.subr.mxu0 0.0
        %673 = vmatpush2.msra.mxu0 0.0
        %674 = vmatprep.subr.mxu0 0.0
        %675 = vmatpush2.msra.mxu0 0.0
        %676 = vmatprep.subr.mxu0 0.0
        %677 = vmatpush2.msra.mxu0 0.0
        %678 = vmatprep.subr.mxu0 0.0
        %679 = vmatpush2.msra.mxu0 0.0
        %680 = vmatprep.subr.mxu0 0.0
        %681 = vmatpush2.msra.mxu0 0.0
        %682 = vmatprep.subr.mxu0 0.0
        %683 = vmatpush2.msra.mxu0 0.0
        %684 = vmatprep.subr.mxu0 0.0
        %685 = vmatpush2.msra.mxu0 0.0
        %686 = vmatprep.subr.mxu0 0.0
        %687 = vmatpush2.msra.mxu0 0.0
        %688 = vmatprep.subr.mxu0 0.0
        %689 = vmatpush2.msra.mxu0 0.0
        %690 = vmatprep.subr.mxu0 0.0
        %691 = vmatpush2.msra.mxu0 0.0
        %692 = vmatprep.subr.mxu0 0.0
        %693 = vmatpush2.msra.mxu0 0.0
        %694 = vmatprep.subr.mxu0 0.0
        %695 = vmatpush2.msra.mxu0 0.0
        %696 = vmatprep.subr.mxu0 0.0
        %697 = vmatpush2.msra.mxu0 0.0
        %698 = vmatprep.mubr.f32.mxu0 0.0
        %699 = vmatmul.mubr.f32.gmra.mxu0 %v614
        %v700 = vpop.f32.mrf.mxu0
        %v701 = vadd.f32 %v503, %v700
        %v702 = vpop.f32.mrf.mxu0
        %v703 = vadd.f32 %v505, %v702
        %704 = vmatprep.mubr.f32.mxu0 0.0
        %705 = vmatmul.mubr.f32.gmra.mxu0 %v616
        %v706 = vpop.f32.mrf.mxu0
        %v707 = vadd.f32 %v509, %v706
        %v708 = vpop.f32.mrf.mxu0
        %v709 = vadd.f32 %v511, %v708
        %710 = vmatprep.mubr.f32.mxu0 0.0
        %711 = vmatmul.mubr.f32.gmra.mxu0 %v618
        %v712 = vpop.f32.mrf.mxu0
        %v713 = vadd.f32 %v515, %v712
        %v714 = vpop.f32.mrf.mxu0
        %v715 = vadd.f32 %v517, %v714
        %716 = vmatprep.mubr.f32.mxu0 0.0
        %717 = vmatmul.mubr.f32.gmra.mxu0 %v620
        %v718 = vpop.f32.mrf.mxu0
        %v719 = vadd.f32 %v521, %v718
        %v720 = vpop.f32.mrf.mxu0
        %v721 = vadd.f32 %v523, %v720
        %722 = vdwg.mxu0
        %723 = vmatprep.subr.mxu0 0.0
        %724 = vmatpush1.msra.mxu0 0.0
        %725 = vmatprep.subr.mxu0 0.0
        %726 = vmatpush1.msra.mxu0 0.0
        %727 = vmatprep.subr.mxu0 0.0
        %728 = vmatpush1.msra.mxu0 0.0
        %729 = vmatprep.subr.mxu0 0.0
        %730 = vmatpush1.msra.mxu0 0.0
        %731 = vmatprep.subr.mxu0 0.0
        %732 = vmatpush1.msra.mxu0 0.0
        %733 = vmatprep.subr.mxu0 0.0
        %734 = vmatpush1.msra.mxu0 0.0
        %735 = vmatprep.subr.mxu0 0.0
        %736 = vmatpush1.msra.mxu0 0.0
        %737 = vmatprep.subr.mxu0 0.0
        %738 = vmatpush1.msra.mxu0 0.0
        %739 = vmatprep.subr.mxu0 0.0
        %740 = vmatpush1.msra.mxu0 0.0
        %741 = vmatprep.subr.mxu0 0.0
        %742 = vmatpush1.msra.mxu0 0.0
        %743 = vmatprep.subr.mxu0 0.0
        %744 = vmatpush1.msra.mxu0 0.0
        %745 = vmatprep.subr.mxu0 0.0
        %746 = vmatpush1.msra.mxu0 0.0
        %747 = vmatprep.subr.mxu0 0.0
        %748 = vmatpush1.msra.mxu0 0.0
        %749 = vmatprep.subr.mxu0 0.0
        %750 = vmatpush1.msra.mxu0 0.0
        %751 = vmatprep.subr.mxu0 0.0
        %752 = vmatpush1.msra.mxu0 0.0
        %753 = vmatprep.subr.mxu0 %v632
        %754 = vmatpush1.msra.mxu0 %v629
        %755 = vmatprep.subr.mxu0 0.0
        %756 = vmatpush2.msra.mxu0 0.0
        %757 = vmatprep.subr.mxu0 0.0
        %758 = vmatpush2.msra.mxu0 0.0
        %759 = vmatprep.subr.mxu0 0.0
        %760 = vmatpush2.msra.mxu0 0.0
        %761 = vmatprep.subr.mxu0 0.0
        %762 = vmatpush2.msra.mxu0 0.0
        %763 = vmatprep.subr.mxu0 0.0
        %764 = vmatpush2.msra.mxu0 0.0
        %765 = vmatprep.subr.mxu0 0.0
        %766 = vmatpush2.msra.mxu0 0.0
        %767 = vmatprep.subr.mxu0 0.0
        %768 = vmatpush2.msra.mxu0 0.0
        %769 = vmatprep.subr.mxu0 0.0
        %770 = vmatpush2.msra.mxu0 0.0
        %771 = vmatprep.subr.mxu0 0.0
        %772 = vmatpush2.msra.mxu0 0.0
        %773 = vmatprep.subr.mxu0 0.0
        %774 = vmatpush2.msra.mxu0 0.0
        %775 = vmatprep.subr.mxu0 0.0
        %776 = vmatpush2.msra.mxu0 0.0
        %777 = vmatprep.subr.mxu0 0.0
        %778 = vmatpush2.msra.mxu0 0.0
        %779 = vmatprep.subr.mxu0 0.0
        %780 = vmatpush2.msra.mxu0 0.0
        %781 = vmatprep.subr.mxu0 0.0
        %782 = vmatpush2.msra.mxu0 0.0
        %783 = vmatprep.subr.mxu0 0.0
        %784 = vmatpush2.msra.mxu0 0.0
        %785 = vmatprep.subr.mxu0 0.0
        %786 = vmatpush2.msra.mxu0 0.0
        %787 = vmatprep.mubr.f32.mxu0 0.0
        %788 = vmatmul.mubr.f32.gmra.mxu0 %v614
        %v789 = vpop.f32.mrf.mxu0
        %v790 = vadd.f32 %v592, %v789
        %v791 = vpop.f32.mrf.mxu0
        %v792 = vadd.f32 %v594, %v791
        %793 = vmatprep.mubr.f32.mxu0 0.0
        %794 = vmatmul.mubr.f32.gmra.mxu0 %v616
        %v795 = vpop.f32.mrf.mxu0
        %v796 = vadd.f32 %v598, %v795
        %v797 = vpop.f32.mrf.mxu0
        %v798 = vadd.f32 %v600, %v797
        %799 = vmatprep.mubr.f32.mxu0 0.0
        %800 = vmatmul.mubr.f32.gmra.mxu0 %v618
        %v801 = vpop.f32.mrf.mxu0
        %v802 = vadd.f32 %v604, %v801
        %v803 = vpop.f32.mrf.mxu0
        %v804 = vadd.f32 %v606, %v803
        %805 = vmatprep.mubr.f32.mxu0 0.0
        %806 = vmatmul.mubr.f32.gmra.mxu0 %v620
        %v807 = vpop.f32.mrf.mxu0
        %v808 = vadd.f32 %v610, %v807
        %v809 = vpop.f32.mrf.mxu0
        %v810 = vadd.f32 %v612, %v809
        %811 = vdwg.mxu0
        %812 = vrot.lane.b32.xlu0 %v323, 15
        %v813 = vpop.permute.xlu0 %812
        %815 = vrot.lane.b32.xlu0 %v300, 15
        %v816 = vpop.permute.xlu0 %815
        %817 = vrot.lane.b32.xlu0 %v328, 15
        %v818 = vpop.permute.xlu0 %817
        %819 = vrot.lane.b32.xlu0 %v301, 15
        %v820 = vpop.permute.xlu0 %819
        %vm821 = vcmask 121856
        %v822 = vsel %vm821, %v816, %v818
        %v823 = vsel %vm821, %v818, %v820
        %v824 = vsel %vm821, %v820, %v813
        %v829 = vsel %vm821, %v813, %v816
        %v830 = vlaneseq
        %v831 = vshrl.u32 %v830, 7
        %v832 = vsub.s32 0, %v831
        %v833 = vrot.slane %v306, %v832
        %v834 = vlaneseq
        %v835 = vshrl.u32 %v834, 7
        %v836 = vsub.s32 0, %v835
        %v837 = vrot.slane %v307, %v836
        %v838 = vlaneseq
        %v839 = vshrl.u32 %v838, 7
        %v840 = vsub.s32 0, %v839
        %v841 = vrot.slane %v308, %v840
        %v842 = vlaneseq
        %v843 = vshrl.u32 %v842, 7
        %v844 = vsub.s32 0, %v843
        %v845 = vrot.slane %v309, %v844
        %v846 = vmul.f32 %v829, %v833
        %v847 = vmul.f32 %v822, %v837
        %v848 = vmul.f32 %v823, %v841
        %v849 = vmul.f32 %v824, %v845
        %850 = vrot.lane.b32.xlu0 %v318, 120
        %v851 = vpop.permute.xlu0 %850
        %852 = vrot.lane.b32.xlu0 %v319, 120
        %v853 = vpop.permute.xlu0 %852
        %854 = vrot.lane.b32.xlu0 %v320, 120
        %v855 = vpop.permute.xlu0 %854
        %856 = vrot.lane.b32.xlu0 %v321, 120
        %v857 = vpop.permute.xlu0 %856
        %v858 = vsel %vm414, %v851, 0
        %v860 = vsel %vm414, %v853, 0
        %v862 = vsel %vm414, %v855, 0
        %v864 = vsel %vm414, %v857, 0
        %v867 = vsel %vm423, %v846, 0
        %v870 = vsel %vm423, %v847, 0
        %v873 = vsel %vm423, %v848, 0
        %v876 = vsel %vm423, %v849, 0
        %878 = vmatprep.subr.mxu0 0.0
        %879 = vmatpush1.msra.mxu0 0.0
        %880 = vmatprep.subr.mxu0 0.0
        %881 = vmatpush1.msra.mxu0 0.0
        %882 = vmatprep.subr.mxu0 0.0
        %883 = vmatpush1.msra.mxu0 0.0
        %884 = vmatprep.subr.mxu0 0.0
        %885 = vmatpush1.msra.mxu0 0.0
        %886 = vmatprep.subr.mxu0 0.0
        %887 = vmatpush1.msra.mxu0 0.0
        %888 = vmatprep.subr.mxu0 0.0
        %889 = vmatpush1.msra.mxu0 0.0
        %890 = vmatprep.subr.mxu0 0.0
        %891 = vmatpush1.msra.mxu0 0.0
        %892 = vmatprep.subr.mxu0 0.0
        %893 = vmatpush1.msra.mxu0 0.0
        %894 = vmatprep.subr.mxu0 0.0
        %895 = vmatpush1.msra.mxu0 0.0
        %896 = vmatprep.subr.mxu0 0.0
        %897 = vmatpush1.msra.mxu0 0.0
        %898 = vmatprep.subr.mxu0 0.0
        %899 = vmatpush1.msra.mxu0 0.0
        %900 = vmatprep.subr.mxu0 0.0
        %901 = vmatpush1.msra.mxu0 0.0
        %902 = vmatprep.subr.mxu0 0.0
        %903 = vmatpush1.msra.mxu0 0.0
        %904 = vmatprep.subr.mxu0 0.0
        %905 = vmatpush1.msra.mxu0 0.0
        %906 = vmatprep.subr.mxu0 0.0
        %907 = vmatpush1.msra.mxu0 0.0
        %908 = vmatprep.subr.mxu0 %v870
        %909 = vmatpush1.msra.mxu0 %v867
        %910 = vmatprep.subr.mxu0 0.0
        %911 = vmatpush2.msra.mxu0 0.0
        %912 = vmatprep.subr.mxu0 0.0
        %913 = vmatpush2.msra.mxu0 0.0
        %914 = vmatprep.subr.mxu0 0.0
        %915 = vmatpush2.msra.mxu0 0.0
        %916 = vmatprep.subr.mxu0 0.0
        %917 = vmatpush2.msra.mxu0 0.0
        %918 = vmatprep.subr.mxu0 0.0
        %919 = vmatpush2.msra.mxu0 0.0
        %920 = vmatprep.subr.mxu0 0.0
        %921 = vmatpush2.msra.mxu0 0.0
        %922 = vmatprep.subr.mxu0 0.0
        %923 = vmatpush2.msra.mxu0 0.0
        %924 = vmatprep.subr.mxu0 0.0
        %925 = vmatpush2.msra.mxu0 0.0
        %926 = vmatprep.subr.mxu0 0.0
        %927 = vmatpush2.msra.mxu0 0.0
        %928 = vmatprep.subr.mxu0 0.0
        %929 = vmatpush2.msra.mxu0 0.0
        %930 = vmatprep.subr.mxu0 0.0
        %931 = vmatpush2.msra.mxu0 0.0
        %932 = vmatprep.subr.mxu0 0.0
        %933 = vmatpush2.msra.mxu0 0.0
        %934 = vmatprep.subr.mxu0 0.0
        %935 = vmatpush2.msra.mxu0 0.0
        %936 = vmatprep.subr.mxu0 0.0
        %937 = vmatpush2.msra.mxu0 0.0
        %938 = vmatprep.subr.mxu0 0.0
        %939 = vmatpush2.msra.mxu0 0.0
        %940 = vmatprep.subr.mxu0 0.0
        %941 = vmatpush2.msra.mxu0 0.0
        %942 = vmatprep.mubr.f32.mxu0 0.0
        %943 = vmatmul.mubr.f32.gmra.mxu0 %v858
        %v944 = vpop.f32.mrf.mxu0
        %v945 = vadd.f32 0.0, %v944
        %v946 = vpop.f32.mrf.mxu0
        %v947 = vadd.f32 0.0, %v946
        %948 = vmatprep.mubr.f32.mxu0 0.0
        %949 = vmatmul.mubr.f32.gmra.mxu0 %v860
        %v950 = vpop.f32.mrf.mxu0
        %v951 = vadd.f32 0.0, %v950
        %v952 = vpop.f32.mrf.mxu0
        %v953 = vadd.f32 0.0, %v952
        %954 = vmatprep.mubr.f32.mxu0 0.0
        %955 = vmatmul.mubr.f32.gmra.mxu0 %v862
        %v956 = vpop.f32.mrf.mxu0
        %v957 = vadd.f32 0.0, %v956
        %v958 = vpop.f32.mrf.mxu0
        %v959 = vadd.f32 0.0, %v958
        %960 = vmatprep.mubr.f32.mxu0 0.0
        %961 = vmatmul.mubr.f32.gmra.mxu0 %v864
        %v962 = vpop.f32.mrf.mxu0
        %v963 = vadd.f32 0.0, %v962
        %v964 = vpop.f32.mrf.mxu0
        %v965 = vadd.f32 0.0, %v964
        %966 = vdwg.mxu0
        %967 = vmatprep.subr.mxu0 0.0
        %968 = vmatpush1.msra.mxu0 0.0
        %969 = vmatprep.subr.mxu0 0.0
        %970 = vmatpush1.msra.mxu0 0.0
        %971 = vmatprep.subr.mxu0 0.0
        %972 = vmatpush1.msra.mxu0 0.0
        %973 = vmatprep.subr.mxu0 0.0
        %974 = vmatpush1.msra.mxu0 0.0
        %975 = vmatprep.subr.mxu0 0.0
        %976 = vmatpush1.msra.mxu0 0.0
        %977 = vmatprep.subr.mxu0 0.0
        %978 = vmatpush1.msra.mxu0 0.0
        %979 = vmatprep.subr.mxu0 0.0
        %980 = vmatpush1.msra.mxu0 0.0
        %981 = vmatprep.subr.mxu0 0.0
        %982 = vmatpush1.msra.mxu0 0.0
        %983 = vmatprep.subr.mxu0 0.0
        %984 = vmatpush1.msra.mxu0 0.0
        %985 = vmatprep.subr.mxu0 0.0
        %986 = vmatpush1.msra.mxu0 0.0
        %987 = vmatprep.subr.mxu0 0.0
        %988 = vmatpush1.msra.mxu0 0.0
        %989 = vmatprep.subr.mxu0 0.0
        %990 = vmatpush1.msra.mxu0 0.0
        %991 = vmatprep.subr.mxu0 0.0
        %992 = vmatpush1.msra.mxu0 0.0
        %993 = vmatprep.subr.mxu0 0.0
        %994 = vmatpush1.msra.mxu0 0.0
        %995 = vmatprep.subr.mxu0 0.0
        %996 = vmatpush1.msra.mxu0 0.0
        %997 = vmatprep.subr.mxu0 %v876
        %998 = vmatpush1.msra.mxu0 %v873
        %999 = vmatprep.subr.mxu0 0.0
        %1000 = vmatpush2.msra.mxu0 0.0
        %1001 = vmatprep.subr.mxu0 0.0
        %1002 = vmatpush2.msra.mxu0 0.0
        %1003 = vmatprep.subr.mxu0 0.0
        %1004 = vmatpush2.msra.mxu0 0.0
        %1005 = vmatprep.subr.mxu0 0.0
        %1006 = vmatpush2.msra.mxu0 0.0
        %1007 = vmatprep.subr.mxu0 0.0
        %1008 = vmatpush2.msra.mxu0 0.0
        %1009 = vmatprep.subr.mxu0 0.0
        %1010 = vmatpush2.msra.mxu0 0.0
        %1011 = vmatprep.subr.mxu0 0.0
        %1012 = vmatpush2.msra.mxu0 0.0
        %1013 = vmatprep.subr.mxu0 0.0
        %1014 = vmatpush2.msra.mxu0 0.0
        %1015 = vmatprep.subr.mxu0 0.0
        %1016 = vmatpush2.msra.mxu0 0.0
        %1017 = vmatprep.subr.mxu0 0.0
        %1018 = vmatpush2.msra.mxu0 0.0
        %1019 = vmatprep.subr.mxu0 0.0
        %1020 = vmatpush2.msra.mxu0 0.0
        %1021 = vmatprep.subr.mxu0 0.0
        %1022 = vmatpush2.msra.mxu0 0.0
        %1023 = vmatprep.subr.mxu0 0.0
        %1024 = vmatpush2.msra.mxu0 0.0
        %1025 = vmatprep.subr.mxu0 0.0
        %1026 = vmatpush2.msra.mxu0 0.0
        %1027 = vmatprep.subr.mxu0 0.0
        %1028 = vmatpush2.msra.mxu0 0.0
        %1029 = vmatprep.subr.mxu0 0.0
        %1030 = vmatpush2.msra.mxu0 0.0
        %1031 = vmatprep.mubr.f32.mxu0 0.0
        %1032 = vmatmul.mubr.f32.gmra.mxu0 %v858
        %v1033 = vpop.f32.mrf.mxu0
        %v1034 = vadd.f32 0.0, %v1033
        %v1035 = vpop.f32.mrf.mxu0
        %v1036 = vadd.f32 0.0, %v1035
        %1037 = vmatprep.mubr.f32.mxu0 0.0
        %1038 = vmatmul.mubr.f32.gmra.mxu0 %v860
        %v1039 = vpop.f32.mrf.mxu0
        %v1040 = vadd.f32 0.0, %v1039
        %v1041 = vpop.f32.mrf.mxu0
        %v1042 = vadd.f32 0.0, %v1041
        %1043 = vmatprep.mubr.f32.mxu0 0.0
        %1044 = vmatmul.mubr.f32.gmra.mxu0 %v862
        %v1045 = vpop.f32.mrf.mxu0
        %v1046 = vadd.f32 0.0, %v1045
        %v1047 = vpop.f32.mrf.mxu0
        %v1048 = vadd.f32 0.0, %v1047
        %1049 = vmatprep.mubr.f32.mxu0 0.0
        %1050 = vmatmul.mubr.f32.gmra.mxu0 %v864
        %v1051 = vpop.f32.mrf.mxu0
        %v1052 = vadd.f32 0.0, %v1051
        %v1053 = vpop.f32.mrf.mxu0
        %v1054 = vadd.f32 0.0, %v1053
        %1055 = vdwg.mxu0
        %v1056 = vadd.f32 %v701, %v945
        %v1057 = vadd.f32 %v703, %v947
        %v1058 = vadd.f32 %v790, %v1034
        %v1059 = vadd.f32 %v792, %v1036
        %v1060 = vadd.f32 %v707, %v951
        %v1061 = vadd.f32 %v709, %v953
        %v1062 = vadd.f32 %v796, %v1040
        %v1063 = vadd.f32 %v798, %v1042
        %v1064 = vadd.f32 %v713, %v957
        %v1065 = vadd.f32 %v715, %v959
        %v1066 = vadd.f32 %v802, %v1046
        %v1067 = vadd.f32 %v804, %v1048
        %v1068 = vadd.f32 %v719, %v963
        %v1069 = vadd.f32 %v721, %v965
        %v1070 = vadd.f32 %v808, %v1052
        %v1071 = vadd.f32 %v810, %v1054
        %1072 = vrot.lane.b32.xlu0 %v323, 1
        %v1073 = vpop.permute.xlu0 %1072
        %1075 = vrot.lane.b32.xlu0 %v300, 1
        %v1076 = vpop.permute.xlu0 %1075
        %1077 = vrot.lane.b32.xlu0 %v328, 1
        %v1078 = vpop.permute.xlu0 %1077
        %1079 = vrot.lane.b32.xlu0 %v301, 1
        %v1080 = vpop.permute.xlu0 %1079
        %vm1081 = vcmask 7168
        %v1082 = vsel %vm1081, %v1076, %v1078
        %v1083 = vsel %vm1081, %v1078, %v1080
        %v1084 = vsel %vm1081, %v1080, %v1073
        %v1089 = vsel %vm1081, %v1073, %v1076
        %v1090 = vlaneseq
        %v1091 = vshrl.u32 %v1090, 7
        %v1092 = vsub.s32 3, %v1091
        %v1093 = vrot.slane %v306, %v1092
        %v1094 = vlaneseq
        %v1095 = vshrl.u32 %v1094, 7
        %v1096 = vsub.s32 3, %v1095
        %v1097 = vrot.slane %v307, %v1096
        %v1098 = vlaneseq
        %v1099 = vshrl.u32 %v1098, 7
        %v1100 = vsub.s32 3, %v1099
        %v1101 = vrot.slane %v308, %v1100
        %v1102 = vlaneseq
        %v1103 = vshrl.u32 %v1102, 7
        %v1104 = vsub.s32 3, %v1103
        %v1105 = vrot.slane %v309, %v1104
        %v1106 = vmul.f32 %v1089, %v1093
        %v1107 = vmul.f32 %v1082, %v1097
        %v1108 = vmul.f32 %v1083, %v1101
        %v1109 = vmul.f32 %v1084, %v1105
        %1110 = vrot.lane.b32.xlu0 %v318, 116
        %v1111 = vpop.permute.xlu0 %1110
        %1112 = vrot.lane.b32.xlu0 %v319, 116
        %v1113 = vpop.permute.xlu0 %1112
        %1114 = vrot.lane.b32.xlu0 %v320, 116
        %v1115 = vpop.permute.xlu0 %1114
        %1116 = vrot.lane.b32.xlu0 %v321, 116
        %v1117 = vpop.permute.xlu0 %1116
        %v1118 = vsel %vm414, %v1111, 0
        %v1120 = vsel %vm414, %v1113, 0
        %v1122 = vsel %vm414, %v1115, 0
        %v1124 = vsel %vm414, %v1117, 0
        %v1127 = vsel %vm423, %v1106, 0
        %v1130 = vsel %vm423, %v1107, 0
        %v1133 = vsel %vm423, %v1108, 0
        %v1136 = vsel %vm423, %v1109, 0
        %1138 = vmatprep.subr.mxu0 0.0
        %1139 = vmatpush1.msra.mxu0 0.0
        %1140 = vmatprep.subr.mxu0 0.0
        %1141 = vmatpush1.msra.mxu0 0.0
        %1142 = vmatprep.subr.mxu0 0.0
        %1143 = vmatpush1.msra.mxu0 0.0
        %1144 = vmatprep.subr.mxu0 0.0
        %1145 = vmatpush1.msra.mxu0 0.0
        %1146 = vmatprep.subr.mxu0 0.0
        %1147 = vmatpush1.msra.mxu0 0.0
        %1148 = vmatprep.subr.mxu0 0.0
        %1149 = vmatpush1.msra.mxu0 0.0
        %1150 = vmatprep.subr.mxu0 0.0
        %1151 = vmatpush1.msra.mxu0 0.0
        %1152 = vmatprep.subr.mxu0 0.0
        %1153 = vmatpush1.msra.mxu0 0.0
        %1154 = vmatprep.subr.mxu0 0.0
        %1155 = vmatpush1.msra.mxu0 0.0
        %1156 = vmatprep.subr.mxu0 0.0
        %1157 = vmatpush1.msra.mxu0 0.0
        %1158 = vmatprep.subr.mxu0 0.0
        %1159 = vmatpush1.msra.mxu0 0.0
        %1160 = vmatprep.subr.mxu0 0.0
        %1161 = vmatpush1.msra.mxu0 0.0
        %1162 = vmatprep.subr.mxu0 0.0
        %1163 = vmatpush1.msra.mxu0 0.0
        %1164 = vmatprep.subr.mxu0 0.0
        %1165 = vmatpush1.msra.mxu0 0.0
        %1166 = vmatprep.subr.mxu0 0.0
        %1167 = vmatpush1.msra.mxu0 0.0
        %1168 = vmatprep.subr.mxu0 %v1130
        %1169 = vmatpush1.msra.mxu0 %v1127
        %1170 = vmatprep.subr.mxu0 0.0
        %1171 = vmatpush2.msra.mxu0 0.0
        %1172 = vmatprep.subr.mxu0 0.0
        %1173 = vmatpush2.msra.mxu0 0.0
        %1174 = vmatprep.subr.mxu0 0.0
        %1175 = vmatpush2.msra.mxu0 0.0
        %1176 = vmatprep.subr.mxu0 0.0
        %1177 = vmatpush2.msra.mxu0 0.0
        %1178 = vmatprep.subr.mxu0 0.0
        %1179 = vmatpush2.msra.mxu0 0.0
        %1180 = vmatprep.subr.mxu0 0.0
        %1181 = vmatpush2.msra.mxu0 0.0
        %1182 = vmatprep.subr.mxu0 0.0
        %1183 = vmatpush2.msra.mxu0 0.0
        %1184 = vmatprep.subr.mxu0 0.0
        %1185 = vmatpush2.msra.mxu0 0.0
        %1186 = vmatprep.subr.mxu0 0.0
        %1187 = vmatpush2.msra.mxu0 0.0
        %1188 = vmatprep.subr.mxu0 0.0
        %1189 = vmatpush2.msra.mxu0 0.0
        %1190 = vmatprep.subr.mxu0 0.0
        %1191 = vmatpush2.msra.mxu0 0.0
        %1192 = vmatprep.subr.mxu0 0.0
        %1193 = vmatpush2.msra.mxu0 0.0
        %1194 = vmatprep.subr.mxu0 0.0
        %1195 = vmatpush2.msra.mxu0 0.0
        %1196 = vmatprep.subr.mxu0 0.0
        %1197 = vmatpush2.msra.mxu0 0.0
        %1198 = vmatprep.subr.mxu0 0.0
        %1199 = vmatpush2.msra.mxu0 0.0
        %1200 = vmatprep.subr.mxu0 0.0
        %1201 = vmatpush2.msra.mxu0 0.0
        %1202 = vmatprep.mubr.f32.mxu0 0.0
        %1203 = vmatmul.mubr.f32.gmra.mxu0 %v1118
        %v1204 = vpop.f32.mrf.mxu0
        %v1205 = vadd.f32 0.0, %v1204
        %v1206 = vpop.f32.mrf.mxu0
        %v1207 = vadd.f32 0.0, %v1206
        %1208 = vmatprep.mubr.f32.mxu0 0.0
        %1209 = vmatmul.mubr.f32.gmra.mxu0 %v1120
        %v1210 = vpop.f32.mrf.mxu0
        %v1211 = vadd.f32 0.0, %v1210
        %v1212 = vpop.f32.mrf.mxu0
        %v1213 = vadd.f32 0.0, %v1212
        %1214 = vmatprep.mubr.f32.mxu0 0.0
        %1215 = vmatmul.mubr.f32.gmra.mxu0 %v1122
        %v1216 = vpop.f32.mrf.mxu0
        %v1217 = vadd.f32 0.0, %v1216
        %v1218 = vpop.f32.mrf.mxu0
        %v1219 = vadd.f32 0.0, %v1218
        %1220 = vmatprep.mubr.f32.mxu0 0.0
        %1221 = vmatmul.mubr.f32.gmra.mxu0 %v1124
        %v1222 = vpop.f32.mrf.mxu0
        %v1223 = vadd.f32 0.0, %v1222
        %v1224 = vpop.f32.mrf.mxu0
        %v1225 = vadd.f32 0.0, %v1224
        %1226 = vdwg.mxu0
        %1227 = vmatprep.subr.mxu0 0.0
        %1228 = vmatpush1.msra.mxu0 0.0
        %1229 = vmatprep.subr.mxu0 0.0
        %1230 = vmatpush1.msra.mxu0 0.0
        %1231 = vmatprep.subr.mxu0 0.0
        %1232 = vmatpush1.msra.mxu0 0.0
        %1233 = vmatprep.subr.mxu0 0.0
        %1234 = vmatpush1.msra.mxu0 0.0
        %1235 = vmatprep.subr.mxu0 0.0
        %1236 = vmatpush1.msra.mxu0 0.0
        %1237 = vmatprep.subr.mxu0 0.0
        %1238 = vmatpush1.msra.mxu0 0.0
        %1239 = vmatprep.subr.mxu0 0.0
        %1240 = vmatpush1.msra.mxu0 0.0
        %1241 = vmatprep.subr.mxu0 0.0
        %1242 = vmatpush1.msra.mxu0 0.0
        %1243 = vmatprep.subr.mxu0 0.0
        %1244 = vmatpush1.msra.mxu0 0.0
        %1245 = vmatprep.subr.mxu0 0.0
        %1246 = vmatpush1.msra.mxu0 0.0
        %1247 = vmatprep.subr.mxu0 0.0
        %1248 = vmatpush1.msra.mxu0 0.0
        %1249 = vmatprep.subr.mxu0 0.0
        %1250 = vmatpush1.msra.mxu0 0.0
        %1251 = vmatprep.subr.mxu0 0.0
        %1252 = vmatpush1.msra.mxu0 0.0
        %1253 = vmatprep.subr.mxu0 0.0
        %1254 = vmatpush1.msra.mxu0 0.0
        %1255 = vmatprep.subr.mxu0 0.0
        %1256 = vmatpush1.msra.mxu0 0.0
        %1257 = vmatprep.subr.mxu0 %v1136
        %1258 = vmatpush1.msra.mxu0 %v1133
        %1259 = vmatprep.subr.mxu0 0.0
        %1260 = vmatpush2.msra.mxu0 0.0
        %1261 = vmatprep.subr.mxu0 0.0
        %1262 = vmatpush2.msra.mxu0 0.0
        %1263 = vmatprep.subr.mxu0 0.0
        %1264 = vmatpush2.msra.mxu0 0.0
        %1265 = vmatprep.subr.mxu0 0.0
        %1266 = vmatpush2.msra.mxu0 0.0
        %1267 = vmatprep.subr.mxu0 0.0
        %1268 = vmatpush2.msra.mxu0 0.0
        %1269 = vmatprep.subr.mxu0 0.0
        %1270 = vmatpush2.msra.mxu0 0.0
        %1271 = vmatprep.subr.mxu0 0.0
        %1272 = vmatpush2.msra.mxu0 0.0
        %1273 = vmatprep.subr.mxu0 0.0
        %1274 = vmatpush2.msra.mxu0 0.0
        %1275 = vmatprep.subr.mxu0 0.0
        %1276 = vmatpush2.msra.mxu0 0.0
        %1277 = vmatprep.subr.mxu0 0.0
        %1278 = vmatpush2.msra.mxu0 0.0
        %1279 = vmatprep.subr.mxu0 0.0
        %1280 = vmatpush2.msra.mxu0 0.0
        %1281 = vmatprep.subr.mxu0 0.0
        %1282 = vmatpush2.msra.mxu0 0.0
        %1283 = vmatprep.subr.mxu0 0.0
        %1284 = vmatpush2.msra.mxu0 0.0
        %1285 = vmatprep.subr.mxu0 0.0
        %1286 = vmatpush2.msra.mxu0 0.0
        %1287 = vmatprep.subr.mxu0 0.0
        %1288 = vmatpush2.msra.mxu0 0.0
        %1289 = vmatprep.subr.mxu0 0.0
        %1290 = vmatpush2.msra.mxu0 0.0
        %1291 = vmatprep.mubr.f32.mxu0 0.0
        %1292 = vmatmul.mubr.f32.gmra.mxu0 %v1118
        %v1293 = vpop.f32.mrf.mxu0
        %v1294 = vadd.f32 0.0, %v1293
        %v1295 = vpop.f32.mrf.mxu0
        %v1296 = vadd.f32 0.0, %v1295
        %1297 = vmatprep.mubr.f32.mxu0 0.0
        %1298 = vmatmul.mubr.f32.gmra.mxu0 %v1120
        %v1299 = vpop.f32.mrf.mxu0
        %v1300 = vadd.f32 0.0, %v1299
        %v1301 = vpop.f32.mrf.mxu0
        %v1302 = vadd.f32 0.0, %v1301
        %1303 = vmatprep.mubr.f32.mxu0 0.0
        %1304 = vmatmul.mubr.f32.gmra.mxu0 %v1122
        %v1305 = vpop.f32.mrf.mxu0
        %v1306 = vadd.f32 0.0, %v1305
        %v1307 = vpop.f32.mrf.mxu0
        %v1308 = vadd.f32 0.0, %v1307
        %1309 = vmatprep.mubr.f32.mxu0 0.0
        %1310 = vmatmul.mubr.f32.gmra.mxu0 %v1124
        %v1311 = vpop.f32.mrf.mxu0
        %v1312 = vadd.f32 0.0, %v1311
        %v1313 = vpop.f32.mrf.mxu0
        %v1314 = vadd.f32 0.0, %v1313
        %1315 = vdwg.mxu0
        %v1316 = vadd.f32 %v1056, %v1205
        %v1317 = vadd.f32 %v1057, %v1207
        %v1318 = vadd.f32 %v1058, %v1294
        %v1319 = vadd.f32 %v1059, %v1296
        %v1320 = vadd.f32 %v1060, %v1211
        %v1321 = vadd.f32 %v1061, %v1213
        %v1322 = vadd.f32 %v1062, %v1300
        %v1323 = vadd.f32 %v1063, %v1302
        %v1324 = vadd.f32 %v1064, %v1217
        %v1325 = vadd.f32 %v1065, %v1219
        %v1326 = vadd.f32 %v1066, %v1306
        %v1327 = vadd.f32 %v1067, %v1308
        %v1328 = vadd.f32 %v1068, %v1223
        %v1329 = vadd.f32 %v1069, %v1225
        %v1330 = vadd.f32 %v1070, %v1312
        %v1331 = vadd.f32 %v1071, %v1314
        %1332 = vrot.lane.b32.xlu0 %v318, 112
        %v1333 = vpop.permute.xlu0 %1332
        %1334 = vrot.lane.b32.xlu0 %v319, 112
        %v1335 = vpop.permute.xlu0 %1334
        %1336 = vrot.lane.b32.xlu0 %v320, 112
        %v1337 = vpop.permute.xlu0 %1336
        %1338 = vrot.lane.b32.xlu0 %v321, 112
        %v1339 = vpop.permute.xlu0 %1338
        %v1340 = vsel %vm414, %v1333, 0
        %v1342 = vsel %vm414, %v1335, 0
        %v1344 = vsel %vm414, %v1337, 0
        %v1346 = vsel %vm414, %v1339, 0
        %v1348 = vsel %vm423, %v300, 0
        %v1350 = vsel %vm423, %v328, 0
        %v1352 = vsel %vm423, %v301, 0
        %v1354 = vsel %vm423, %v323, 0
        %1356 = vmatprep.subr.mxu0 0.0
        %1357 = vmatpush1.msra.mxu0 0.0
        %1358 = vmatprep.subr.mxu0 0.0
        %1359 = vmatpush1.msra.mxu0 0.0
        %1360 = vmatprep.subr.mxu0 0.0
        %1361 = vmatpush1.msra.mxu0 0.0
        %1362 = vmatprep.subr.mxu0 0.0
        %1363 = vmatpush1.msra.mxu0 0.0
        %1364 = vmatprep.subr.mxu0 0.0
        %1365 = vmatpush1.msra.mxu0 0.0
        %1366 = vmatprep.subr.mxu0 0.0
        %1367 = vmatpush1.msra.mxu0 0.0
        %1368 = vmatprep.subr.mxu0 0.0
        %1369 = vmatpush1.msra.mxu0 0.0
        %1370 = vmatprep.subr.mxu0 0.0
        %1371 = vmatpush1.msra.mxu0 0.0
        %1372 = vmatprep.subr.mxu0 0.0
        %1373 = vmatpush1.msra.mxu0 0.0
        %1374 = vmatprep.subr.mxu0 0.0
        %1375 = vmatpush1.msra.mxu0 0.0
        %1376 = vmatprep.subr.mxu0 0.0
        %1377 = vmatpush1.msra.mxu0 0.0
        %1378 = vmatprep.subr.mxu0 0.0
        %1379 = vmatpush1.msra.mxu0 0.0
        %1380 = vmatprep.subr.mxu0 0.0
        %1381 = vmatpush1.msra.mxu0 0.0
        %1382 = vmatprep.subr.mxu0 0.0
        %1383 = vmatpush1.msra.mxu0 0.0
        %1384 = vmatprep.subr.mxu0 0.0
        %1385 = vmatpush1.msra.mxu0 0.0
        %1386 = vmatprep.subr.mxu0 %v1350
        %1387 = vmatpush1.msra.mxu0 %v1348
        %1388 = vmatprep.subr.mxu0 0.0
        %1389 = vmatpush2.msra.mxu0 0.0
        %1390 = vmatprep.subr.mxu0 0.0
        %1391 = vmatpush2.msra.mxu0 0.0
        %1392 = vmatprep.subr.mxu0 0.0
        %1393 = vmatpush2.msra.mxu0 0.0
        %1394 = vmatprep.subr.mxu0 0.0
        %1395 = vmatpush2.msra.mxu0 0.0
        %1396 = vmatprep.subr.mxu0 0.0
        %1397 = vmatpush2.msra.mxu0 0.0
        %1398 = vmatprep.subr.mxu0 0.0
        %1399 = vmatpush2.msra.mxu0 0.0
        %1400 = vmatprep.subr.mxu0 0.0
        %1401 = vmatpush2.msra.mxu0 0.0
        %1402 = vmatprep.subr.mxu0 0.0
        %1403 = vmatpush2.msra.mxu0 0.0
        %1404 = vmatprep.subr.mxu0 0.0
        %1405 = vmatpush2.msra.mxu0 0.0
        %1406 = vmatprep.subr.mxu0 0.0
        %1407 = vmatpush2.msra.mxu0 0.0
        %1408 = vmatprep.subr.mxu0 0.0
        %1409 = vmatpush2.msra.mxu0 0.0
        %1410 = vmatprep.subr.mxu0 0.0
        %1411 = vmatpush2.msra.mxu0 0.0
        %1412 = vmatprep.subr.mxu0 0.0
        %1413 = vmatpush2.msra.mxu0 0.0
        %1414 = vmatprep.subr.mxu0 0.0
        %1415 = vmatpush2.msra.mxu0 0.0
        %1416 = vmatprep.subr.mxu0 0.0
        %1417 = vmatpush2.msra.mxu0 0.0
        %1418 = vmatprep.subr.mxu0 0.0
        %1419 = vmatpush2.msra.mxu0 0.0
        %1420 = vmatprep.mubr.f32.mxu0 0.0
        %1421 = vmatmul.mubr.f32.gmra.mxu0 %v1340
        %v1422 = vpop.f32.mrf.mxu0
        %v1423 = vadd.f32 0.0, %v1422
        %v1424 = vpop.f32.mrf.mxu0
        %v1425 = vadd.f32 0.0, %v1424
        %1426 = vmatprep.mubr.f32.mxu0 0.0
        %1427 = vmatmul.mubr.f32.gmra.mxu0 %v1342
        %v1428 = vpop.f32.mrf.mxu0
        %v1429 = vadd.f32 0.0, %v1428
        %v1430 = vpop.f32.mrf.mxu0
        %v1431 = vadd.f32 0.0, %v1430
        %1432 = vmatprep.mubr.f32.mxu0 0.0
        %1433 = vmatmul.mubr.f32.gmra.mxu0 %v1344
        %v1434 = vpop.f32.mrf.mxu0
        %v1435 = vadd.f32 0.0, %v1434
        %v1436 = vpop.f32.mrf.mxu0
        %v1437 = vadd.f32 0.0, %v1436
        %1438 = vmatprep.mubr.f32.mxu0 0.0
        %1439 = vmatmul.mubr.f32.gmra.mxu0 %v1346
        %v1440 = vpop.f32.mrf.mxu0
        %v1441 = vadd.f32 0.0, %v1440
        %v1442 = vpop.f32.mrf.mxu0
        %v1443 = vadd.f32 0.0, %v1442
        %1444 = vdwg.mxu0
        %1445 = vmatprep.subr.mxu0 0.0
        %1446 = vmatpush1.msra.mxu0 0.0
        %1447 = vmatprep.subr.mxu0 0.0
        %1448 = vmatpush1.msra.mxu0 0.0
        %1449 = vmatprep.subr.mxu0 0.0
        %1450 = vmatpush1.msra.mxu0 0.0
        %1451 = vmatprep.subr.mxu0 0.0
        %1452 = vmatpush1.msra.mxu0 0.0
        %1453 = vmatprep.subr.mxu0 0.0
        %1454 = vmatpush1.msra.mxu0 0.0
        %1455 = vmatprep.subr.mxu0 0.0
        %1456 = vmatpush1.msra.mxu0 0.0
        %1457 = vmatprep.subr.mxu0 0.0
        %1458 = vmatpush1.msra.mxu0 0.0
        %1459 = vmatprep.subr.mxu0 0.0
        %1460 = vmatpush1.msra.mxu0 0.0
        %1461 = vmatprep.subr.mxu0 0.0
        %1462 = vmatpush1.msra.mxu0 0.0
        %1463 = vmatprep.subr.mxu0 0.0
        %1464 = vmatpush1.msra.mxu0 0.0
        %1465 = vmatprep.subr.mxu0 0.0
        %1466 = vmatpush1.msra.mxu0 0.0
        %1467 = vmatprep.subr.mxu0 0.0
        %1468 = vmatpush1.msra.mxu0 0.0
        %1469 = vmatprep.subr.mxu0 0.0
        %1470 = vmatpush1.msra.mxu0 0.0
        %1471 = vmatprep.subr.mxu0 0.0
        %1472 = vmatpush1.msra.mxu0 0.0
        %1473 = vmatprep.subr.mxu0 0.0
        %1474 = vmatpush1.msra.mxu0 0.0
        %1475 = vmatprep.subr.mxu0 %v1354
        %1476 = vmatpush1.msra.mxu0 %v1352
        %1477 = vmatprep.subr.mxu0 0.0
        %1478 = vmatpush2.msra.mxu0 0.0
        %1479 = vmatprep.subr.mxu0 0.0
        %1480 = vmatpush2.msra.mxu0 0.0
        %1481 = vmatprep.subr.mxu0 0.0
        %1482 = vmatpush2.msra.mxu0 0.0
        %1483 = vmatprep.subr.mxu0 0.0
        %1484 = vmatpush2.msra.mxu0 0.0
        %1485 = vmatprep.subr.mxu0 0.0
        %1486 = vmatpush2.msra.mxu0 0.0
        %1487 = vmatprep.subr.mxu0 0.0
        %1488 = vmatpush2.msra.mxu0 0.0
        %1489 = vmatprep.subr.mxu0 0.0
        %1490 = vmatpush2.msra.mxu0 0.0
        %1491 = vmatprep.subr.mxu0 0.0
        %1492 = vmatpush2.msra.mxu0 0.0
        %1493 = vmatprep.subr.mxu0 0.0
        %1494 = vmatpush2.msra.mxu0 0.0
        %1495 = vmatprep.subr.mxu0 0.0
        %1496 = vmatpush2.msra.mxu0 0.0
        %1497 = vmatprep.subr.mxu0 0.0
        %1498 = vmatpush2.msra.mxu0 0.0
        %1499 = vmatprep.subr.mxu0 0.0
        %1500 = vmatpush2.msra.mxu0 0.0
        %1501 = vmatprep.subr.mxu0 0.0
        %1502 = vmatpush2.msra.mxu0 0.0
        %1503 = vmatprep.subr.mxu0 0.0
        %1504 = vmatpush2.msra.mxu0 0.0
        %1505 = vmatprep.subr.mxu0 0.0
        %1506 = vmatpush2.msra.mxu0 0.0
        %1507 = vmatprep.subr.mxu0 0.0
        %1508 = vmatpush2.msra.mxu0 0.0
        %1509 = vmatprep.mubr.f32.mxu0 0.0
        %1510 = vmatmul.mubr.f32.gmra.mxu0 %v1340
        %v1511 = vpop.f32.mrf.mxu0
        %v1512 = vadd.f32 0.0, %v1511
        %v1513 = vpop.f32.mrf.mxu0
        %v1514 = vadd.f32 0.0, %v1513
        %1515 = vmatprep.mubr.f32.mxu0 0.0
        %1516 = vmatmul.mubr.f32.gmra.mxu0 %v1342
        %v1517 = vpop.f32.mrf.mxu0
        %v1518 = vadd.f32 0.0, %v1517
        %v1519 = vpop.f32.mrf.mxu0
        %v1520 = vadd.f32 0.0, %v1519
        %1521 = vmatprep.mubr.f32.mxu0 0.0
        %1522 = vmatmul.mubr.f32.gmra.mxu0 %v1344
        %v1523 = vpop.f32.mrf.mxu0
        %v1524 = vadd.f32 0.0, %v1523
        %v1525 = vpop.f32.mrf.mxu0
        %v1526 = vadd.f32 0.0, %v1525
        %1527 = vmatprep.mubr.f32.mxu0 0.0
        %1528 = vmatmul.mubr.f32.gmra.mxu0 %v1346
        %v1529 = vpop.f32.mrf.mxu0
        %v1530 = vadd.f32 0.0, %v1529
        %v1531 = vpop.f32.mrf.mxu0
        %v1532 = vadd.f32 0.0, %v1531
        %1533 = vdwg.mxu0
        %v1534 = vadd.f32 %v1316, %v1423
        %v1535 = vadd.f32 %v1317, %v1425
        %v1536 = vadd.f32 %v1318, %v1512
        %v1537 = vadd.f32 %v1319, %v1514
        %v1538 = vadd.f32 %v1320, %v1429
        %v1539 = vadd.f32 %v1321, %v1431
        %v1540 = vadd.f32 %v1322, %v1518
        %v1541 = vadd.f32 %v1323, %v1520
        %v1542 = vadd.f32 %v1324, %v1435
        %v1543 = vadd.f32 %v1325, %v1437
        %v1544 = vadd.f32 %v1326, %v1524
        %v1545 = vadd.f32 %v1327, %v1526
        %v1546 = vadd.f32 %v1328, %v1441
        %v1547 = vadd.f32 %v1329, %v1443
        %v1548 = vadd.f32 %v1330, %v1530
        %v1549 = vadd.f32 %v1331, %v1532
        %1550 = vrot.lane.b32.xlu0 %v300, 127
        %v1551 = vpop.permute.xlu0 %1550
        %1552 = vrot.lane.b32.xlu0 %v328, 127
        %v1553 = vpop.permute.xlu0 %1552
        %1554 = vrot.lane.b32.xlu0 %v301, 127
        %v1555 = vpop.permute.xlu0 %1554
        %1556 = vrot.lane.b32.xlu0 %v323, 127
        %v1557 = vpop.permute.xlu0 %1556
        %vm1558 = vcmask 1039360
        %v1559 = vsel %vm1558, %v1551, %v1553
        %v1560 = vsel %vm1558, %v1553, %v1555
        %v1561 = vsel %vm1558, %v1555, %v1557
        %v1567 = vsel %vm1558, %v1557, %v1551
        %v1568 = vlaneseq
        %v1569 = vshrl.u32 %v1568, 7
        %v1570 = vsub.s32 5, %v1569
        %v1571 = vrot.slane %v306, %v1570
        %v1572 = vlaneseq
        %v1573 = vshrl.u32 %v1572, 7
        %v1574 = vsub.s32 5, %v1573
        %v1575 = vrot.slane %v307, %v1574
        %v1576 = vlaneseq
        %v1577 = vshrl.u32 %v1576, 7
        %v1578 = vsub.s32 5, %v1577
        %v1579 = vrot.slane %v308, %v1578
        %v1580 = vlaneseq
        %v1581 = vshrl.u32 %v1580, 7
        %v1582 = vsub.s32 5, %v1581
        %v1583 = vrot.slane %v309, %v1582
        %v1584 = vmul.f32 %v1559, %v1571
        %v1585 = vmul.f32 %v1560, %v1575
        %v1586 = vmul.f32 %v1561, %v1579
        %v1587 = vmul.f32 %v1567, %v1583
        %1588 = vrot.lane.b32.xlu0 %v318, 108
        %v1589 = vpop.permute.xlu0 %1588
        %1590 = vrot.lane.b32.xlu0 %v319, 108
        %v1591 = vpop.permute.xlu0 %1590
        %1592 = vrot.lane.b32.xlu0 %v320, 108
        %v1593 = vpop.permute.xlu0 %1592
        %1594 = vrot.lane.b32.xlu0 %v321, 108
        %v1595 = vpop.permute.xlu0 %1594
        %v1596 = vsel %vm414, %v1589, 0
        %v1598 = vsel %vm414, %v1591, 0
        %v1600 = vsel %vm414, %v1593, 0
        %v1602 = vsel %vm414, %v1595, 0
        %v1605 = vsel %vm423, %v1584, 0
        %v1608 = vsel %vm423, %v1585, 0
        %v1611 = vsel %vm423, %v1586, 0
        %v1614 = vsel %vm423, %v1587, 0
        %1616 = vmatprep.subr.mxu0 0.0
        %1617 = vmatpush1.msra.mxu0 0.0
        %1618 = vmatprep.subr.mxu0 0.0
        %1619 = vmatpush1.msra.mxu0 0.0
        %1620 = vmatprep.subr.mxu0 0.0
        %1621 = vmatpush1.msra.mxu0 0.0
        %1622 = vmatprep.subr.mxu0 0.0
        %1623 = vmatpush1.msra.mxu0 0.0
        %1624 = vmatprep.subr.mxu0 0.0
        %1625 = vmatpush1.msra.mxu0 0.0
        %1626 = vmatprep.subr.mxu0 0.0
        %1627 = vmatpush1.msra.mxu0 0.0
        %1628 = vmatprep.subr.mxu0 0.0
        %1629 = vmatpush1.msra.mxu0 0.0
        %1630 = vmatprep.subr.mxu0 0.0
        %1631 = vmatpush1.msra.mxu0 0.0
        %1632 = vmatprep.subr.mxu0 0.0
        %1633 = vmatpush1.msra.mxu0 0.0
        %1634 = vmatprep.subr.mxu0 0.0
        %1635 = vmatpush1.msra.mxu0 0.0
        %1636 = vmatprep.subr.mxu0 0.0
        %1637 = vmatpush1.msra.mxu0 0.0
        %1638 = vmatprep.subr.mxu0 0.0
        %1639 = vmatpush1.msra.mxu0 0.0
        %1640 = vmatprep.subr.mxu0 0.0
        %1641 = vmatpush1.msra.mxu0 0.0
        %1642 = vmatprep.subr.mxu0 0.0
        %1643 = vmatpush1.msra.mxu0 0.0
        %1644 = vmatprep.subr.mxu0 0.0
        %1645 = vmatpush1.msra.mxu0 0.0
        %1646 = vmatprep.subr.mxu0 %v1608
        %1647 = vmatpush1.msra.mxu0 %v1605
        %1648 = vmatprep.subr.mxu0 0.0
        %1649 = vmatpush2.msra.mxu0 0.0
        %1650 = vmatprep.subr.mxu0 0.0
        %1651 = vmatpush2.msra.mxu0 0.0
        %1652 = vmatprep.subr.mxu0 0.0
        %1653 = vmatpush2.msra.mxu0 0.0
        %1654 = vmatprep.subr.mxu0 0.0
        %1655 = vmatpush2.msra.mxu0 0.0
        %1656 = vmatprep.subr.mxu0 0.0
        %1657 = vmatpush2.msra.mxu0 0.0
        %1658 = vmatprep.subr.mxu0 0.0
        %1659 = vmatpush2.msra.mxu0 0.0
        %1660 = vmatprep.subr.mxu0 0.0
        %1661 = vmatpush2.msra.mxu0 0.0
        %1662 = vmatprep.subr.mxu0 0.0
        %1663 = vmatpush2.msra.mxu0 0.0
        %1664 = vmatprep.subr.mxu0 0.0
        %1665 = vmatpush2.msra.mxu0 0.0
        %1666 = vmatprep.subr.mxu0 0.0
        %1667 = vmatpush2.msra.mxu0 0.0
        %1668 = vmatprep.subr.mxu0 0.0
        %1669 = vmatpush2.msra.mxu0 0.0
        %1670 = vmatprep.subr.mxu0 0.0
        %1671 = vmatpush2.msra.mxu0 0.0
        %1672 = vmatprep.subr.mxu0 0.0
        %1673 = vmatpush2.msra.mxu0 0.0
        %1674 = vmatprep.subr.mxu0 0.0
        %1675 = vmatpush2.msra.mxu0 0.0
        %1676 = vmatprep.subr.mxu0 0.0
        %1677 = vmatpush2.msra.mxu0 0.0
        %1678 = vmatprep.subr.mxu0 0.0
        %1679 = vmatpush2.msra.mxu0 0.0
        %1680 = vmatprep.mubr.f32.mxu0 0.0
        %1681 = vmatmul.mubr.f32.gmra.mxu0 %v1596
        %v1682 = vpop.f32.mrf.mxu0
        %v1683 = vadd.f32 0.0, %v1682
        %v1684 = vpop.f32.mrf.mxu0
        %v1685 = vadd.f32 0.0, %v1684
        %1686 = vmatprep.mubr.f32.mxu0 0.0
        %1687 = vmatmul.mubr.f32.gmra.mxu0 %v1598
        %v1688 = vpop.f32.mrf.mxu0
        %v1689 = vadd.f32 0.0, %v1688
        %v1690 = vpop.f32.mrf.mxu0
        %v1691 = vadd.f32 0.0, %v1690
        %1692 = vmatprep.mubr.f32.mxu0 0.0
        %1693 = vmatmul.mubr.f32.gmra.mxu0 %v1600
        %v1694 = vpop.f32.mrf.mxu0
        %v1695 = vadd.f32 0.0, %v1694
        %v1696 = vpop.f32.mrf.mxu0
        %v1697 = vadd.f32 0.0, %v1696
        %1698 = vmatprep.mubr.f32.mxu0 0.0
        %1699 = vmatmul.mubr.f32.gmra.mxu0 %v1602
        %v1700 = vpop.f32.mrf.mxu0
        %v1701 = vadd.f32 0.0, %v1700
        %v1702 = vpop.f32.mrf.mxu0
        %v1703 = vadd.f32 0.0, %v1702
        %1704 = vdwg.mxu0
        %1705 = vmatprep.subr.mxu0 0.0
        %1706 = vmatpush1.msra.mxu0 0.0
        %1707 = vmatprep.subr.mxu0 0.0
        %1708 = vmatpush1.msra.mxu0 0.0
        %1709 = vmatprep.subr.mxu0 0.0
        %1710 = vmatpush1.msra.mxu0 0.0
        %1711 = vmatprep.subr.mxu0 0.0
        %1712 = vmatpush1.msra.mxu0 0.0
        %1713 = vmatprep.subr.mxu0 0.0
        %1714 = vmatpush1.msra.mxu0 0.0
        %1715 = vmatprep.subr.mxu0 0.0
        %1716 = vmatpush1.msra.mxu0 0.0
        %1717 = vmatprep.subr.mxu0 0.0
        %1718 = vmatpush1.msra.mxu0 0.0
        %1719 = vmatprep.subr.mxu0 0.0
        %1720 = vmatpush1.msra.mxu0 0.0
        %1721 = vmatprep.subr.mxu0 0.0
        %1722 = vmatpush1.msra.mxu0 0.0
        %1723 = vmatprep.subr.mxu0 0.0
        %1724 = vmatpush1.msra.mxu0 0.0
        %1725 = vmatprep.subr.mxu0 0.0
        %1726 = vmatpush1.msra.mxu0 0.0
        %1727 = vmatprep.subr.mxu0 0.0
        %1728 = vmatpush1.msra.mxu0 0.0
        %1729 = vmatprep.subr.mxu0 0.0
        %1730 = vmatpush1.msra.mxu0 0.0
        %1731 = vmatprep.subr.mxu0 0.0
        %1732 = vmatpush1.msra.mxu0 0.0
        %1733 = vmatprep.subr.mxu0 0.0
        %1734 = vmatpush1.msra.mxu0 0.0
        %1735 = vmatprep.subr.mxu0 %v1614
        %1736 = vmatpush1.msra.mxu0 %v1611
        %1737 = vmatprep.subr.mxu0 0.0
        %1738 = vmatpush2.msra.mxu0 0.0
        %1739 = vmatprep.subr.mxu0 0.0
        %1740 = vmatpush2.msra.mxu0 0.0
        %1741 = vmatprep.subr.mxu0 0.0
        %1742 = vmatpush2.msra.mxu0 0.0
        %1743 = vmatprep.subr.mxu0 0.0
        %1744 = vmatpush2.msra.mxu0 0.0
        %1745 = vmatprep.subr.mxu0 0.0
        %1746 = vmatpush2.msra.mxu0 0.0
        %1747 = vmatprep.subr.mxu0 0.0
        %1748 = vmatpush2.msra.mxu0 0.0
        %1749 = vmatprep.subr.mxu0 0.0
        %1750 = vmatpush2.msra.mxu0 0.0
        %1751 = vmatprep.subr.mxu0 0.0
        %1752 = vmatpush2.msra.mxu0 0.0
        %1753 = vmatprep.subr.mxu0 0.0
        %1754 = vmatpush2.msra.mxu0 0.0
        %1755 = vmatprep.subr.mxu0 0.0
        %1756 = vmatpush2.msra.mxu0 0.0
        %1757 = vmatprep.subr.mxu0 0.0
        %1758 = vmatpush2.msra.mxu0 0.0
        %1759 = vmatprep.subr.mxu0 0.0
        %1760 = vmatpush2.msra.mxu0 0.0
        %1761 = vmatprep.subr.mxu0 0.0
        %1762 = vmatpush2.msra.mxu0 0.0
        %1763 = vmatprep.subr.mxu0 0.0
        %1764 = vmatpush2.msra.mxu0 0.0
        %1765 = vmatprep.subr.mxu0 0.0
        %1766 = vmatpush2.msra.mxu0 0.0
        %1767 = vmatprep.subr.mxu0 0.0
        %1768 = vmatpush2.msra.mxu0 0.0
        %1769 = vmatprep.mubr.f32.mxu0 0.0
        %1770 = vmatmul.mubr.f32.gmra.mxu0 %v1596
        %v1771 = vpop.f32.mrf.mxu0
        %v1772 = vadd.f32 0.0, %v1771
        %v1773 = vpop.f32.mrf.mxu0
        %v1774 = vadd.f32 0.0, %v1773
        %1775 = vmatprep.mubr.f32.mxu0 0.0
        %1776 = vmatmul.mubr.f32.gmra.mxu0 %v1598
        %v1777 = vpop.f32.mrf.mxu0
        %v1778 = vadd.f32 0.0, %v1777
        %v1779 = vpop.f32.mrf.mxu0
        %v1780 = vadd.f32 0.0, %v1779
        %1781 = vmatprep.mubr.f32.mxu0 0.0
        %1782 = vmatmul.mubr.f32.gmra.mxu0 %v1600
        %v1783 = vpop.f32.mrf.mxu0
        %v1784 = vadd.f32 0.0, %v1783
        %v1785 = vpop.f32.mrf.mxu0
        %v1786 = vadd.f32 0.0, %v1785
        %1787 = vmatprep.mubr.f32.mxu0 0.0
        %1788 = vmatmul.mubr.f32.gmra.mxu0 %v1602
        %v1789 = vpop.f32.mrf.mxu0
        %v1790 = vadd.f32 0.0, %v1789
        %v1791 = vpop.f32.mrf.mxu0
        %v1792 = vadd.f32 0.0, %v1791
        %1793 = vdwg.mxu0
        %v1794 = vadd.f32 %v1534, %v1683
        %v1795 = vadd.f32 %v1535, %v1685
        %v1796 = vadd.f32 %v1536, %v1772
        %v1797 = vadd.f32 %v1537, %v1774
        %v1798 = vadd.f32 %v1538, %v1689
        %v1799 = vadd.f32 %v1539, %v1691
        %v1800 = vadd.f32 %v1540, %v1778
        %v1801 = vadd.f32 %v1541, %v1780
        %v1802 = vadd.f32 %v1542, %v1695
        %v1803 = vadd.f32 %v1543, %v1697
        %v1804 = vadd.f32 %v1544, %v1784
        %v1805 = vadd.f32 %v1545, %v1786
        %v1806 = vadd.f32 %v1546, %v1701
        %v1807 = vadd.f32 %v1547, %v1703
        %v1808 = vadd.f32 %v1548, %v1790
        %v1809 = vadd.f32 %v1549, %v1792
        %1810 = vrot.lane.b32.xlu0 %v300, 113
        %v1811 = vpop.permute.xlu0 %1810
        %1812 = vrot.lane.b32.xlu0 %v328, 113
        %v1813 = vpop.permute.xlu0 %1812
        %1814 = vrot.lane.b32.xlu0 %v301, 113
        %v1815 = vpop.permute.xlu0 %1814
        %1816 = vrot.lane.b32.xlu0 %v323, 113
        %v1817 = vpop.permute.xlu0 %1816
        %vm1818 = vcmask 924672
        %v1819 = vsel %vm1818, %v1811, %v1813
        %v1820 = vsel %vm1818, %v1813, %v1815
        %v1821 = vsel %vm1818, %v1815, %v1817
        %v1827 = vsel %vm1818, %v1817, %v1811
        %v1828 = vlaneseq
        %v1829 = vshrl.u32 %v1828, 7
        %v1830 = vsub.s32 0, %v1829
        %v1831 = vrot.slane %v310, %v1830
        %v1832 = vlaneseq
        %v1833 = vshrl.u32 %v1832, 7
        %v1834 = vsub.s32 0, %v1833
        %v1835 = vrot.slane %v311, %v1834
        %v1836 = vlaneseq
        %v1837 = vshrl.u32 %v1836, 7
        %v1838 = vsub.s32 0, %v1837
        %v1839 = vrot.slane %v312, %v1838
        %v1840 = vlaneseq
        %v1841 = vshrl.u32 %v1840, 7
        %v1842 = vsub.s32 0, %v1841
        %v1843 = vrot.slane %v313, %v1842
        %v1844 = vmul.f32 %v1819, %v1831
        %v1845 = vmul.f32 %v1820, %v1835
        %v1846 = vmul.f32 %v1821, %v1839
        %v1847 = vmul.f32 %v1827, %v1843
        %1848 = vrot.lane.b32.xlu0 %v318, 104
        %v1849 = vpop.permute.xlu0 %1848
        %1850 = vrot.lane.b32.xlu0 %v319, 104
        %v1851 = vpop.permute.xlu0 %1850
        %1852 = vrot.lane.b32.xlu0 %v320, 104
        %v1853 = vpop.permute.xlu0 %1852
        %1854 = vrot.lane.b32.xlu0 %v321, 104
        %v1855 = vpop.permute.xlu0 %1854
        %v1856 = vsel %vm414, %v1849, 0
        %v1858 = vsel %vm414, %v1851, 0
        %v1860 = vsel %vm414, %v1853, 0
        %v1862 = vsel %vm414, %v1855, 0
        %v1865 = vsel %vm423, %v1844, 0
        %v1868 = vsel %vm423, %v1845, 0
        %v1871 = vsel %vm423, %v1846, 0
        %v1874 = vsel %vm423, %v1847, 0
        %1876 = vmatprep.subr.mxu0 0.0
        %1877 = vmatpush1.msra.mxu0 0.0
        %1878 = vmatprep.subr.mxu0 0.0
        %1879 = vmatpush1.msra.mxu0 0.0
        %1880 = vmatprep.subr.mxu0 0.0
        %1881 = vmatpush1.msra.mxu0 0.0
        %1882 = vmatprep.subr.mxu0 0.0
        %1883 = vmatpush1.msra.mxu0 0.0
        %1884 = vmatprep.subr.mxu0 0.0
        %1885 = vmatpush1.msra.mxu0 0.0
        %1886 = vmatprep.subr.mxu0 0.0
        %1887 = vmatpush1.msra.mxu0 0.0
        %1888 = vmatprep.subr.mxu0 0.0
        %1889 = vmatpush1.msra.mxu0 0.0
        %1890 = vmatprep.subr.mxu0 0.0
        %1891 = vmatpush1.msra.mxu0 0.0
        %1892 = vmatprep.subr.mxu0 0.0
        %1893 = vmatpush1.msra.mxu0 0.0
        %1894 = vmatprep.subr.mxu0 0.0
        %1895 = vmatpush1.msra.mxu0 0.0
        %1896 = vmatprep.subr.mxu0 0.0
        %1897 = vmatpush1.msra.mxu0 0.0
        %1898 = vmatprep.subr.mxu0 0.0
        %1899 = vmatpush1.msra.mxu0 0.0
        %1900 = vmatprep.subr.mxu0 0.0
        %1901 = vmatpush1.msra.mxu0 0.0
        %1902 = vmatprep.subr.mxu0 0.0
        %1903 = vmatpush1.msra.mxu0 0.0
        %1904 = vmatprep.subr.mxu0 0.0
        %1905 = vmatpush1.msra.mxu0 0.0
        %1906 = vmatprep.subr.mxu0 %v1868
        %1907 = vmatpush1.msra.mxu0 %v1865
        %1908 = vmatprep.subr.mxu0 0.0
        %1909 = vmatpush2.msra.mxu0 0.0
        %1910 = vmatprep.subr.mxu0 0.0
        %1911 = vmatpush2.msra.mxu0 0.0
        %1912 = vmatprep.subr.mxu0 0.0
        %1913 = vmatpush2.msra.mxu0 0.0
        %1914 = vmatprep.subr.mxu0 0.0
        %1915 = vmatpush2.msra.mxu0 0.0
        %1916 = vmatprep.subr.mxu0 0.0
        %1917 = vmatpush2.msra.mxu0 0.0
        %1918 = vmatprep.subr.mxu0 0.0
        %1919 = vmatpush2.msra.mxu0 0.0
        %1920 = vmatprep.subr.mxu0 0.0
        %1921 = vmatpush2.msra.mxu0 0.0
        %1922 = vmatprep.subr.mxu0 0.0
        %1923 = vmatpush2.msra.mxu0 0.0
        %1924 = vmatprep.subr.mxu0 0.0
        %1925 = vmatpush2.msra.mxu0 0.0
        %1926 = vmatprep.subr.mxu0 0.0
        %1927 = vmatpush2.msra.mxu0 0.0
        %1928 = vmatprep.subr.mxu0 0.0
        %1929 = vmatpush2.msra.mxu0 0.0
        %1930 = vmatprep.subr.mxu0 0.0
        %1931 = vmatpush2.msra.mxu0 0.0
        %1932 = vmatprep.subr.mxu0 0.0
        %1933 = vmatpush2.msra.mxu0 0.0
        %1934 = vmatprep.subr.mxu0 0.0
        %1935 = vmatpush2.msra.mxu0 0.0
        %1936 = vmatprep.subr.mxu0 0.0
        %1937 = vmatpush2.msra.mxu0 0.0
        %1938 = vmatprep.subr.mxu0 0.0
        %1939 = vmatpush2.msra.mxu0 0.0
        %1940 = vmatprep.mubr.f32.mxu0 0.0
        %1941 = vmatmul.mubr.f32.gmra.mxu0 %v1856
        %v1942 = vpop.f32.mrf.mxu0
        %v1943 = vadd.f32 0.0, %v1942
        %v1944 = vpop.f32.mrf.mxu0
        %v1945 = vadd.f32 0.0, %v1944
        %1946 = vmatprep.mubr.f32.mxu0 0.0
        %1947 = vmatmul.mubr.f32.gmra.mxu0 %v1858
        %v1948 = vpop.f32.mrf.mxu0
        %v1949 = vadd.f32 0.0, %v1948
        %v1950 = vpop.f32.mrf.mxu0
        %v1951 = vadd.f32 0.0, %v1950
        %1952 = vmatprep.mubr.f32.mxu0 0.0
        %1953 = vmatmul.mubr.f32.gmra.mxu0 %v1860
        %v1954 = vpop.f32.mrf.mxu0
        %v1955 = vadd.f32 0.0, %v1954
        %v1956 = vpop.f32.mrf.mxu0
        %v1957 = vadd.f32 0.0, %v1956
        %1958 = vmatprep.mubr.f32.mxu0 0.0
        %1959 = vmatmul.mubr.f32.gmra.mxu0 %v1862
        %v1960 = vpop.f32.mrf.mxu0
        %v1961 = vadd.f32 0.0, %v1960
        %v1962 = vpop.f32.mrf.mxu0
        %v1963 = vadd.f32 0.0, %v1962
        %1964 = vdwg.mxu0
        %1965 = vmatprep.subr.mxu0 0.0
        %1966 = vmatpush1.msra.mxu0 0.0
        %1967 = vmatprep.subr.mxu0 0.0
        %1968 = vmatpush1.msra.mxu0 0.0
        %1969 = vmatprep.subr.mxu0 0.0
        %1970 = vmatpush1.msra.mxu0 0.0
        %1971 = vmatprep.subr.mxu0 0.0
        %1972 = vmatpush1.msra.mxu0 0.0
        %1973 = vmatprep.subr.mxu0 0.0
        %1974 = vmatpush1.msra.mxu0 0.0
        %1975 = vmatprep.subr.mxu0 0.0
        %1976 = vmatpush1.msra.mxu0 0.0
        %1977 = vmatprep.subr.mxu0 0.0
        %1978 = vmatpush1.msra.mxu0 0.0
        %1979 = vmatprep.subr.mxu0 0.0
        %1980 = vmatpush1.msra.mxu0 0.0
        %1981 = vmatprep.subr.mxu0 0.0
        %1982 = vmatpush1.msra.mxu0 0.0
        %1983 = vmatprep.subr.mxu0 0.0
        %1984 = vmatpush1.msra.mxu0 0.0
        %1985 = vmatprep.subr.mxu0 0.0
        %1986 = vmatpush1.msra.mxu0 0.0
        %1987 = vmatprep.subr.mxu0 0.0
        %1988 = vmatpush1.msra.mxu0 0.0
        %1989 = vmatprep.subr.mxu0 0.0
        %1990 = vmatpush1.msra.mxu0 0.0
        %1991 = vmatprep.subr.mxu0 0.0
        %1992 = vmatpush1.msra.mxu0 0.0
        %1993 = vmatprep.subr.mxu0 0.0
        %1994 = vmatpush1.msra.mxu0 0.0
        %1995 = vmatprep.subr.mxu0 %v1874
        %1996 = vmatpush1.msra.mxu0 %v1871
        %1997 = vmatprep.subr.mxu0 0.0
        %1998 = vmatpush2.msra.mxu0 0.0
        %1999 = vmatprep.subr.mxu0 0.0
        %2000 = vmatpush2.msra.mxu0 0.0
        %2001 = vmatprep.subr.mxu0 0.0
        %2002 = vmatpush2.msra.mxu0 0.0
        %2003 = vmatprep.subr.mxu0 0.0
        %2004 = vmatpush2.msra.mxu0 0.0
        %2005 = vmatprep.subr.mxu0 0.0
        %2006 = vmatpush2.msra.mxu0 0.0
        %2007 = vmatprep.subr.mxu0 0.0
        %2008 = vmatpush2.msra.mxu0 0.0
        %2009 = vmatprep.subr.mxu0 0.0
        %2010 = vmatpush2.msra.mxu0 0.0
        %2011 = vmatprep.subr.mxu0 0.0
        %2012 = vmatpush2.msra.mxu0 0.0
        %2013 = vmatprep.subr.mxu0 0.0
        %2014 = vmatpush2.msra.mxu0 0.0
        %2015 = vmatprep.subr.mxu0 0.0
        %2016 = vmatpush2.msra.mxu0 0.0
        %2017 = vmatprep.subr.mxu0 0.0
        %2018 = vmatpush2.msra.mxu0 0.0
        %2019 = vmatprep.subr.mxu0 0.0
        %2020 = vmatpush2.msra.mxu0 0.0
        %2021 = vmatprep.subr.mxu0 0.0
        %2022 = vmatpush2.msra.mxu0 0.0
        %2023 = vmatprep.subr.mxu0 0.0
        %2024 = vmatpush2.msra.mxu0 0.0
        %2025 = vmatprep.subr.mxu0 0.0
        %2026 = vmatpush2.msra.mxu0 0.0
        %2027 = vmatprep.subr.mxu0 0.0
        %2028 = vmatpush2.msra.mxu0 0.0
        %2029 = vmatprep.mubr.f32.mxu0 0.0
        %2030 = vmatmul.mubr.f32.gmra.mxu0 %v1856
        %v2031 = vpop.f32.mrf.mxu0
        %v2032 = vadd.f32 0.0, %v2031
        %v2033 = vpop.f32.mrf.mxu0
        %v2034 = vadd.f32 0.0, %v2033
        %2035 = vmatprep.mubr.f32.mxu0 0.0
        %2036 = vmatmul.mubr.f32.gmra.mxu0 %v1858
        %v2037 = vpop.f32.mrf.mxu0
        %v2038 = vadd.f32 0.0, %v2037
        %v2039 = vpop.f32.mrf.mxu0
        %v2040 = vadd.f32 0.0, %v2039
        %2041 = vmatprep.mubr.f32.mxu0 0.0
        %2042 = vmatmul.mubr.f32.gmra.mxu0 %v1860
        %v2043 = vpop.f32.mrf.mxu0
        %v2044 = vadd.f32 0.0, %v2043
        %v2045 = vpop.f32.mrf.mxu0
        %v2046 = vadd.f32 0.0, %v2045
        %2047 = vmatprep.mubr.f32.mxu0 0.0
        %2048 = vmatmul.mubr.f32.gmra.mxu0 %v1862
        %v2049 = vpop.f32.mrf.mxu0
        %v2050 = vadd.f32 0.0, %v2049
        %v2051 = vpop.f32.mrf.mxu0
        %v2052 = vadd.f32 0.0, %v2051
        %2053 = vdwg.mxu0
        %v2054 = vadd.f32 %v1794, %v1943
        %v2055 = vadd.f32 %v1795, %v1945
        %v2056 = vadd.f32 %v1796, %v2032
        %v2057 = vadd.f32 %v1797, %v2034
        %v2058 = vadd.f32 %v1798, %v1949
        %v2059 = vadd.f32 %v1799, %v1951
        %v2060 = vadd.f32 %v1800, %v2038
        %v2061 = vadd.f32 %v1801, %v2040
        %v2062 = vadd.f32 %v1802, %v1955
        %v2063 = vadd.f32 %v1803, %v1957
        %v2064 = vadd.f32 %v1804, %v2044
        %v2065 = vadd.f32 %v1805, %v2046
        %v2066 = vadd.f32 %v1806, %v1961
        %v2067 = vadd.f32 %v1807, %v1963
        %v2068 = vadd.f32 %v1808, %v2050
        %v2069 = vadd.f32 %v1809, %v2052
        %2070 = vrot.lane.b32.xlu0 %v300, 112
        %v2071 = vpop.permute.xlu0 %2070
        %2072 = vrot.lane.b32.xlu0 %v328, 112
        %v2073 = vpop.permute.xlu0 %2072
        %2074 = vrot.lane.b32.xlu0 %v301, 112
        %v2075 = vpop.permute.xlu0 %2074
        %2076 = vrot.lane.b32.xlu0 %v323, 112
        %v2077 = vpop.permute.xlu0 %2076
        %vm2078 = vcmask 916480
        %v2079 = vsel %vm2078, %v2071, %v2073
        %v2080 = vsel %vm2078, %v2073, %v2075
        %v2081 = vsel %vm2078, %v2075, %v2077
        %v2087 = vsel %vm2078, %v2077, %v2071
        %v2088 = vlaneseq
        %v2089 = vshrl.u32 %v2088, 7
        %v2090 = vsub.s32 1, %v2089
        %v2091 = vrot.slane %v310, %v2090
        %v2092 = vlaneseq
        %v2093 = vshrl.u32 %v2092, 7
        %v2094 = vsub.s32 1, %v2093
        %v2095 = vrot.slane %v311, %v2094
        %v2096 = vlaneseq
        %v2097 = vshrl.u32 %v2096, 7
        %v2098 = vsub.s32 1, %v2097
        %v2099 = vrot.slane %v312, %v2098
        %v2100 = vlaneseq
        %v2101 = vshrl.u32 %v2100, 7
        %v2102 = vsub.s32 1, %v2101
        %v2103 = vrot.slane %v313, %v2102
        %v2104 = vmul.f32 %v2079, %v2091
        %v2105 = vmul.f32 %v2080, %v2095
        %v2106 = vmul.f32 %v2081, %v2099
        %v2107 = vmul.f32 %v2087, %v2103
        %2108 = vrot.lane.b32.xlu0 %v318, 100
        %v2109 = vpop.permute.xlu0 %2108
        %2110 = vrot.lane.b32.xlu0 %v319, 100
        %v2111 = vpop.permute.xlu0 %2110
        %2112 = vrot.lane.b32.xlu0 %v320, 100
        %v2113 = vpop.permute.xlu0 %2112
        %2114 = vrot.lane.b32.xlu0 %v321, 100
        %v2115 = vpop.permute.xlu0 %2114
        %v2116 = vsel %vm414, %v2109, 0
        %v2118 = vsel %vm414, %v2111, 0
        %v2120 = vsel %vm414, %v2113, 0
        %v2122 = vsel %vm414, %v2115, 0
        %v2125 = vsel %vm423, %v2104, 0
        %v2128 = vsel %vm423, %v2105, 0
        %v2131 = vsel %vm423, %v2106, 0
        %v2134 = vsel %vm423, %v2107, 0
        %2136 = vmatprep.subr.mxu0 0.0
        %2137 = vmatpush1.msra.mxu0 0.0
        %2138 = vmatprep.subr.mxu0 0.0
        %2139 = vmatpush1.msra.mxu0 0.0
        %2140 = vmatprep.subr.mxu0 0.0
        %2141 = vmatpush1.msra.mxu0 0.0
        %2142 = vmatprep.subr.mxu0 0.0
        %2143 = vmatpush1.msra.mxu0 0.0
        %2144 = vmatprep.subr.mxu0 0.0
        %2145 = vmatpush1.msra.mxu0 0.0
        %2146 = vmatprep.subr.mxu0 0.0
        %2147 = vmatpush1.msra.mxu0 0.0
        %2148 = vmatprep.subr.mxu0 0.0
        %2149 = vmatpush1.msra.mxu0 0.0
        %2150 = vmatprep.subr.mxu0 0.0
        %2151 = vmatpush1.msra.mxu0 0.0
        %2152 = vmatprep.subr.mxu0 0.0
        %2153 = vmatpush1.msra.mxu0 0.0
        %2154 = vmatprep.subr.mxu0 0.0
        %2155 = vmatpush1.msra.mxu0 0.0
        %2156 = vmatprep.subr.mxu0 0.0
        %2157 = vmatpush1.msra.mxu0 0.0
        %2158 = vmatprep.subr.mxu0 0.0
        %2159 = vmatpush1.msra.mxu0 0.0
        %2160 = vmatprep.subr.mxu0 0.0
        %2161 = vmatpush1.msra.mxu0 0.0
        %2162 = vmatprep.subr.mxu0 0.0
        %2163 = vmatpush1.msra.mxu0 0.0
        %2164 = vmatprep.subr.mxu0 0.0
        %2165 = vmatpush1.msra.mxu0 0.0
        %2166 = vmatprep.subr.mxu0 %v2128
        %2167 = vmatpush1.msra.mxu0 %v2125
        %2168 = vmatprep.subr.mxu0 0.0
        %2169 = vmatpush2.msra.mxu0 0.0
        %2170 = vmatprep.subr.mxu0 0.0
        %2171 = vmatpush2.msra.mxu0 0.0
        %2172 = vmatprep.subr.mxu0 0.0
        %2173 = vmatpush2.msra.mxu0 0.0
        %2174 = vmatprep.subr.mxu0 0.0
        %2175 = vmatpush2.msra.mxu0 0.0
        %2176 = vmatprep.subr.mxu0 0.0
        %2177 = vmatpush2.msra.mxu0 0.0
        %2178 = vmatprep.subr.mxu0 0.0
        %2179 = vmatpush2.msra.mxu0 0.0
        %2180 = vmatprep.subr.mxu0 0.0
        %2181 = vmatpush2.msra.mxu0 0.0
        %2182 = vmatprep.subr.mxu0 0.0
        %2183 = vmatpush2.msra.mxu0 0.0
        %2184 = vmatprep.subr.mxu0 0.0
        %2185 = vmatpush2.msra.mxu0 0.0
        %2186 = vmatprep.subr.mxu0 0.0
        %2187 = vmatpush2.msra.mxu0 0.0
        %2188 = vmatprep.subr.mxu0 0.0
        %2189 = vmatpush2.msra.mxu0 0.0
        %2190 = vmatprep.subr.mxu0 0.0
        %2191 = vmatpush2.msra.mxu0 0.0
        %2192 = vmatprep.subr.mxu0 0.0
        %2193 = vmatpush2.msra.mxu0 0.0
        %2194 = vmatprep.subr.mxu0 0.0
        %2195 = vmatpush2.msra.mxu0 0.0
        %2196 = vmatprep.subr.mxu0 0.0
        %2197 = vmatpush2.msra.mxu0 0.0
        %2198 = vmatprep.subr.mxu0 0.0
        %2199 = vmatpush2.msra.mxu0 0.0
        %2200 = vmatprep.mubr.f32.mxu0 0.0
        %2201 = vmatmul.mubr.f32.gmra.mxu0 %v2116
        %v2202 = vpop.f32.mrf.mxu0
        %v2203 = vadd.f32 0.0, %v2202
        %v2204 = vpop.f32.mrf.mxu0
        %v2205 = vadd.f32 0.0, %v2204
        %2206 = vmatprep.mubr.f32.mxu0 0.0
        %2207 = vmatmul.mubr.f32.gmra.mxu0 %v2118
        %v2208 = vpop.f32.mrf.mxu0
        %v2209 = vadd.f32 0.0, %v2208
        %v2210 = vpop.f32.mrf.mxu0
        %v2211 = vadd.f32 0.0, %v2210
        %2212 = vmatprep.mubr.f32.mxu0 0.0
        %2213 = vmatmul.mubr.f32.gmra.mxu0 %v2120
        %v2214 = vpop.f32.mrf.mxu0
        %v2215 = vadd.f32 0.0, %v2214
        %v2216 = vpop.f32.mrf.mxu0
        %v2217 = vadd.f32 0.0, %v2216
        %2218 = vmatprep.mubr.f32.mxu0 0.0
        %2219 = vmatmul.mubr.f32.gmra.mxu0 %v2122
        %v2220 = vpop.f32.mrf.mxu0
        %v2221 = vadd.f32 0.0, %v2220
        %v2222 = vpop.f32.mrf.mxu0
        %v2223 = vadd.f32 0.0, %v2222
        %2224 = vdwg.mxu0
        %2225 = vmatprep.subr.mxu0 0.0
        %2226 = vmatpush1.msra.mxu0 0.0
        %2227 = vmatprep.subr.mxu0 0.0
        %2228 = vmatpush1.msra.mxu0 0.0
        %2229 = vmatprep.subr.mxu0 0.0
        %2230 = vmatpush1.msra.mxu0 0.0
        %2231 = vmatprep.subr.mxu0 0.0
        %2232 = vmatpush1.msra.mxu0 0.0
        %2233 = vmatprep.subr.mxu0 0.0
        %2234 = vmatpush1.msra.mxu0 0.0
        %2235 = vmatprep.subr.mxu0 0.0
        %2236 = vmatpush1.msra.mxu0 0.0
        %2237 = vmatprep.subr.mxu0 0.0
        %2238 = vmatpush1.msra.mxu0 0.0
        %2239 = vmatprep.subr.mxu0 0.0
        %2240 = vmatpush1.msra.mxu0 0.0
        %2241 = vmatprep.subr.mxu0 0.0
        %2242 = vmatpush1.msra.mxu0 0.0
        %2243 = vmatprep.subr.mxu0 0.0
        %2244 = vmatpush1.msra.mxu0 0.0
        %2245 = vmatprep.subr.mxu0 0.0
        %2246 = vmatpush1.msra.mxu0 0.0
        %2247 = vmatprep.subr.mxu0 0.0
        %2248 = vmatpush1.msra.mxu0 0.0
        %2249 = vmatprep.subr.mxu0 0.0
        %2250 = vmatpush1.msra.mxu0 0.0
        %2251 = vmatprep.subr.mxu0 0.0
        %2252 = vmatpush1.msra.mxu0 0.0
        %2253 = vmatprep.subr.mxu0 0.0
        %2254 = vmatpush1.msra.mxu0 0.0
        %2255 = vmatprep.subr.mxu0 %v2134
        %2256 = vmatpush1.msra.mxu0 %v2131
        %2257 = vmatprep.subr.mxu0 0.0
        %2258 = vmatpush2.msra.mxu0 0.0
        %2259 = vmatprep.subr.mxu0 0.0
        %2260 = vmatpush2.msra.mxu0 0.0
        %2261 = vmatprep.subr.mxu0 0.0
        %2262 = vmatpush2.msra.mxu0 0.0
        %2263 = vmatprep.subr.mxu0 0.0
        %2264 = vmatpush2.msra.mxu0 0.0
        %2265 = vmatprep.subr.mxu0 0.0
        %2266 = vmatpush2.msra.mxu0 0.0
        %2267 = vmatprep.subr.mxu0 0.0
        %2268 = vmatpush2.msra.mxu0 0.0
        %2269 = vmatprep.subr.mxu0 0.0
        %2270 = vmatpush2.msra.mxu0 0.0
        %2271 = vmatprep.subr.mxu0 0.0
        %2272 = vmatpush2.msra.mxu0 0.0
        %2273 = vmatprep.subr.mxu0 0.0
        %2274 = vmatpush2.msra.mxu0 0.0
        %2275 = vmatprep.subr.mxu0 0.0
        %2276 = vmatpush2.msra.mxu0 0.0
        %2277 = vmatprep.subr.mxu0 0.0
        %2278 = vmatpush2.msra.mxu0 0.0
        %2279 = vmatprep.subr.mxu0 0.0
        %2280 = vmatpush2.msra.mxu0 0.0
        %2281 = vmatprep.subr.mxu0 0.0
        %2282 = vmatpush2.msra.mxu0 0.0
        %2283 = vmatprep.subr.mxu0 0.0
        %2284 = vmatpush2.msra.mxu0 0.0
        %2285 = vmatprep.subr.mxu0 0.0
        %2286 = vmatpush2.msra.mxu0 0.0
        %2287 = vmatprep.subr.mxu0 0.0
        %2288 = vmatpush2.msra.mxu0 0.0
        %2289 = vmatprep.mubr.f32.mxu0 0.0
        %2290 = vmatmul.mubr.f32.gmra.mxu0 %v2116
        %v2291 = vpop.f32.mrf.mxu0
        %v2292 = vadd.f32 0.0, %v2291
        %v2293 = vpop.f32.mrf.mxu0
        %v2294 = vadd.f32 0.0, %v2293
        %2295 = vmatprep.mubr.f32.mxu0 0.0
        %2296 = vmatmul.mubr.f32.gmra.mxu0 %v2118
        %v2297 = vpop.f32.mrf.mxu0
        %v2298 = vadd.f32 0.0, %v2297
        %v2299 = vpop.f32.mrf.mxu0
        %v2300 = vadd.f32 0.0, %v2299
        %2301 = vmatprep.mubr.f32.mxu0 0.0
        %2302 = vmatmul.mubr.f32.gmra.mxu0 %v2120
        %v2303 = vpop.f32.mrf.mxu0
        %v2304 = vadd.f32 0.0, %v2303
        %v2305 = vpop.f32.mrf.mxu0
        %v2306 = vadd.f32 0.0, %v2305
        %2307 = vmatprep.mubr.f32.mxu0 0.0
        %2308 = vmatmul.mubr.f32.gmra.mxu0 %v2122
        %v2309 = vpop.f32.mrf.mxu0
        %v2310 = vadd.f32 0.0, %v2309
        %v2311 = vpop.f32.mrf.mxu0
        %v2312 = vadd.f32 0.0, %v2311
        %2313 = vdwg.mxu0
        %v2314 = vadd.f32 %v2054, %v2203
        %v2315 = vadd.f32 %v2055, %v2205
        %v2316 = vadd.f32 %v2056, %v2292
        %v2317 = vadd.f32 %v2057, %v2294
        %v2318 = vadd.f32 %v2058, %v2209
        %v2319 = vadd.f32 %v2059, %v2211
        %v2320 = vadd.f32 %v2060, %v2298
        %v2321 = vadd.f32 %v2061, %v2300
        %v2322 = vadd.f32 %v2062, %v2215
        %v2323 = vadd.f32 %v2063, %v2217
        %v2324 = vadd.f32 %v2064, %v2304
        %v2325 = vadd.f32 %v2065, %v2306
        %v2326 = vadd.f32 %v2066, %v2221
        %v2327 = vadd.f32 %v2067, %v2223
        %v2328 = vadd.f32 %v2068, %v2310
        %v2329 = vadd.f32 %v2069, %v2312
        %2330 = vrot.lane.b32.xlu0 %v300, 111
        %v2331 = vpop.permute.xlu0 %2330
        %2332 = vrot.lane.b32.xlu0 %v328, 111
        %v2333 = vpop.permute.xlu0 %2332
        %2334 = vrot.lane.b32.xlu0 %v301, 111
        %v2335 = vpop.permute.xlu0 %2334
        %2336 = vrot.lane.b32.xlu0 %v323, 111
        %v2337 = vpop.permute.xlu0 %2336
        %vm2338 = vcmask 908288
        %v2339 = vsel %vm2338, %v2331, %v2333
        %v2340 = vsel %vm2338, %v2333, %v2335
        %v2341 = vsel %vm2338, %v2335, %v2337
        %v2347 = vsel %vm2338, %v2337, %v2331
        %v2348 = vlaneseq
        %v2349 = vshrl.u32 %v2348, 7
        %v2350 = vsub.s32 2, %v2349
        %v2351 = vrot.slane %v310, %v2350
        %v2352 = vlaneseq
        %v2353 = vshrl.u32 %v2352, 7
        %v2354 = vsub.s32 2, %v2353
        %v2355 = vrot.slane %v311, %v2354
        %v2356 = vlaneseq
        %v2357 = vshrl.u32 %v2356, 7
        %v2358 = vsub.s32 2, %v2357
        %v2359 = vrot.slane %v312, %v2358
        %v2360 = vlaneseq
        %v2361 = vshrl.u32 %v2360, 7
        %v2362 = vsub.s32 2, %v2361
        %v2363 = vrot.slane %v313, %v2362
        %v2364 = vmul.f32 %v2339, %v2351
        %v2365 = vmul.f32 %v2340, %v2355
        %v2366 = vmul.f32 %v2341, %v2359
        %v2367 = vmul.f32 %v2347, %v2363
        %2368 = vrot.lane.b32.xlu0 %v318, 96
        %v2369 = vpop.permute.xlu0 %2368
        %2370 = vrot.lane.b32.xlu0 %v319, 96
        %v2371 = vpop.permute.xlu0 %2370
        %2372 = vrot.lane.b32.xlu0 %v320, 96
        %v2373 = vpop.permute.xlu0 %2372
        %2374 = vrot.lane.b32.xlu0 %v321, 96
        %v2375 = vpop.permute.xlu0 %2374
        %v2376 = vsel %vm414, %v2369, 0
        %v2378 = vsel %vm414, %v2371, 0
        %v2380 = vsel %vm414, %v2373, 0
        %v2382 = vsel %vm414, %v2375, 0
        %v2385 = vsel %vm423, %v2364, 0
        %v2388 = vsel %vm423, %v2365, 0
        %v2391 = vsel %vm423, %v2366, 0
        %v2394 = vsel %vm423, %v2367, 0
        %2396 = vmatprep.subr.mxu0 0.0
        %2397 = vmatpush1.msra.mxu0 0.0
        %2398 = vmatprep.subr.mxu0 0.0
        %2399 = vmatpush1.msra.mxu0 0.0
        %2400 = vmatprep.subr.mxu0 0.0
        %2401 = vmatpush1.msra.mxu0 0.0
        %2402 = vmatprep.subr.mxu0 0.0
        %2403 = vmatpush1.msra.mxu0 0.0
        %2404 = vmatprep.subr.mxu0 0.0
        %2405 = vmatpush1.msra.mxu0 0.0
        %2406 = vmatprep.subr.mxu0 0.0
        %2407 = vmatpush1.msra.mxu0 0.0
        %2408 = vmatprep.subr.mxu0 0.0
        %2409 = vmatpush1.msra.mxu0 0.0
        %2410 = vmatprep.subr.mxu0 0.0
        %2411 = vmatpush1.msra.mxu0 0.0
        %2412 = vmatprep.subr.mxu0 0.0
        %2413 = vmatpush1.msra.mxu0 0.0
        %2414 = vmatprep.subr.mxu0 0.0
        %2415 = vmatpush1.msra.mxu0 0.0
        %2416 = vmatprep.subr.mxu0 0.0
        %2417 = vmatpush1.msra.mxu0 0.0
        %2418 = vmatprep.subr.mxu0 0.0
        %2419 = vmatpush1.msra.mxu0 0.0
        %2420 = vmatprep.subr.mxu0 0.0
        %2421 = vmatpush1.msra.mxu0 0.0
        %2422 = vmatprep.subr.mxu0 0.0
        %2423 = vmatpush1.msra.mxu0 0.0
        %2424 = vmatprep.subr.mxu0 0.0
        %2425 = vmatpush1.msra.mxu0 0.0
        %2426 = vmatprep.subr.mxu0 %v2388
        %2427 = vmatpush1.msra.mxu0 %v2385
        %2428 = vmatprep.subr.mxu0 0.0
        %2429 = vmatpush2.msra.mxu0 0.0
        %2430 = vmatprep.subr.mxu0 0.0
        %2431 = vmatpush2.msra.mxu0 0.0
        %2432 = vmatprep.subr.mxu0 0.0
        %2433 = vmatpush2.msra.mxu0 0.0
        %2434 = vmatprep.subr.mxu0 0.0
        %2435 = vmatpush2.msra.mxu0 0.0
        %2436 = vmatprep.subr.mxu0 0.0
        %2437 = vmatpush2.msra.mxu0 0.0
        %2438 = vmatprep.subr.mxu0 0.0
        %2439 = vmatpush2.msra.mxu0 0.0
        %2440 = vmatprep.subr.mxu0 0.0
        %2441 = vmatpush2.msra.mxu0 0.0
        %2442 = vmatprep.subr.mxu0 0.0
        %2443 = vmatpush2.msra.mxu0 0.0
        %2444 = vmatprep.subr.mxu0 0.0
        %2445 = vmatpush2.msra.mxu0 0.0
        %2446 = vmatprep.subr.mxu0 0.0
        %2447 = vmatpush2.msra.mxu0 0.0
        %2448 = vmatprep.subr.mxu0 0.0
        %2449 = vmatpush2.msra.mxu0 0.0
        %2450 = vmatprep.subr.mxu0 0.0
        %2451 = vmatpush2.msra.mxu0 0.0
        %2452 = vmatprep.subr.mxu0 0.0
        %2453 = vmatpush2.msra.mxu0 0.0
        %2454 = vmatprep.subr.mxu0 0.0
        %2455 = vmatpush2.msra.mxu0 0.0
        %2456 = vmatprep.subr.mxu0 0.0
        %2457 = vmatpush2.msra.mxu0 0.0
        %2458 = vmatprep.subr.mxu0 0.0
        %2459 = vmatpush2.msra.mxu0 0.0
        %2460 = vmatprep.mubr.f32.mxu0 0.0
        %2461 = vmatmul.mubr.f32.gmra.mxu0 %v2376
        %v2462 = vpop.f32.mrf.mxu0
        %v2463 = vadd.f32 0.0, %v2462
        %v2464 = vpop.f32.mrf.mxu0
        %v2465 = vadd.f32 0.0, %v2464
        %2466 = vmatprep.mubr.f32.mxu0 0.0
        %2467 = vmatmul.mubr.f32.gmra.mxu0 %v2378
        %v2468 = vpop.f32.mrf.mxu0
        %v2469 = vadd.f32 0.0, %v2468
        %v2470 = vpop.f32.mrf.mxu0
        %v2471 = vadd.f32 0.0, %v2470
        %2472 = vmatprep.mubr.f32.mxu0 0.0
        %2473 = vmatmul.mubr.f32.gmra.mxu0 %v2380
        %v2474 = vpop.f32.mrf.mxu0
        %v2475 = vadd.f32 0.0, %v2474
        %v2476 = vpop.f32.mrf.mxu0
        %v2477 = vadd.f32 0.0, %v2476
        %2478 = vmatprep.mubr.f32.mxu0 0.0
        %2479 = vmatmul.mubr.f32.gmra.mxu0 %v2382
        %v2480 = vpop.f32.mrf.mxu0
        %v2481 = vadd.f32 0.0, %v2480
        %v2482 = vpop.f32.mrf.mxu0
        %v2483 = vadd.f32 0.0, %v2482
        %2484 = vdwg.mxu0
        %2485 = vmatprep.subr.mxu0 0.0
        %2486 = vmatpush1.msra.mxu0 0.0
        %2487 = vmatprep.subr.mxu0 0.0
        %2488 = vmatpush1.msra.mxu0 0.0
        %2489 = vmatprep.subr.mxu0 0.0
        %2490 = vmatpush1.msra.mxu0 0.0
        %2491 = vmatprep.subr.mxu0 0.0
        %2492 = vmatpush1.msra.mxu0 0.0
        %2493 = vmatprep.subr.mxu0 0.0
        %2494 = vmatpush1.msra.mxu0 0.0
        %2495 = vmatprep.subr.mxu0 0.0
        %2496 = vmatpush1.msra.mxu0 0.0
        %2497 = vmatprep.subr.mxu0 0.0
        %2498 = vmatpush1.msra.mxu0 0.0
        %2499 = vmatprep.subr.mxu0 0.0
        %2500 = vmatpush1.msra.mxu0 0.0
        %2501 = vmatprep.subr.mxu0 0.0
        %2502 = vmatpush1.msra.mxu0 0.0
        %2503 = vmatprep.subr.mxu0 0.0
        %2504 = vmatpush1.msra.mxu0 0.0
        %2505 = vmatprep.subr.mxu0 0.0
        %2506 = vmatpush1.msra.mxu0 0.0
        %2507 = vmatprep.subr.mxu0 0.0
        %2508 = vmatpush1.msra.mxu0 0.0
        %2509 = vmatprep.subr.mxu0 0.0
        %2510 = vmatpush1.msra.mxu0 0.0
        %2511 = vmatprep.subr.mxu0 0.0
        %2512 = vmatpush1.msra.mxu0 0.0
        %2513 = vmatprep.subr.mxu0 0.0
        %2514 = vmatpush1.msra.mxu0 0.0
        %2515 = vmatprep.subr.mxu0 %v2394
        %2516 = vmatpush1.msra.mxu0 %v2391
        %2517 = vmatprep.subr.mxu0 0.0
        %2518 = vmatpush2.msra.mxu0 0.0
        %2519 = vmatprep.subr.mxu0 0.0
        %2520 = vmatpush2.msra.mxu0 0.0
        %2521 = vmatprep.subr.mxu0 0.0
        %2522 = vmatpush2.msra.mxu0 0.0
        %2523 = vmatprep.subr.mxu0 0.0
        %2524 = vmatpush2.msra.mxu0 0.0
        %2525 = vmatprep.subr.mxu0 0.0
        %2526 = vmatpush2.msra.mxu0 0.0
        %2527 = vmatprep.subr.mxu0 0.0
        %2528 = vmatpush2.msra.mxu0 0.0
        %2529 = vmatprep.subr.mxu0 0.0
        %2530 = vmatpush2.msra.mxu0 0.0
        %2531 = vmatprep.subr.mxu0 0.0
        %2532 = vmatpush2.msra.mxu0 0.0
        %2533 = vmatprep.subr.mxu0 0.0
        %2534 = vmatpush2.msra.mxu0 0.0
        %2535 = vmatprep.subr.mxu0 0.0
        %2536 = vmatpush2.msra.mxu0 0.0
        %2537 = vmatprep.subr.mxu0 0.0
        %2538 = vmatpush2.msra.mxu0 0.0
        %2539 = vmatprep.subr.mxu0 0.0
        %2540 = vmatpush2.msra.mxu0 0.0
        %2541 = vmatprep.subr.mxu0 0.0
        %2542 = vmatpush2.msra.mxu0 0.0
        %2543 = vmatprep.subr.mxu0 0.0
        %2544 = vmatpush2.msra.mxu0 0.0
        %2545 = vmatprep.subr.mxu0 0.0
        %2546 = vmatpush2.msra.mxu0 0.0
        %2547 = vmatprep.subr.mxu0 0.0
        %2548 = vmatpush2.msra.mxu0 0.0
        %2549 = vmatprep.mubr.f32.mxu0 0.0
        %2550 = vmatmul.mubr.f32.gmra.mxu0 %v2376
        %v2551 = vpop.f32.mrf.mxu0
        %v2552 = vadd.f32 0.0, %v2551
        %v2553 = vpop.f32.mrf.mxu0
        %v2554 = vadd.f32 0.0, %v2553
        %2555 = vmatprep.mubr.f32.mxu0 0.0
        %2556 = vmatmul.mubr.f32.gmra.mxu0 %v2378
        %v2557 = vpop.f32.mrf.mxu0
        %v2558 = vadd.f32 0.0, %v2557
        %v2559 = vpop.f32.mrf.mxu0
        %v2560 = vadd.f32 0.0, %v2559
        %2561 = vmatprep.mubr.f32.mxu0 0.0
        %2562 = vmatmul.mubr.f32.gmra.mxu0 %v2380
        %v2563 = vpop.f32.mrf.mxu0
        %v2564 = vadd.f32 0.0, %v2563
        %v2565 = vpop.f32.mrf.mxu0
        %v2566 = vadd.f32 0.0, %v2565
        %2567 = vmatprep.mubr.f32.mxu0 0.0
        %2568 = vmatmul.mubr.f32.gmra.mxu0 %v2382
        %v2569 = vpop.f32.mrf.mxu0
        %v2570 = vadd.f32 0.0, %v2569
        %v2571 = vpop.f32.mrf.mxu0
        %v2572 = vadd.f32 0.0, %v2571
        %2573 = vdwg.mxu0
        %v2574 = vadd.f32 %v2314, %v2463
        %v2575 = vadd.f32 %v2315, %v2465
        %v2576 = vadd.f32 %v2316, %v2552
        %v2577 = vadd.f32 %v2317, %v2554
        %v2578 = vadd.f32 %v2318, %v2469
        %v2579 = vadd.f32 %v2319, %v2471
        %v2580 = vadd.f32 %v2320, %v2558
        %v2581 = vadd.f32 %v2321, %v2560
        %v2582 = vadd.f32 %v2322, %v2475
        %v2583 = vadd.f32 %v2323, %v2477
        %v2584 = vadd.f32 %v2324, %v2564
        %v2585 = vadd.f32 %v2325, %v2566
        %v2586 = vadd.f32 %v2326, %v2481
        %v2587 = vadd.f32 %v2327, %v2483
        %v2588 = vadd.f32 %v2328, %v2570
        %v2589 = vadd.f32 %v2329, %v2572
        %v2590 = vld [vmem:[%s283] sm:$0xff]
        %v2591 = vld [vmem:[%s283 + $0x8] sm:$0xff]
        %v2592 = vld [vmem:[%s283 + $0x10] sm:$0xff]
        %v2593 = vld [vmem:[%s283 + $0x18] sm:$0x1]
        %2595 = vset.pattern.permute.xlu0 0
        %2596 = vperm.xlu0 %2595, %v2590
        %v2597 = vpop.permute.xlu0 %2596
        %2600 = vset.pattern.permute.xlu0 0
        %2601 = vperm.xlu0 %2600, %v2591
        %v2602 = vpop.permute.xlu0 %2601
        %2605 = vset.pattern.permute.xlu0 0
        %2606 = vperm.xlu0 %2605, %v2592
        %v2607 = vpop.permute.xlu0 %2606
        %2610 = vset.pattern.permute.xlu0 0
        %2611 = vperm.xlu0 %2610, %v2593
        %v2612 = vpop.permute.xlu0 %2611
        %v2614 = vadd.f32 %v2574, %v2597
        %v2615 = vadd.f32 %v2575, %v2597
        %v2616 = vadd.f32 %v2576, %v2597
        %v2617 = vadd.f32 %v2577, %v2597
        %v2618 = vadd.f32 %v2578, %v2602
        %v2619 = vadd.f32 %v2579, %v2602
        %v2620 = vadd.f32 %v2580, %v2602
        %v2621 = vadd.f32 %v2581, %v2602
        %v2622 = vadd.f32 %v2582, %v2607
        %v2623 = vadd.f32 %v2583, %v2607
        %v2624 = vadd.f32 %v2584, %v2607
        %v2625 = vadd.f32 %v2585, %v2607
        %v2626 = vadd.f32 %v2586, %v2612
        %v2627 = vadd.f32 %v2587, %v2612
        %v2628 = vadd.f32 %v2588, %v2612
        %v2629 = vadd.f32 %v2589, %v2612
        %2630 = vrot.lane.b32.xlu0 %v323, 34
        %v2631 = vpop.permute.xlu0 %2630
        %2633 = vrot.lane.b32.xlu0 %v300, 34
        %v2634 = vpop.permute.xlu0 %2633
        %2635 = vrot.lane.b32.xlu0 %v328, 34
        %v2636 = vpop.permute.xlu0 %2635
        %2637 = vrot.lane.b32.xlu0 %v301, 34
        %v2638 = vpop.permute.xlu0 %2637
        %vm2639 = vcmask 277504
        %v2640 = vsel %vm2639, %v2634, %v2636
        %v2641 = vsel %vm2639, %v2636, %v2638
        %v2642 = vsel %vm2639, %v2638, %v2631
        %v2647 = vsel %vm2639, %v2631, %v2634
        %v2648 = vlaneseq
        %v2649 = vshrl.u32 %v2648, 7
        %v2650 = vsub.s32 0, %v2649
        %v2651 = vrot.slane %v302, %v2650
        %v2652 = vlaneseq
        %v2653 = vshrl.u32 %v2652, 7
        %v2654 = vsub.s32 0, %v2653
        %v2655 = vrot.slane %v303, %v2654
        %v2656 = vlaneseq
        %v2657 = vshrl.u32 %v2656, 7
        %v2658 = vsub.s32 0, %v2657
        %v2659 = vrot.slane %v304, %v2658
        %v2660 = vlaneseq
        %v2661 = vshrl.u32 %v2660, 7
        %v2662 = vsub.s32 0, %v2661
        %v2663 = vrot.slane %v305, %v2662
        %v2664 = vmul.f32 %v2647, %v2651
        %v2665 = vmul.f32 %v2640, %v2655
        %v2666 = vmul.f32 %v2641, %v2659
        %v2667 = vmul.f32 %v2642, %v2663
        %v2668 = vlaneseq
        %v2669 = vshrl.u32 %v2668, 7
        %v2670 = vsub.s32 0, %v2669
        %v2671 = vrot.slane %v2614, %v2670
        %v2672 = vlaneseq
        %v2673 = vshrl.u32 %v2672, 7
        %v2674 = vsub.s32 0, %v2673
        %v2675 = vrot.slane %v2615, %v2674
        %v2676 = vlaneseq
        %v2677 = vshrl.u32 %v2676, 7
        %v2678 = vsub.s32 0, %v2677
        %v2679 = vrot.slane %v2616, %v2678
        %v2680 = vlaneseq
        %v2681 = vshrl.u32 %v2680, 7
        %v2682 = vsub.s32 0, %v2681
        %v2683 = vrot.slane %v2617, %v2682
        %v2684 = vmul.f32 %v2664, %v2671
        %v2685 = vmul.f32 %v2665, %v2675
        %v2686 = vmul.f32 %v2666, %v2679
        %v2687 = vmul.f32 %v2667, %v2683
        %v2688 = vadd.f32 %v2684, 0.0
        %v2689 = vadd.f32 %v2685, 0.0
        %v2690 = vadd.f32 %v2686, 0.0
        %v2691 = vadd.f32 %v2687, 0.0
        %2692 = vrot.lane.b32.xlu0 %v323, 33
        %v2693 = vpop.permute.xlu0 %2692
        %2695 = vrot.lane.b32.xlu0 %v300, 33
        %v2696 = vpop.permute.xlu0 %2695
        %2697 = vrot.lane.b32.xlu0 %v328, 33
        %v2698 = vpop.permute.xlu0 %2697
        %2699 = vrot.lane.b32.xlu0 %v301, 33
        %v2700 = vpop.permute.xlu0 %2699
        %vm2701 = vcmask 269312
        %v2702 = vsel %vm2701, %v2696, %v2698
        %v2703 = vsel %vm2701, %v2698, %v2700
        %v2704 = vsel %vm2701, %v2700, %v2693
        %v2709 = vsel %vm2701, %v2693, %v2696
        %v2710 = vlaneseq
        %v2711 = vshrl.u32 %v2710, 7
        %v2712 = vsub.s32 1, %v2711
        %v2713 = vrot.slane %v302, %v2712
        %v2714 = vlaneseq
        %v2715 = vshrl.u32 %v2714, 7
        %v2716 = vsub.s32 1, %v2715
        %v2717 = vrot.slane %v303, %v2716
        %v2718 = vlaneseq
        %v2719 = vshrl.u32 %v2718, 7
        %v2720 = vsub.s32 1, %v2719
        %v2721 = vrot.slane %v304, %v2720
        %v2722 = vlaneseq
        %v2723 = vshrl.u32 %v2722, 7
        %v2724 = vsub.s32 1, %v2723
        %v2725 = vrot.slane %v305, %v2724
        %v2726 = vmul.f32 %v2709, %v2713
        %v2727 = vmul.f32 %v2702, %v2717
        %v2728 = vmul.f32 %v2703, %v2721
        %v2729 = vmul.f32 %v2704, %v2725
        %v2730 = vlaneseq
        %v2731 = vshrl.u32 %v2730, 7
        %v2732 = vsub.s32 1, %v2731
        %v2733 = vrot.slane %v2614, %v2732
        %v2734 = vlaneseq
        %v2735 = vshrl.u32 %v2734, 7
        %v2736 = vsub.s32 1, %v2735
        %v2737 = vrot.slane %v2615, %v2736
        %v2738 = vlaneseq
        %v2739 = vshrl.u32 %v2738, 7
        %v2740 = vsub.s32 1, %v2739
        %v2741 = vrot.slane %v2616, %v2740
        %v2742 = vlaneseq
        %v2743 = vshrl.u32 %v2742, 7
        %v2744 = vsub.s32 1, %v2743
        %v2745 = vrot.slane %v2617, %v2744
        %v2746 = vmul.f32 %v2726, %v2733
        %v2747 = vmul.f32 %v2727, %v2737
        %v2748 = vmul.f32 %v2728, %v2741
        %v2749 = vmul.f32 %v2729, %v2745
        %v2750 = vadd.f32 %v2688, %v2746
        %v2751 = vadd.f32 %v2689, %v2747
        %v2752 = vadd.f32 %v2690, %v2748
        %v2753 = vadd.f32 %v2691, %v2749
        %2754 = vrot.lane.b32.xlu0 %v323, 32
        %v2755 = vpop.permute.xlu0 %2754
        %2757 = vrot.lane.b32.xlu0 %v300, 32
        %v2758 = vpop.permute.xlu0 %2757
        %2759 = vrot.lane.b32.xlu0 %v328, 32
        %v2760 = vpop.permute.xlu0 %2759
        %2761 = vrot.lane.b32.xlu0 %v301, 32
        %v2762 = vpop.permute.xlu0 %2761
        %vm2763 = vcmask 261120
        %v2764 = vsel %vm2763, %v2758, %v2760
        %v2765 = vsel %vm2763, %v2760, %v2762
        %v2766 = vsel %vm2763, %v2762, %v2755
        %v2771 = vsel %vm2763, %v2755, %v2758
        %v2772 = vlaneseq
        %v2773 = vshrl.u32 %v2772, 7
        %v2774 = vsub.s32 2, %v2773
        %v2775 = vrot.slane %v302, %v2774
        %v2776 = vlaneseq
        %v2777 = vshrl.u32 %v2776, 7
        %v2778 = vsub.s32 2, %v2777
        %v2779 = vrot.slane %v303, %v2778
        %v2780 = vlaneseq
        %v2781 = vshrl.u32 %v2780, 7
        %v2782 = vsub.s32 2, %v2781
        %v2783 = vrot.slane %v304, %v2782
        %v2784 = vlaneseq
        %v2785 = vshrl.u32 %v2784, 7
        %v2786 = vsub.s32 2, %v2785
        %v2787 = vrot.slane %v305, %v2786
        %v2788 = vmul.f32 %v2771, %v2775
        %v2789 = vmul.f32 %v2764, %v2779
        %v2790 = vmul.f32 %v2765, %v2783
        %v2791 = vmul.f32 %v2766, %v2787
        %v2792 = vlaneseq
        %v2793 = vshrl.u32 %v2792, 7
        %v2794 = vsub.s32 2, %v2793
        %v2795 = vrot.slane %v2614, %v2794
        %v2796 = vlaneseq
        %v2797 = vshrl.u32 %v2796, 7
        %v2798 = vsub.s32 2, %v2797
        %v2799 = vrot.slane %v2615, %v2798
        %v2800 = vlaneseq
        %v2801 = vshrl.u32 %v2800, 7
        %v2802 = vsub.s32 2, %v2801
        %v2803 = vrot.slane %v2616, %v2802
        %v2804 = vlaneseq
        %v2805 = vshrl.u32 %v2804, 7
        %v2806 = vsub.s32 2, %v2805
        %v2807 = vrot.slane %v2617, %v2806
        %v2808 = vmul.f32 %v2788, %v2795
        %v2809 = vmul.f32 %v2789, %v2799
        %v2810 = vmul.f32 %v2790, %v2803
        %v2811 = vmul.f32 %v2791, %v2807
        %v2812 = vadd.f32 %v2750, %v2808
        %v2813 = vadd.f32 %v2751, %v2809
        %v2814 = vadd.f32 %v2752, %v2810
        %v2815 = vadd.f32 %v2753, %v2811
        %2816 = vrot.lane.b32.xlu0 %v323, 31
        %v2817 = vpop.permute.xlu0 %2816
        %2819 = vrot.lane.b32.xlu0 %v300, 31
        %v2820 = vpop.permute.xlu0 %2819
        %2821 = vrot.lane.b32.xlu0 %v328, 31
        %v2822 = vpop.permute.xlu0 %2821
        %2823 = vrot.lane.b32.xlu0 %v301, 31
        %v2824 = vpop.permute.xlu0 %2823
        %vm2825 = vcmask 252928
        %v2826 = vsel %vm2825, %v2820, %v2822
        %v2827 = vsel %vm2825, %v2822, %v2824
        %v2828 = vsel %vm2825, %v2824, %v2817
        %v2833 = vsel %vm2825, %v2817, %v2820
        %v2834 = vlaneseq
        %v2835 = vshrl.u32 %v2834, 7
        %v2836 = vsub.s32 3, %v2835
        %v2837 = vrot.slane %v302, %v2836
        %v2838 = vlaneseq
        %v2839 = vshrl.u32 %v2838, 7
        %v2840 = vsub.s32 3, %v2839
        %v2841 = vrot.slane %v303, %v2840
        %v2842 = vlaneseq
        %v2843 = vshrl.u32 %v2842, 7
        %v2844 = vsub.s32 3, %v2843
        %v2845 = vrot.slane %v304, %v2844
        %v2846 = vlaneseq
        %v2847 = vshrl.u32 %v2846, 7
        %v2848 = vsub.s32 3, %v2847
        %v2849 = vrot.slane %v305, %v2848
        %v2850 = vmul.f32 %v2833, %v2837
        %v2851 = vmul.f32 %v2826, %v2841
        %v2852 = vmul.f32 %v2827, %v2845
        %v2853 = vmul.f32 %v2828, %v2849
        %v2854 = vlaneseq
        %v2855 = vshrl.u32 %v2854, 7
        %v2856 = vsub.s32 3, %v2855
        %v2857 = vrot.slane %v2614, %v2856
        %v2858 = vlaneseq
        %v2859 = vshrl.u32 %v2858, 7
        %v2860 = vsub.s32 3, %v2859
        %v2861 = vrot.slane %v2615, %v2860
        %v2862 = vlaneseq
        %v2863 = vshrl.u32 %v2862, 7
        %v2864 = vsub.s32 3, %v2863
        %v2865 = vrot.slane %v2616, %v2864
        %v2866 = vlaneseq
        %v2867 = vshrl.u32 %v2866, 7
        %v2868 = vsub.s32 3, %v2867
        %v2869 = vrot.slane %v2617, %v2868
        %v2870 = vmul.f32 %v2850, %v2857
        %v2871 = vmul.f32 %v2851, %v2861
        %v2872 = vmul.f32 %v2852, %v2865
        %v2873 = vmul.f32 %v2853, %v2869
        %v2874 = vadd.f32 %v2812, %v2870
        %v2875 = vadd.f32 %v2813, %v2871
        %v2876 = vadd.f32 %v2814, %v2872
        %v2877 = vadd.f32 %v2815, %v2873
        %2878 = vrot.lane.b32.xlu0 %v323, 30
        %v2879 = vpop.permute.xlu0 %2878
        %2881 = vrot.lane.b32.xlu0 %v300, 30
        %v2882 = vpop.permute.xlu0 %2881
        %2883 = vrot.lane.b32.xlu0 %v328, 30
        %v2884 = vpop.permute.xlu0 %2883
        %2885 = vrot.lane.b32.xlu0 %v301, 30
        %v2886 = vpop.permute.xlu0 %2885
        %vm2887 = vcmask 244736
        %v2888 = vsel %vm2887, %v2882, %v2884
        %v2889 = vsel %vm2887, %v2884, %v2886
        %v2890 = vsel %vm2887, %v2886, %v2879
        %v2895 = vsel %vm2887, %v2879, %v2882
        %v2896 = vlaneseq
        %v2897 = vshrl.u32 %v2896, 7
        %v2898 = vsub.s32 4, %v2897
        %v2899 = vrot.slane %v302, %v2898
        %v2900 = vlaneseq
        %v2901 = vshrl.u32 %v2900, 7
        %v2902 = vsub.s32 4, %v2901
        %v2903 = vrot.slane %v303, %v2902
        %v2904 = vlaneseq
        %v2905 = vshrl.u32 %v2904, 7
        %v2906 = vsub.s32 4, %v2905
        %v2907 = vrot.slane %v304, %v2906
        %v2908 = vlaneseq
        %v2909 = vshrl.u32 %v2908, 7
        %v2910 = vsub.s32 4, %v2909
        %v2911 = vrot.slane %v305, %v2910
        %v2912 = vmul.f32 %v2895, %v2899
        %v2913 = vmul.f32 %v2888, %v2903
        %v2914 = vmul.f32 %v2889, %v2907
        %v2915 = vmul.f32 %v2890, %v2911
        %v2916 = vlaneseq
        %v2917 = vshrl.u32 %v2916, 7
        %v2918 = vsub.s32 4, %v2917
        %v2919 = vrot.slane %v2614, %v2918
        %v2920 = vlaneseq
        %v2921 = vshrl.u32 %v2920, 7
        %v2922 = vsub.s32 4, %v2921
        %v2923 = vrot.slane %v2615, %v2922
        %v2924 = vlaneseq
        %v2925 = vshrl.u32 %v2924, 7
        %v2926 = vsub.s32 4, %v2925
        %v2927 = vrot.slane %v2616, %v2926
        %v2928 = vlaneseq
        %v2929 = vshrl.u32 %v2928, 7
        %v2930 = vsub.s32 4, %v2929
        %v2931 = vrot.slane %v2617, %v2930
        %v2932 = vmul.f32 %v2912, %v2919
        %v2933 = vmul.f32 %v2913, %v2923
        %v2934 = vmul.f32 %v2914, %v2927
        %v2935 = vmul.f32 %v2915, %v2931
        %v2936 = vadd.f32 %v2874, %v2932
        %v2937 = vadd.f32 %v2875, %v2933
        %v2938 = vadd.f32 %v2876, %v2934
        %v2939 = vadd.f32 %v2877, %v2935
        %2940 = vrot.lane.b32.xlu0 %v323, 18
        %v2941 = vpop.permute.xlu0 %2940
        %2943 = vrot.lane.b32.xlu0 %v300, 18
        %v2944 = vpop.permute.xlu0 %2943
        %2945 = vrot.lane.b32.xlu0 %v328, 18
        %v2946 = vpop.permute.xlu0 %2945
        %2947 = vrot.lane.b32.xlu0 %v301, 18
        %v2948 = vpop.permute.xlu0 %2947
        %vm2949 = vcmask 146432
        %v2950 = vsel %vm2949, %v2944, %v2946
        %v2951 = vsel %vm2949, %v2946, %v2948
        %v2952 = vsel %vm2949, %v2948, %v2941
        %v2957 = vsel %vm2949, %v2941, %v2944
        %v2958 = vlaneseq
        %v2959 = vshrl.u32 %v2958, 7
        %v2960 = vsub.s32 5, %v2959
        %v2961 = vrot.slane %v302, %v2960
        %v2962 = vlaneseq
        %v2963 = vshrl.u32 %v2962, 7
        %v2964 = vsub.s32 5, %v2963
        %v2965 = vrot.slane %v303, %v2964
        %v2966 = vlaneseq
        %v2967 = vshrl.u32 %v2966, 7
        %v2968 = vsub.s32 5, %v2967
        %v2969 = vrot.slane %v304, %v2968
        %v2970 = vlaneseq
        %v2971 = vshrl.u32 %v2970, 7
        %v2972 = vsub.s32 5, %v2971
        %v2973 = vrot.slane %v305, %v2972
        %v2974 = vmul.f32 %v2957, %v2961
        %v2975 = vmul.f32 %v2950, %v2965
        %v2976 = vmul.f32 %v2951, %v2969
        %v2977 = vmul.f32 %v2952, %v2973
        %v2978 = vlaneseq
        %v2979 = vshrl.u32 %v2978, 7
        %v2980 = vsub.s32 5, %v2979
        %v2981 = vrot.slane %v2614, %v2980
        %v2982 = vlaneseq
        %v2983 = vshrl.u32 %v2982, 7
        %v2984 = vsub.s32 5, %v2983
        %v2985 = vrot.slane %v2615, %v2984
        %v2986 = vlaneseq
        %v2987 = vshrl.u32 %v2986, 7
        %v2988 = vsub.s32 5, %v2987
        %v2989 = vrot.slane %v2616, %v2988
        %v2990 = vlaneseq
        %v2991 = vshrl.u32 %v2990, 7
        %v2992 = vsub.s32 5, %v2991
        %v2993 = vrot.slane %v2617, %v2992
        %v2994 = vmul.f32 %v2974, %v2981
        %v2995 = vmul.f32 %v2975, %v2985
        %v2996 = vmul.f32 %v2976, %v2989
        %v2997 = vmul.f32 %v2977, %v2993
        %v2998 = vadd.f32 %v2936, %v2994
        %v2999 = vadd.f32 %v2937, %v2995
        %v3000 = vadd.f32 %v2938, %v2996
        %v3001 = vadd.f32 %v2939, %v2997
        %v3002 = vlaneseq
        %v3003 = vshrl.u32 %v3002, 7
        %v3004 = vsub.s32 6, %v3003
        %v3005 = vrot.slane %v2614, %v3004
        %v3006 = vlaneseq
        %v3007 = vshrl.u32 %v3006, 7
        %v3008 = vsub.s32 6, %v3007
        %v3009 = vrot.slane %v2615, %v3008
        %v3010 = vlaneseq
        %v3011 = vshrl.u32 %v3010, 7
        %v3012 = vsub.s32 6, %v3011
        %v3013 = vrot.slane %v2616, %v3012
        %v3014 = vlaneseq
        %v3015 = vshrl.u32 %v3014, 7
        %v3016 = vsub.s32 6, %v3015
        %v3017 = vrot.slane %v2617, %v3016
        %v3018 = vmul.f32 %v360, %v3005
        %v3019 = vmul.f32 %v361, %v3009
        %v3020 = vmul.f32 %v362, %v3013
        %v3021 = vmul.f32 %v363, %v3017
        %v3022 = vadd.f32 %v2998, %v3018
        %v3023 = vadd.f32 %v2999, %v3019
        %v3024 = vadd.f32 %v3000, %v3020
        %v3025 = vadd.f32 %v3001, %v3021
        %v3026 = vlaneseq
        %v3027 = vshrl.u32 %v3026, 7
        %v3028 = vsub.s32 7, %v3027
        %v3029 = vrot.slane %v2614, %v3028
        %v3030 = vlaneseq
        %v3031 = vshrl.u32 %v3030, 7
        %v3032 = vsub.s32 7, %v3031
        %v3033 = vrot.slane %v2615, %v3032
        %v3034 = vlaneseq
        %v3035 = vshrl.u32 %v3034, 7
        %v3036 = vsub.s32 7, %v3035
        %v3037 = vrot.slane %v2616, %v3036
        %v3038 = vlaneseq
        %v3039 = vshrl.u32 %v3038, 7
        %v3040 = vsub.s32 7, %v3039
        %v3041 = vrot.slane %v2617, %v3040
        %v3042 = vmul.f32 %v398, %v3029
        %v3043 = vmul.f32 %v399, %v3033
        %v3044 = vmul.f32 %v400, %v3037
        %v3045 = vmul.f32 %v401, %v3041
        %v3046 = vadd.f32 %v3022, %v3042
        %v3047 = vadd.f32 %v3023, %v3043
        %v3048 = vadd.f32 %v3024, %v3044
        %v3049 = vadd.f32 %v3025, %v3045
        %v3050 = vlaneseq
        %v3051 = vshrl.u32 %v3050, 7
        %v3052 = vsub.s32 0, %v3051
        %v3053 = vrot.slane %v2618, %v3052
        %v3054 = vlaneseq
        %v3055 = vshrl.u32 %v3054, 7
        %v3056 = vsub.s32 0, %v3055
        %v3057 = vrot.slane %v2619, %v3056
        %v3058 = vlaneseq
        %v3059 = vshrl.u32 %v3058, 7
        %v3060 = vsub.s32 0, %v3059
        %v3061 = vrot.slane %v2620, %v3060
        %v3062 = vlaneseq
        %v3063 = vshrl.u32 %v3062, 7
        %v3064 = vsub.s32 0, %v3063
        %v3065 = vrot.slane %v2621, %v3064
        %v3066 = vmul.f32 %v846, %v3053
        %v3067 = vmul.f32 %v847, %v3057
        %v3068 = vmul.f32 %v848, %v3061
        %v3069 = vmul.f32 %v849, %v3065
        %v3070 = vadd.f32 %v3046, %v3066
        %v3071 = vadd.f32 %v3047, %v3067
        %v3072 = vadd.f32 %v3048, %v3068
        %v3073 = vadd.f32 %v3049, %v3069
        %3074 = vrot.lane.b32.xlu0 %v323, 14
        %v3075 = vpop.permute.xlu0 %3074
        %3077 = vrot.lane.b32.xlu0 %v300, 14
        %v3078 = vpop.permute.xlu0 %3077
        %3079 = vrot.lane.b32.xlu0 %v328, 14
        %v3080 = vpop.permute.xlu0 %3079
        %3081 = vrot.lane.b32.xlu0 %v301, 14
        %v3082 = vpop.permute.xlu0 %3081
        %vm3083 = vcmask 113664
        %v3084 = vsel %vm3083, %v3078, %v3080
        %v3085 = vsel %vm3083, %v3080, %v3082
        %v3086 = vsel %vm3083, %v3082, %v3075
        %v3091 = vsel %vm3083, %v3075, %v3078
        %v3092 = vlaneseq
        %v3093 = vshrl.u32 %v3092, 7
        %v3094 = vsub.s32 1, %v3093
        %v3095 = vrot.slane %v306, %v3094
        %v3096 = vlaneseq
        %v3097 = vshrl.u32 %v3096, 7
        %v3098 = vsub.s32 1, %v3097
        %v3099 = vrot.slane %v307, %v3098
        %v3100 = vlaneseq
        %v3101 = vshrl.u32 %v3100, 7
        %v3102 = vsub.s32 1, %v3101
        %v3103 = vrot.slane %v308, %v3102
        %v3104 = vlaneseq
        %v3105 = vshrl.u32 %v3104, 7
        %v3106 = vsub.s32 1, %v3105
        %v3107 = vrot.slane %v309, %v3106
        %v3108 = vmul.f32 %v3091, %v3095
        %v3109 = vmul.f32 %v3084, %v3099
        %v3110 = vmul.f32 %v3085, %v3103
        %v3111 = vmul.f32 %v3086, %v3107
        %v3112 = vlaneseq
        %v3113 = vshrl.u32 %v3112, 7
        %v3114 = vsub.s32 1, %v3113
        %v3115 = vrot.slane %v2618, %v3114
        %v3116 = vlaneseq
        %v3117 = vshrl.u32 %v3116, 7
        %v3118 = vsub.s32 1, %v3117
        %v3119 = vrot.slane %v2619, %v3118
        %v3120 = vlaneseq
        %v3121 = vshrl.u32 %v3120, 7
        %v3122 = vsub.s32 1, %v3121
        %v3123 = vrot.slane %v2620, %v3122
        %v3124 = vlaneseq
        %v3125 = vshrl.u32 %v3124, 7
        %v3126 = vsub.s32 1, %v3125
        %v3127 = vrot.slane %v2621, %v3126
        %v3128 = vmul.f32 %v3108, %v3115
        %v3129 = vmul.f32 %v3109, %v3119
        %v3130 = vmul.f32 %v3110, %v3123
        %v3131 = vmul.f32 %v3111, %v3127
        %v3132 = vadd.f32 %v3070, %v3128
        %v3133 = vadd.f32 %v3071, %v3129
        %v3134 = vadd.f32 %v3072, %v3130
        %v3135 = vadd.f32 %v3073, %v3131
        %3136 = vrot.lane.b32.xlu0 %v323, 2
        %v3137 = vpop.permute.xlu0 %3136
        %3139 = vrot.lane.b32.xlu0 %v300, 2
        %v3140 = vpop.permute.xlu0 %3139
        %3141 = vrot.lane.b32.xlu0 %v328, 2
        %v3142 = vpop.permute.xlu0 %3141
        %3143 = vrot.lane.b32.xlu0 %v301, 2
        %v3144 = vpop.permute.xlu0 %3143
        %vm3145 = vcmask 15360
        %v3146 = vsel %vm3145, %v3140, %v3142
        %v3147 = vsel %vm3145, %v3142, %v3144
        %v3148 = vsel %vm3145, %v3144, %v3137
        %v3153 = vsel %vm3145, %v3137, %v3140
        %v3154 = vlaneseq
        %v3155 = vshrl.u32 %v3154, 7
        %v3156 = vsub.s32 2, %v3155
        %v3157 = vrot.slane %v306, %v3156
        %v3158 = vlaneseq
        %v3159 = vshrl.u32 %v3158, 7
        %v3160 = vsub.s32 2, %v3159
        %v3161 = vrot.slane %v307, %v3160
        %v3162 = vlaneseq
        %v3163 = vshrl.u32 %v3162, 7
        %v3164 = vsub.s32 2, %v3163
        %v3165 = vrot.slane %v308, %v3164
        %v3166 = vlaneseq
        %v3167 = vshrl.u32 %v3166, 7
        %v3168 = vsub.s32 2, %v3167
        %v3169 = vrot.slane %v309, %v3168
        %v3170 = vmul.f32 %v3153, %v3157
        %v3171 = vmul.f32 %v3146, %v3161
        %v3172 = vmul.f32 %v3147, %v3165
        %v3173 = vmul.f32 %v3148, %v3169
        %v3174 = vlaneseq
        %v3175 = vshrl.u32 %v3174, 7
        %v3176 = vsub.s32 2, %v3175
        %v3177 = vrot.slane %v2618, %v3176
        %v3178 = vlaneseq
        %v3179 = vshrl.u32 %v3178, 7
        %v3180 = vsub.s32 2, %v3179
        %v3181 = vrot.slane %v2619, %v3180
        %v3182 = vlaneseq
        %v3183 = vshrl.u32 %v3182, 7
        %v3184 = vsub.s32 2, %v3183
        %v3185 = vrot.slane %v2620, %v3184
        %v3186 = vlaneseq
        %v3187 = vshrl.u32 %v3186, 7
        %v3188 = vsub.s32 2, %v3187
        %v3189 = vrot.slane %v2621, %v3188
        %v3190 = vmul.f32 %v3170, %v3177
        %v3191 = vmul.f32 %v3171, %v3181
        %v3192 = vmul.f32 %v3172, %v3185
        %v3193 = vmul.f32 %v3173, %v3189
        %v3194 = vadd.f32 %v3132, %v3190
        %v3195 = vadd.f32 %v3133, %v3191
        %v3196 = vadd.f32 %v3134, %v3192
        %v3197 = vadd.f32 %v3135, %v3193
        %v3198 = vlaneseq
        %v3199 = vshrl.u32 %v3198, 7
        %v3200 = vsub.s32 3, %v3199
        %v3201 = vrot.slane %v2618, %v3200
        %v3202 = vlaneseq
        %v3203 = vshrl.u32 %v3202, 7
        %v3204 = vsub.s32 3, %v3203
        %v3205 = vrot.slane %v2619, %v3204
        %v3206 = vlaneseq
        %v3207 = vshrl.u32 %v3206, 7
        %v3208 = vsub.s32 3, %v3207
        %v3209 = vrot.slane %v2620, %v3208
        %v3210 = vlaneseq
        %v3211 = vshrl.u32 %v3210, 7
        %v3212 = vsub.s32 3, %v3211
        %v3213 = vrot.slane %v2621, %v3212
        %v3214 = vmul.f32 %v1106, %v3201
        %v3215 = vmul.f32 %v1107, %v3205
        %v3216 = vmul.f32 %v1108, %v3209
        %v3217 = vmul.f32 %v1109, %v3213
        %v3218 = vadd.f32 %v3194, %v3214
        %v3219 = vadd.f32 %v3195, %v3215
        %v3220 = vadd.f32 %v3196, %v3216
        %v3221 = vadd.f32 %v3197, %v3217
        %v3222 = vlaneseq
        %v3223 = vshrl.u32 %v3222, 7
        %v3224 = vsub.s32 4, %v3223
        %v3225 = vrot.slane %v2618, %v3224
        %v3226 = vlaneseq
        %v3227 = vshrl.u32 %v3226, 7
        %v3228 = vsub.s32 4, %v3227
        %v3229 = vrot.slane %v2619, %v3228
        %v3230 = vlaneseq
        %v3231 = vshrl.u32 %v3230, 7
        %v3232 = vsub.s32 4, %v3231
        %v3233 = vrot.slane %v2620, %v3232
        %v3234 = vlaneseq
        %v3235 = vshrl.u32 %v3234, 7
        %v3236 = vsub.s32 4, %v3235
        %v3237 = vrot.slane %v2621, %v3236
        %v3242 = vcombine.low %v3225, %v3229
        %v3243 = vcombine.low %v3233, %v3237
        %v3246 = vmul.f32 %v300, %v3242
        %v3247 = vmul.f32 %v301, %v3243
        %v3250 = vcombine.high %v3246, %v3246
        %v3251 = vcombine.high %v3247, %v3247
        %v3254 = vadd.f32 %v3218, %v3246
        %v3255 = vadd.f32 %v3219, %v3250
        %v3256 = vadd.f32 %v3220, %v3247
        %v3257 = vadd.f32 %v3221, %v3251
        %v3258 = vlaneseq
        %v3259 = vshrl.u32 %v3258, 7
        %v3260 = vsub.s32 5, %v3259
        %v3261 = vrot.slane %v2618, %v3260
        %v3262 = vlaneseq
        %v3263 = vshrl.u32 %v3262, 7
        %v3264 = vsub.s32 5, %v3263
        %v3265 = vrot.slane %v2619, %v3264
        %v3266 = vlaneseq
        %v3267 = vshrl.u32 %v3266, 7
        %v3268 = vsub.s32 5, %v3267
        %v3269 = vrot.slane %v2620, %v3268
        %v3270 = vlaneseq
        %v3271 = vshrl.u32 %v3270, 7
        %v3272 = vsub.s32 5, %v3271
        %v3273 = vrot.slane %v2621, %v3272
        %v3274 = vmul.f32 %v1584, %v3261
        %v3275 = vmul.f32 %v1585, %v3265
        %v3276 = vmul.f32 %v1586, %v3269
        %v3277 = vmul.f32 %v1587, %v3273
        %v3278 = vadd.f32 %v3254, %v3274
        %v3279 = vadd.f32 %v3255, %v3275
        %v3280 = vadd.f32 %v3256, %v3276
        %v3281 = vadd.f32 %v3257, %v3277
        %3282 = vrot.lane.b32.xlu0 %v300, 126
        %v3283 = vpop.permute.xlu0 %3282
        %3284 = vrot.lane.b32.xlu0 %v328, 126
        %v3285 = vpop.permute.xlu0 %3284
        %3286 = vrot.lane.b32.xlu0 %v301, 126
        %v3287 = vpop.permute.xlu0 %3286
        %3288 = vrot.lane.b32.xlu0 %v323, 126
        %v3289 = vpop.permute.xlu0 %3288
        %vm3290 = vcmask 1031168
        %v3291 = vsel %vm3290, %v3283, %v3285
        %v3292 = vsel %vm3290, %v3285, %v3287
        %v3293 = vsel %vm3290, %v3287, %v3289
        %v3299 = vsel %vm3290, %v3289, %v3283
        %v3300 = vlaneseq
        %v3301 = vshrl.u32 %v3300, 7
        %v3302 = vsub.s32 6, %v3301
        %v3303 = vrot.slane %v306, %v3302
        %v3304 = vlaneseq
        %v3305 = vshrl.u32 %v3304, 7
        %v3306 = vsub.s32 6, %v3305
        %v3307 = vrot.slane %v307, %v3306
        %v3308 = vlaneseq
        %v3309 = vshrl.u32 %v3308, 7
        %v3310 = vsub.s32 6, %v3309
        %v3311 = vrot.slane %v308, %v3310
        %v3312 = vlaneseq
        %v3313 = vshrl.u32 %v3312, 7
        %v3314 = vsub.s32 6, %v3313
        %v3315 = vrot.slane %v309, %v3314
        %v3316 = vmul.f32 %v3291, %v3303
        %v3317 = vmul.f32 %v3292, %v3307
        %v3318 = vmul.f32 %v3293, %v3311
        %v3319 = vmul.f32 %v3299, %v3315
        %v3320 = vlaneseq
        %v3321 = vshrl.u32 %v3320, 7
        %v3322 = vsub.s32 6, %v3321
        %v3323 = vrot.slane %v2618, %v3322
        %v3324 = vlaneseq
        %v3325 = vshrl.u32 %v3324, 7
        %v3326 = vsub.s32 6, %v3325
        %v3327 = vrot.slane %v2619, %v3326
        %v3328 = vlaneseq
        %v3329 = vshrl.u32 %v3328, 7
        %v3330 = vsub.s32 6, %v3329
        %v3331 = vrot.slane %v2620, %v3330
        %v3332 = vlaneseq
        %v3333 = vshrl.u32 %v3332, 7
        %v3334 = vsub.s32 6, %v3333
        %v3335 = vrot.slane %v2621, %v3334
        %v3336 = vmul.f32 %v3316, %v3323
        %v3337 = vmul.f32 %v3317, %v3327
        %v3338 = vmul.f32 %v3318, %v3331
        %v3339 = vmul.f32 %v3319, %v3335
        %v3340 = vadd.f32 %v3278, %v3336
        %v3341 = vadd.f32 %v3279, %v3337
        %v3342 = vadd.f32 %v3280, %v3338
        %v3343 = vadd.f32 %v3281, %v3339
        %3344 = vrot.lane.b32.xlu0 %v300, 114
        %v3345 = vpop.permute.xlu0 %3344
        %3346 = vrot.lane.b32.xlu0 %v328, 114
        %v3347 = vpop.permute.xlu0 %3346
        %3348 = vrot.lane.b32.xlu0 %v301, 114
        %v3349 = vpop.permute.xlu0 %3348
        %3350 = vrot.lane.b32.xlu0 %v323, 114
        %v3351 = vpop.permute.xlu0 %3350
        %vm3352 = vcmask 932864
        %v3353 = vsel %vm3352, %v3345, %v3347
        %v3354 = vsel %vm3352, %v3347, %v3349
        %v3355 = vsel %vm3352, %v3349, %v3351
        %v3361 = vsel %vm3352, %v3351, %v3345
        %v3362 = vlaneseq
        %v3363 = vshrl.u32 %v3362, 7
        %v3364 = vsub.s32 7, %v3363
        %v3365 = vrot.slane %v306, %v3364
        %v3366 = vlaneseq
        %v3367 = vshrl.u32 %v3366, 7
        %v3368 = vsub.s32 7, %v3367
        %v3369 = vrot.slane %v307, %v3368
        %v3370 = vlaneseq
        %v3371 = vshrl.u32 %v3370, 7
        %v3372 = vsub.s32 7, %v3371
        %v3373 = vrot.slane %v308, %v3372
        %v3374 = vlaneseq
        %v3375 = vshrl.u32 %v3374, 7
        %v3376 = vsub.s32 7, %v3375
        %v3377 = vrot.slane %v309, %v3376
        %v3378 = vmul.f32 %v3353, %v3365
        %v3379 = vmul.f32 %v3354, %v3369
        %v3380 = vmul.f32 %v3355, %v3373
        %v3381 = vmul.f32 %v3361, %v3377
        %v3382 = vlaneseq
        %v3383 = vshrl.u32 %v3382, 7
        %v3384 = vsub.s32 7, %v3383
        %v3385 = vrot.slane %v2618, %v3384
        %v3386 = vlaneseq
        %v3387 = vshrl.u32 %v3386, 7
        %v3388 = vsub.s32 7, %v3387
        %v3389 = vrot.slane %v2619, %v3388
        %v3390 = vlaneseq
        %v3391 = vshrl.u32 %v3390, 7
        %v3392 = vsub.s32 7, %v3391
        %v3393 = vrot.slane %v2620, %v3392
        %v3394 = vlaneseq
        %v3395 = vshrl.u32 %v3394, 7
        %v3396 = vsub.s32 7, %v3395
        %v3397 = vrot.slane %v2621, %v3396
        %v3398 = vmul.f32 %v3378, %v3385
        %v3399 = vmul.f32 %v3379, %v3389
        %v3400 = vmul.f32 %v3380, %v3393
        %v3401 = vmul.f32 %v3381, %v3397
        %v3402 = vadd.f32 %v3340, %v3398
        %v3403 = vadd.f32 %v3341, %v3399
        %v3404 = vadd.f32 %v3342, %v3400
        %v3405 = vadd.f32 %v3343, %v3401
        %v3406 = vlaneseq
        %v3407 = vshrl.u32 %v3406, 7
        %v3408 = vsub.s32 0, %v3407
        %v3409 = vrot.slane %v2622, %v3408
        %v3410 = vlaneseq
        %v3411 = vshrl.u32 %v3410, 7
        %v3412 = vsub.s32 0, %v3411
        %v3413 = vrot.slane %v2623, %v3412
        %v3414 = vlaneseq
        %v3415 = vshrl.u32 %v3414, 7
        %v3416 = vsub.s32 0, %v3415
        %v3417 = vrot.slane %v2624, %v3416
        %v3418 = vlaneseq
        %v3419 = vshrl.u32 %v3418, 7
        %v3420 = vsub.s32 0, %v3419
        %v3421 = vrot.slane %v2625, %v3420
        %v3422 = vmul.f32 %v1844, %v3409
        %v3423 = vmul.f32 %v1845, %v3413
        %v3424 = vmul.f32 %v1846, %v3417
        %v3425 = vmul.f32 %v1847, %v3421
        %v3426 = vadd.f32 %v3402, %v3422
        %v3427 = vadd.f32 %v3403, %v3423
        %v3428 = vadd.f32 %v3404, %v3424
        %v3429 = vadd.f32 %v3405, %v3425
        %v3430 = vlaneseq
        %v3431 = vshrl.u32 %v3430, 7
        %v3432 = vsub.s32 1, %v3431
        %v3433 = vrot.slane %v2622, %v3432
        %v3434 = vlaneseq
        %v3435 = vshrl.u32 %v3434, 7
        %v3436 = vsub.s32 1, %v3435
        %v3437 = vrot.slane %v2623, %v3436
        %v3438 = vlaneseq
        %v3439 = vshrl.u32 %v3438, 7
        %v3440 = vsub.s32 1, %v3439
        %v3441 = vrot.slane %v2624, %v3440
        %v3442 = vlaneseq
        %v3443 = vshrl.u32 %v3442, 7
        %v3444 = vsub.s32 1, %v3443
        %v3445 = vrot.slane %v2625, %v3444
        %v3446 = vmul.f32 %v2104, %v3433
        %v3447 = vmul.f32 %v2105, %v3437
        %v3448 = vmul.f32 %v2106, %v3441
        %v3449 = vmul.f32 %v2107, %v3445
        %v3450 = vadd.f32 %v3426, %v3446
        %v3451 = vadd.f32 %v3427, %v3447
        %v3452 = vadd.f32 %v3428, %v3448
        %v3453 = vadd.f32 %v3429, %v3449
        %v3454 = vlaneseq
        %v3455 = vshrl.u32 %v3454, 7
        %v3456 = vsub.s32 2, %v3455
        %v3457 = vrot.slane %v2622, %v3456
        %v3458 = vlaneseq
        %v3459 = vshrl.u32 %v3458, 7
        %v3460 = vsub.s32 2, %v3459
        %v3461 = vrot.slane %v2623, %v3460
        %v3462 = vlaneseq
        %v3463 = vshrl.u32 %v3462, 7
        %v3464 = vsub.s32 2, %v3463
        %v3465 = vrot.slane %v2624, %v3464
        %v3466 = vlaneseq
        %v3467 = vshrl.u32 %v3466, 7
        %v3468 = vsub.s32 2, %v3467
        %v3469 = vrot.slane %v2625, %v3468
        %v3470 = vmul.f32 %v2364, %v3457
        %v3471 = vmul.f32 %v2365, %v3461
        %v3472 = vmul.f32 %v2366, %v3465
        %v3473 = vmul.f32 %v2367, %v3469
        %v3474 = vadd.f32 %v3450, %v3470
        %v3475 = vadd.f32 %v3451, %v3471
        %v3476 = vadd.f32 %v3452, %v3472
        %v3477 = vadd.f32 %v3453, %v3473
        %3478 = vrot.lane.b32.xlu0 %v300, 110
        %v3479 = vpop.permute.xlu0 %3478
        %3480 = vrot.lane.b32.xlu0 %v328, 110
        %v3481 = vpop.permute.xlu0 %3480
        %3482 = vrot.lane.b32.xlu0 %v301, 110
        %v3483 = vpop.permute.xlu0 %3482
        %3484 = vrot.lane.b32.xlu0 %v323, 110
        %v3485 = vpop.permute.xlu0 %3484
        %vm3486 = vcmask 900096
        %v3487 = vsel %vm3486, %v3479, %v3481
        %v3488 = vsel %vm3486, %v3481, %v3483
        %v3489 = vsel %vm3486, %v3483, %v3485
        %v3495 = vsel %vm3486, %v3485, %v3479
        %v3496 = vlaneseq
        %v3497 = vshrl.u32 %v3496, 7
        %v3498 = vsub.s32 3, %v3497
        %v3499 = vrot.slane %v310, %v3498
        %v3500 = vlaneseq
        %v3501 = vshrl.u32 %v3500, 7
        %v3502 = vsub.s32 3, %v3501
        %v3503 = vrot.slane %v311, %v3502
        %v3504 = vlaneseq
        %v3505 = vshrl.u32 %v3504, 7
        %v3506 = vsub.s32 3, %v3505
        %v3507 = vrot.slane %v312, %v3506
        %v3508 = vlaneseq
        %v3509 = vshrl.u32 %v3508, 7
        %v3510 = vsub.s32 3, %v3509
        %v3511 = vrot.slane %v313, %v3510
        %v3512 = vmul.f32 %v3487, %v3499
        %v3513 = vmul.f32 %v3488, %v3503
        %v3514 = vmul.f32 %v3489, %v3507
        %v3515 = vmul.f32 %v3495, %v3511
        %v3516 = vlaneseq
        %v3517 = vshrl.u32 %v3516, 7
        %v3518 = vsub.s32 3, %v3517
        %v3519 = vrot.slane %v2622, %v3518
        %v3520 = vlaneseq
        %v3521 = vshrl.u32 %v3520, 7
        %v3522 = vsub.s32 3, %v3521
        %v3523 = vrot.slane %v2623, %v3522
        %v3524 = vlaneseq
        %v3525 = vshrl.u32 %v3524, 7
        %v3526 = vsub.s32 3, %v3525
        %v3527 = vrot.slane %v2624, %v3526
        %v3528 = vlaneseq
        %v3529 = vshrl.u32 %v3528, 7
        %v3530 = vsub.s32 3, %v3529
        %v3531 = vrot.slane %v2625, %v3530
        %v3532 = vmul.f32 %v3512, %v3519
        %v3533 = vmul.f32 %v3513, %v3523
        %v3534 = vmul.f32 %v3514, %v3527
        %v3535 = vmul.f32 %v3515, %v3531
        %v3536 = vadd.f32 %v3474, %v3532
        %v3537 = vadd.f32 %v3475, %v3533
        %v3538 = vadd.f32 %v3476, %v3534
        %v3539 = vadd.f32 %v3477, %v3535
        %3540 = vrot.lane.b32.xlu0 %v300, 98
        %v3541 = vpop.permute.xlu0 %3540
        %3542 = vrot.lane.b32.xlu0 %v328, 98
        %v3543 = vpop.permute.xlu0 %3542
        %3544 = vrot.lane.b32.xlu0 %v301, 98
        %v3545 = vpop.permute.xlu0 %3544
        %3546 = vrot.lane.b32.xlu0 %v323, 98
        %v3547 = vpop.permute.xlu0 %3546
        %vm3548 = vcmask 801792
        %v3549 = vsel %vm3548, %v3541, %v3543
        %v3550 = vsel %vm3548, %v3543, %v3545
        %v3551 = vsel %vm3548, %v3545, %v3547
        %v3557 = vsel %vm3548, %v3547, %v3541
        %v3558 = vlaneseq
        %v3559 = vshrl.u32 %v3558, 7
        %v3560 = vsub.s32 4, %v3559
        %v3561 = vrot.slane %v310, %v3560
        %v3562 = vlaneseq
        %v3563 = vshrl.u32 %v3562, 7
        %v3564 = vsub.s32 4, %v3563
        %v3565 = vrot.slane %v311, %v3564
        %v3566 = vlaneseq
        %v3567 = vshrl.u32 %v3566, 7
        %v3568 = vsub.s32 4, %v3567
        %v3569 = vrot.slane %v312, %v3568
        %v3570 = vlaneseq
        %v3571 = vshrl.u32 %v3570, 7
        %v3572 = vsub.s32 4, %v3571
        %v3573 = vrot.slane %v313, %v3572
        %v3574 = vmul.f32 %v3549, %v3561
        %v3575 = vmul.f32 %v3550, %v3565
        %v3576 = vmul.f32 %v3551, %v3569
        %v3577 = vmul.f32 %v3557, %v3573
        %v3578 = vlaneseq
        %v3579 = vshrl.u32 %v3578, 7
        %v3580 = vsub.s32 4, %v3579
        %v3581 = vrot.slane %v2622, %v3580
        %v3582 = vlaneseq
        %v3583 = vshrl.u32 %v3582, 7
        %v3584 = vsub.s32 4, %v3583
        %v3585 = vrot.slane %v2623, %v3584
        %v3586 = vlaneseq
        %v3587 = vshrl.u32 %v3586, 7
        %v3588 = vsub.s32 4, %v3587
        %v3589 = vrot.slane %v2624, %v3588
        %v3590 = vlaneseq
        %v3591 = vshrl.u32 %v3590, 7
        %v3592 = vsub.s32 4, %v3591
        %v3593 = vrot.slane %v2625, %v3592
        %v3594 = vmul.f32 %v3574, %v3581
        %v3595 = vmul.f32 %v3575, %v3585
        %v3596 = vmul.f32 %v3576, %v3589
        %v3597 = vmul.f32 %v3577, %v3593
        %v3598 = vadd.f32 %v3536, %v3594
        %v3599 = vadd.f32 %v3537, %v3595
        %v3600 = vadd.f32 %v3538, %v3596
        %v3601 = vadd.f32 %v3539, %v3597
        %3602 = vrot.lane.b32.xlu0 %v300, 97
        %v3603 = vpop.permute.xlu0 %3602
        %3604 = vrot.lane.b32.xlu0 %v328, 97
        %v3605 = vpop.permute.xlu0 %3604
        %3606 = vrot.lane.b32.xlu0 %v301, 97
        %v3607 = vpop.permute.xlu0 %3606
        %3608 = vrot.lane.b32.xlu0 %v323, 97
        %v3609 = vpop.permute.xlu0 %3608
        %vm3610 = vcmask 793600
        %v3611 = vsel %vm3610, %v3603, %v3605
        %v3612 = vsel %vm3610, %v3605, %v3607
        %v3613 = vsel %vm3610, %v3607, %v3609
        %v3619 = vsel %vm3610, %v3609, %v3603
        %v3620 = vlaneseq
        %v3621 = vshrl.u32 %v3620, 7
        %v3622 = vsub.s32 5, %v3621
        %v3623 = vrot.slane %v310, %v3622
        %v3624 = vlaneseq
        %v3625 = vshrl.u32 %v3624, 7
        %v3626 = vsub.s32 5, %v3625
        %v3627 = vrot.slane %v311, %v3626
        %v3628 = vlaneseq
        %v3629 = vshrl.u32 %v3628, 7
        %v3630 = vsub.s32 5, %v3629
        %v3631 = vrot.slane %v312, %v3630
        %v3632 = vlaneseq
        %v3633 = vshrl.u32 %v3632, 7
        %v3634 = vsub.s32 5, %v3633
        %v3635 = vrot.slane %v313, %v3634
        %v3636 = vmul.f32 %v3611, %v3623
        %v3637 = vmul.f32 %v3612, %v3627
        %v3638 = vmul.f32 %v3613, %v3631
        %v3639 = vmul.f32 %v3619, %v3635
        %v3640 = vlaneseq
        %v3641 = vshrl.u32 %v3640, 7
        %v3642 = vsub.s32 5, %v3641
        %v3643 = vrot.slane %v2622, %v3642
        %v3644 = vlaneseq
        %v3645 = vshrl.u32 %v3644, 7
        %v3646 = vsub.s32 5, %v3645
        %v3647 = vrot.slane %v2623, %v3646
        %v3648 = vlaneseq
        %v3649 = vshrl.u32 %v3648, 7
        %v3650 = vsub.s32 5, %v3649
        %v3651 = vrot.slane %v2624, %v3650
        %v3652 = vlaneseq
        %v3653 = vshrl.u32 %v3652, 7
        %v3654 = vsub.s32 5, %v3653
        %v3655 = vrot.slane %v2625, %v3654
        %v3656 = vmul.f32 %v3636, %v3643
        %v3657 = vmul.f32 %v3637, %v3647
        %v3658 = vmul.f32 %v3638, %v3651
        %v3659 = vmul.f32 %v3639, %v3655
        %v3660 = vadd.f32 %v3598, %v3656
        %v3661 = vadd.f32 %v3599, %v3657
        %v3662 = vadd.f32 %v3600, %v3658
        %v3663 = vadd.f32 %v3601, %v3659
        %3664 = vrot.lane.b32.xlu0 %v300, 96
        %v3665 = vpop.permute.xlu0 %3664
        %3666 = vrot.lane.b32.xlu0 %v328, 96
        %v3667 = vpop.permute.xlu0 %3666
        %3668 = vrot.lane.b32.xlu0 %v301, 96
        %v3669 = vpop.permute.xlu0 %3668
        %3670 = vrot.lane.b32.xlu0 %v323, 96
        %v3671 = vpop.permute.xlu0 %3670
        %vm3672 = vcmask 785408
        %v3673 = vsel %vm3672, %v3665, %v3667
        %v3674 = vsel %vm3672, %v3667, %v3669
        %v3675 = vsel %vm3672, %v3669, %v3671
        %v3681 = vsel %vm3672, %v3671, %v3665
        %v3682 = vlaneseq
        %v3683 = vshrl.u32 %v3682, 7
        %v3684 = vsub.s32 6, %v3683
        %v3685 = vrot.slane %v310, %v3684
        %v3686 = vlaneseq
        %v3687 = vshrl.u32 %v3686, 7
        %v3688 = vsub.s32 6, %v3687
        %v3689 = vrot.slane %v311, %v3688
        %v3690 = vlaneseq
        %v3691 = vshrl.u32 %v3690, 7
        %v3692 = vsub.s32 6, %v3691
        %v3693 = vrot.slane %v312, %v3692
        %v3694 = vlaneseq
        %v3695 = vshrl.u32 %v3694, 7
        %v3696 = vsub.s32 6, %v3695
        %v3697 = vrot.slane %v313, %v3696
        %v3698 = vmul.f32 %v3673, %v3685
        %v3699 = vmul.f32 %v3674, %v3689
        %v3700 = vmul.f32 %v3675, %v3693
        %v3701 = vmul.f32 %v3681, %v3697
        %v3702 = vlaneseq
        %v3703 = vshrl.u32 %v3702, 7
        %v3704 = vsub.s32 6, %v3703
        %v3705 = vrot.slane %v2622, %v3704
        %v3706 = vlaneseq
        %v3707 = vshrl.u32 %v3706, 7
        %v3708 = vsub.s32 6, %v3707
        %v3709 = vrot.slane %v2623, %v3708
        %v3710 = vlaneseq
        %v3711 = vshrl.u32 %v3710, 7
        %v3712 = vsub.s32 6, %v3711
        %v3713 = vrot.slane %v2624, %v3712
        %v3714 = vlaneseq
        %v3715 = vshrl.u32 %v3714, 7
        %v3716 = vsub.s32 6, %v3715
        %v3717 = vrot.slane %v2625, %v3716
        %v3718 = vmul.f32 %v3698, %v3705
        %v3719 = vmul.f32 %v3699, %v3709
        %v3720 = vmul.f32 %v3700, %v3713
        %v3721 = vmul.f32 %v3701, %v3717
        %v3722 = vadd.f32 %v3660, %v3718
        %v3723 = vadd.f32 %v3661, %v3719
        %v3724 = vadd.f32 %v3662, %v3720
        %v3725 = vadd.f32 %v3663, %v3721
        %3726 = vrot.lane.b32.xlu0 %v300, 95
        %v3727 = vpop.permute.xlu0 %3726
        %3728 = vrot.lane.b32.xlu0 %v328, 95
        %v3729 = vpop.permute.xlu0 %3728
        %3730 = vrot.lane.b32.xlu0 %v301, 95
        %v3731 = vpop.permute.xlu0 %3730
        %3732 = vrot.lane.b32.xlu0 %v323, 95
        %v3733 = vpop.permute.xlu0 %3732
        %vm3734 = vcmask 777216
        %v3735 = vsel %vm3734, %v3727, %v3729
        %v3736 = vsel %vm3734, %v3729, %v3731
        %v3737 = vsel %vm3734, %v3731, %v3733
        %v3743 = vsel %vm3734, %v3733, %v3727
        %v3744 = vlaneseq
        %v3745 = vshrl.u32 %v3744, 7
        %v3746 = vsub.s32 7, %v3745
        %v3747 = vrot.slane %v310, %v3746
        %v3748 = vlaneseq
        %v3749 = vshrl.u32 %v3748, 7
        %v3750 = vsub.s32 7, %v3749
        %v3751 = vrot.slane %v311, %v3750
        %v3752 = vlaneseq
        %v3753 = vshrl.u32 %v3752, 7
        %v3754 = vsub.s32 7, %v3753
        %v3755 = vrot.slane %v312, %v3754
        %v3756 = vlaneseq
        %v3757 = vshrl.u32 %v3756, 7
        %v3758 = vsub.s32 7, %v3757
        %v3759 = vrot.slane %v313, %v3758
        %v3760 = vmul.f32 %v3735, %v3747
        %v3761 = vmul.f32 %v3736, %v3751
        %v3762 = vmul.f32 %v3737, %v3755
        %v3763 = vmul.f32 %v3743, %v3759
        %v3764 = vlaneseq
        %v3765 = vshrl.u32 %v3764, 7
        %v3766 = vsub.s32 7, %v3765
        %v3767 = vrot.slane %v2622, %v3766
        %v3768 = vlaneseq
        %v3769 = vshrl.u32 %v3768, 7
        %v3770 = vsub.s32 7, %v3769
        %v3771 = vrot.slane %v2623, %v3770
        %v3772 = vlaneseq
        %v3773 = vshrl.u32 %v3772, 7
        %v3774 = vsub.s32 7, %v3773
        %v3775 = vrot.slane %v2624, %v3774
        %v3776 = vlaneseq
        %v3777 = vshrl.u32 %v3776, 7
        %v3778 = vsub.s32 7, %v3777
        %v3779 = vrot.slane %v2625, %v3778
        %v3780 = vmul.f32 %v3760, %v3767
        %v3781 = vmul.f32 %v3761, %v3771
        %v3782 = vmul.f32 %v3762, %v3775
        %v3783 = vmul.f32 %v3763, %v3779
        %v3784 = vadd.f32 %v3722, %v3780
        %v3785 = vadd.f32 %v3723, %v3781
        %v3786 = vadd.f32 %v3724, %v3782
        %v3787 = vadd.f32 %v3725, %v3783
        %3788 = vrot.lane.b32.xlu0 %v300, 94
        %v3789 = vpop.permute.xlu0 %3788
        %3790 = vrot.lane.b32.xlu0 %v328, 94
        %v3791 = vpop.permute.xlu0 %3790
        %3792 = vrot.lane.b32.xlu0 %v301, 94
        %v3793 = vpop.permute.xlu0 %3792
        %3794 = vrot.lane.b32.xlu0 %v323, 94
        %v3795 = vpop.permute.xlu0 %3794
        %vm3796 = vcmask 769024
        %v3797 = vsel %vm3796, %v3789, %v3791
        %v3798 = vsel %vm3796, %v3791, %v3793
        %v3799 = vsel %vm3796, %v3793, %v3795
        %v3805 = vsel %vm3796, %v3795, %v3789
        %v3806 = vlaneseq
        %v3807 = vshrl.u32 %v3806, 7
        %v3808 = vsub.s32 0, %v3807
        %v3809 = vrot.slane %v314, %v3808
        %v3810 = vlaneseq
        %v3811 = vshrl.u32 %v3810, 7
        %v3812 = vsub.s32 0, %v3811
        %v3813 = vrot.slane %v315, %v3812
        %v3814 = vlaneseq
        %v3815 = vshrl.u32 %v3814, 7
        %v3816 = vsub.s32 0, %v3815
        %v3817 = vrot.slane %v316, %v3816
        %v3818 = vlaneseq
        %v3819 = vshrl.u32 %v3818, 7
        %v3820 = vsub.s32 0, %v3819
        %v3821 = vrot.slane %v317, %v3820
        %v3822 = vmul.f32 %v3797, %v3809
        %v3823 = vmul.f32 %v3798, %v3813
        %v3824 = vmul.f32 %v3799, %v3817
        %v3825 = vmul.f32 %v3805, %v3821
        %v3826 = vlaneseq
        %v3827 = vshrl.u32 %v3826, 7
        %v3828 = vsub.s32 0, %v3827
        %v3829 = vrot.slane %v2626, %v3828
        %v3830 = vlaneseq
        %v3831 = vshrl.u32 %v3830, 7
        %v3832 = vsub.s32 0, %v3831
        %v3833 = vrot.slane %v2627, %v3832
        %v3834 = vlaneseq
        %v3835 = vshrl.u32 %v3834, 7
        %v3836 = vsub.s32 0, %v3835
        %v3837 = vrot.slane %v2628, %v3836
        %v3838 = vlaneseq
        %v3839 = vshrl.u32 %v3838, 7
        %v3840 = vsub.s32 0, %v3839
        %v3841 = vrot.slane %v2629, %v3840
        %v3842 = vmul.f32 %v3822, %v3829
        %v3843 = vmul.f32 %v3823, %v3833
        %v3844 = vmul.f32 %v3824, %v3837
        %v3845 = vmul.f32 %v3825, %v3841
        %v3846 = vadd.f32 %v3784, %v3842
        %v3847 = vadd.f32 %v3785, %v3843
        %v3848 = vadd.f32 %v3786, %v3844
        %v3849 = vadd.f32 %v3787, %v3845
        %v3850 = vsel %vm423, %v3846, 0.0
        %v3851 = vsel %vm423, %v3847, 0.0
        %v3852 = vadd.f32 %v3850, %v3851
        %v3853 = vsel %vm423, %v3848, 0.0
        %v3854 = vadd.f32 %v3852, %v3853
        %v3855 = vsel %vm423, %v3849, 0.0
        %v3856 = vadd.f32 %v3854, %v3855
        %3857 = vadd.xlane.f32.xlu0 %v3856
        %v3858 = vpop.xlane.xlu0 %3857
        %v3859 = vrcp.pop 512.0
        %v3860 = vmul.f32 %v3858, %v3859
        %v3861 = vsub.f32 %v3846, %v3860
        %v3862 = vsub.f32 %v3847, %v3860
        %v3863 = vsub.f32 %v3848, %v3860
        %v3864 = vsub.f32 %v3849, %v3860
        %v3865 = vmul.f32 %v3861, %v3861
        %v3866 = vmul.f32 %v3862, %v3862
        %v3867 = vmul.f32 %v3863, %v3863
        %v3868 = vmul.f32 %v3864, %v3864
        %v3869 = vsel %vm423, %v3865, 0.0
        %v3870 = vsel %vm423, %v3866, 0.0
        %v3871 = vadd.f32 %v3869, %v3870
        %v3872 = vsel %vm423, %v3867, 0.0
        %v3873 = vadd.f32 %v3871, %v3872
        %v3874 = vsel %vm423, %v3868, 0.0
        %v3875 = vadd.f32 %v3873, %v3874
        %3876 = vadd.xlane.f32.xlu0 %v3875
        %v3877 = vpop.xlane.xlu0 %3876
        %v3878 = vmul.f32 %v3877, %v3859
        %v3879 = vadd.f32 %v3878, 1e-05
        %v3880 = vrsqrt.pop %v3879
        %v3881 = vmul.f32 %v3861, %v3880
        %v3882 = vmul.f32 %v3862, %v3880
        %v3883 = vmul.f32 %v3863, %v3880
        %v3884 = vmul.f32 %v3864, %v3880
        %v3885 = vld [vmem:[%s287] sm:$0xf]
        %3887 = vset.pattern.permute.xlu0 0
        %3888 = vperm.xlu0 %3887, %v3885
        %v3889 = vpop.permute.xlu0 %3888
        %v3891 = vmul.f32 %v3881, %v3889
        %v3892 = vmul.f32 %v3882, %v3889
        %v3893 = vmul.f32 %v3883, %v3889
        %v3894 = vmul.f32 %v3884, %v3889
        %v3895 = vld [vmem:[%s291] sm:$0xf]
        %3897 = vset.pattern.permute.xlu0 0
        %3898 = vperm.xlu0 %3897, %v3895
        %v3899 = vpop.permute.xlu0 %3898
        %v3901 = vadd.f32 %v3891, %v3899
        %v3902 = vadd.f32 %v3892, %v3899
        %v3903 = vadd.f32 %v3893, %v3899
        %v3904 = vadd.f32 %v3894, %v3899
        %v3905 = vmax.f32 %v3901, 0.0
        %v3906 = vmax.f32 %v3902, 0.0
        %v3907 = vmax.f32 %v3903, 0.0
        %v3908 = vmax.f32 %v3904, 0.0
        %v3913 = vcombine.low %v3905, %v3906
        %v3914 = vcombine.low %v3907, %v3908
        %3917 = vst [vmem:[#allocation2] sm:$0xff] %v3913
        %3918 = vst [vmem:[#allocation2 + $0x8] sm:$0xff] %v3914
        // Predicated region
        $region49: #{_fused_forward.1} parent=43 // pred_check
          %p3919 = pneg %p177
        $region50: #{_fused_forward.1} parent=43 // pred_check_branch
          %3921 = sbr.rel (%p3919) target = $region52
        $region51: #{_fused_forward.1} parent=43 // pred_region
          %s3923 = ssub.s32 256, 256
          %3924 = vsyncadd [#allocation3], %s3923
          %s3926 = sshll.u32 [#allocation2], 4
          %s3927 = int_to_ptr.vmem [resolvable:$true] %s3926
          %3929 = dma.vmem_to_hbm [thread:$0]  %s3927, 256, %s6, [#allocation3]
        $region52: #{_fused_forward.1} parent=43 // pred_fallthru
          _
        // Predicated region
        $region53: #{_fused_forward.1} parent=43 // pred_check
          %p3930 = pneg %p177
        $region54: #{_fused_forward.1} parent=43 // pred_check_branch
          %3932 = sbr.rel (%p3930) target = $region56
        $region55: #{_fused_forward.1} parent=43 // pred_region
          %3933 = dma.done [#allocation3], 256
        $region56: #{_fused_forward.1} parent=43 // pred_fallthru
          _
      $region44: #{_fused_forward.1} parent=5 // pred_fallthru
        _
      %p3934 = scmp.le.s32.totalorder 2, %s13
      // Predicated region
      $region57: #{_fused_forward.1} parent=5 // pred_check
        %p3935 = pneg %p3934
      $region58: #{_fused_forward.1} parent=5 // pred_check_branch
        %3937 = sbr.rel (%p3935) target = $region60
      $region59: #{_fused_forward.1} parent=5 // pred_region
        %s3938 = ssub.s32 %s13, 2
      $region60: #{_fused_forward.1} parent=5 // pred_fallthru
        _
    $region6: #{_fused_forward.1} parent=1 // loop_footer
      %s17 = sadd.s32 1, %s13
    $region7: #{_fused_forward.1} parent=1 // loop_footer_branch
      %12 = sbr.rel target = $region3
    $region8: #{_fused_forward.1} parent=1 // loop_exit
      _
    %3939 = vsyncpa [#allocation3], 1
    %s3940 = scalar_lea.sflag [#allocation3], 1
    %3941 = vsyncpa %s3940, 1

</llo_original>
